<compile_context>
chip_gen: v7x
topology: tpu7x:2x2x1
jax: 0.10.0
libtpu: 0.0.40
codegen_flags: <defaults>
</compile_context>

<pallas_src>
import math
import functools

import jax
import jax.numpy as jnp
from jax import lax
from jax.experimental import pallas as pl
from jax.experimental.pallas import tpu as pltpu

# ---- hyperparameters from the PyTorch script ----
EMBED_SIZE = 128
HEADS = 8
FORWARD_EXPANSION = 8
NUM_LAYERS = 6
MAX_LENGTH = 50
# TODO(synk): noise_dim = data.shape[1] in the original script (dataset-dependent);
# fixed to 32 here.
NOISE_DIM = 32
LN_EPS = 1e-5            # nn.LayerNorm default


# --------------------------------------------------------------------------
# Fused Pallas kernel: one grid step == one transformer layer
# --------------------------------------------------------------------------
def _generator_kernel(x_ref, pos_ref, we_w_ref, we_b_ref,
                      in_w_ref, in_b_ref, out_w_ref, out_b_ref,
                      ln1_g_ref, ln1_b_ref, ln2_g_ref, ln2_b_ref,
                      ff1_w_ref, ff1_b_ref, ff2_w_ref, ff2_b_ref,
                      fc_w_ref, fc_b_ref, sel_ref, selt_ref,
                      o_ref, h_scr,
                      *, n_batch, seq_len, heads, ffn_chunk):
    E = we_w_ref.shape[1]
    hd = E // heads
    scale = 1.0 / math.sqrt(hd)
    N, S = n_batch, seq_len
    T = N * S
    hidden = ff1_w_ref.shape[1]

    l = pl.program_id(0)
    num_layers = pl.num_programs(0)

    def layer_norm(x, g, b):
        mean = jnp.mean(x, axis=-1, keepdims=True)
        xc = x - mean
        var = jnp.mean(xc * xc, axis=-1, keepdims=True)
        return xc * lax.rsqrt(var + LN_EPS) * g + b

    def bdot(a_f32, w_bf16):
        # bf16 MXU matmul with f32 accumulation
        return jnp.dot(a_f32.astype(jnp.bfloat16), w_bf16,
                       preferred_element_type=jnp.float32)

    # ---- layer 0: word embedding + positional embedding into the activation scratch
    @pl.when(l == 0)
    def _():
        h0 = bdot(x_ref[...], we_w_ref[...]) + we_b_ref[...]
        h0 = h0 + jnp.tile(pos_ref[...], (N, 1))           # row t=n*S+s gets pos[s]
        h_scr[...] = h0

    h = h_scr[...]                                          # (T, E) f32, resident

    # ---- multi-head self-attention (across the batch axis N, per (s, head)) ----
    qkv = bdot(h, in_w_ref[...]) + in_b_ref[...]            # (T, 3E) f32
    q = qkv[:, :E] * scale
    k = qkv[:, E:2 * E]
    v = qkv[:, 2 * E:]

    # Tile to one (N*N*S, E) slab, rows ordered (n2, n1, s):
    #   q4[(n2,n1,s)] = q[n1,s];  k4/v4[(n2,n1,s)] = k/v[n2,s]
    q4 = jnp.tile(q, (N, 1))                                # (N*T, E)
    k4 = jnp.concatenate(
        [jnp.tile(k[i * S:(i + 1) * S, :], (N, 1)) for i in range(N)], axis=0)
    v4 = jnp.concatenate(
        [jnp.tile(v[i * S:(i + 1) * S, :], (N, 1)) for i in range(N)], axis=0)

    # all per-head dot products in one lane-dense mul + one matmul vs selector
    scores = jnp.dot((q4 * k4).astype(jnp.bfloat16), sel_ref[...],
                     preferred_element_type=jnp.float32)    # (N*T, H)

    # softmax over n2 (row-chunks of size T), f32 throughout
    chunks = [scores[i * T:(i + 1) * T, :] for i in range(N)]   # each (T, H)
    m = chunks[0]
    for c in chunks[1:]:
        m = jnp.maximum(m, c)
    exps = [jnp.exp(c - m) for c in chunks]
    den = exps[0]
    for e_ in exps[1:]:
        den = den + e_
    inv = pl.reciprocal(den, approx=True)                   # EUP, not VPU divide
    probs = jnp.concatenate([e_ * inv for e_ in exps], axis=0)  # (N*T, H)

    # broadcast per-head prob back to that head's lane segment, weight V, reduce n2
    pb = jnp.dot(probs.astype(jnp.bfloat16), selt_ref[...],
                 preferred_element_type=jnp.float32)        # (N*T, E)
    wv = pb * v4
    ctx = wv[0:T]
    for i in range(1, N):
        ctx = ctx + wv[i * T:(i + 1) * T]                   # (T, E)

    attn = bdot(ctx, out_w_ref[...]) + out_b_ref[...]
    x1 = layer_norm(attn + h, ln1_g_ref[...], ln1_b_ref[...])   # norm1(attn + query)
    x1b = x1.astype(jnp.bfloat16)

    # ---- feed-forward, hidden dim chunked to limit live-intermediate size ----
    ff2 = jnp.zeros((T, E), jnp.float32)
    for c in range(hidden // ffn_chunk):
        lo = c * ffn_chunk
        hi = lo + ffn_chunk
        hchunk = jnp.maximum(
            jnp.dot(x1b, ff1_w_ref[:, lo:hi], preferred_element_type=jnp.float32)
            + ff1_b_ref[:, lo:hi], 0.0)
        ff2 = ff2 + jnp.dot(hchunk.astype(jnp.bfloat16), ff2_w_ref[lo:hi, :],
                            preferred_element_type=jnp.float32)
    ff2 = ff2 + ff2_b_ref[...]

    h_new = layer_norm(ff2 + x1, ln2_g_ref[...], ln2_b_ref[...])  # norm2(ff + x)
    h_scr[...] = h_new

    # ---- final layer: fc_out into lane-dense padded (T, 128) output ----
    @pl.when(l == num_layers - 1)
    def _():
        o_ref[...] = (bdot(h_new, fc_w_ref[...]) + fc_b_ref[...]).astype(o_ref.dtype)


# --------------------------------------------------------------------------
# Wrapper
# --------------------------------------------------------------------------
def transformer_generator_forward(params, x):
    N_, S, D = x.shape
    E, H = EMBED_SIZE, HEADS
    hd = E // H
    T = N_ * S
    L = params['in_proj_w'].shape[0]
    hidden = params['ff1_w'].shape[-1]
    ffn_chunk = 256 if hidden % 256 == 0 else hidden

    bf = lambda a: a.astype(jnp.bfloat16)

    # pad input lanes to 128 (and we_w rows to match; zero rows contribute nothing)
    Ein = ((D + 127) // 128) * 128
    x2 = jnp.zeros((T, Ein), jnp.float32).at[:, :D].set(
        x.reshape(T, D).astype(jnp.float32))
    we_w_p = bf(jnp.zeros((Ein, E), jnp.float32).at[:D, :].set(params['we_w']))

    # positional embedding passed as (S, E); broadcast over batch inside the kernel
    pos_s = params['pos'][:S]

    # lane-dense padded fc_out weights (output padded up to a multiple of 128)
    Dp = ((D + 127) // 128) * 128
    fc_w_pad = bf(jnp.zeros((E, Dp), jnp.float32).at[:, :D].set(params['fc_w']))
    fc_b_pad = jnp.zeros((1, Dp), jnp.float32).at[:, :D].set(
        params['fc_b'].reshape(1, D))

    # head-selector matrices (constants): sel[e, h] = 1 iff lane e is in head h
    lane = jnp.arange(E, dtype=jnp.int32)
    head = jnp.arange(H, dtype=jnp.int32)
    sel = (lane[:, None] // hd == head[None, :]).astype(jnp.bfloat16)   # (E, H)
    selt = jnp.transpose(sel)                                           # (H, E)

    kernel = functools.partial(_generator_kernel, n_batch=N_, seq_len=S,
                               heads=H, ffn_chunk=ffn_chunk)

    per_layer = lambda shape: pl.BlockSpec((None,) + shape, lambda l: (l, 0, 0))
    resident = lambda shape: pl.BlockSpec(shape, lambda l: (0, 0))

    out_pad = pl.pallas_call(
        kernel,
        out_shape=jax.ShapeDtypeStruct((T, Dp), jnp.float32),
        grid_spec=pltpu.PrefetchScalarGridSpec(
            num_scalar_prefetch=0,
            grid=(L,),
            in_specs=[
                resident((T, Ein)),            # x (padded)
                resident((S, E)),              # pos
                resident((Ein, E)),            # we_w (padded, bf16)
                resident((1, E)),              # we_b
                per_layer((E, 3 * E)),         # in_proj_w (bf16)
                per_layer((1, 3 * E)),         # in_proj_b
                per_layer((E, E)),             # out_w (bf16)
                per_layer((1, E)),             # out_b
                per_layer((1, E)),             # ln1_g
                per_layer((1, E)),             # ln1_b
                per_layer((1, E)),             # ln2_g
                per_layer((1, E)),             # ln2_b
                per_layer((E, hidden)),        # ff1_w (bf16)
                per_layer((1, hidden)),        # ff1_b
                per_layer((hidden, E)),        # ff2_w (bf16)
                per_layer((1, E)),             # ff2_b
                resident((E, Dp)),             # fc_w (padded, bf16)
                resident((1, Dp)),             # fc_b (padded)
                resident((E, H)),              # sel
                resident((H, E)),              # selt
            ],
            out_specs=pl.BlockSpec((T, Dp), lambda l: (0, 0)),
            scratch_shapes=[pltpu.VMEM((T, E), jnp.float32)],   # resident activations
        ),
        compiler_params=pltpu.CompilerParams(
            dimension_semantics=("arbitrary",),
            vmem_limit_bytes=32 * 1024 * 1024),
    )(x2, pos_s, we_w_p, params['we_b'],
      bf(params['in_proj_w']), params['in_proj_b'],
      bf(params['out_w']), params['out_b'],
      params['ln1_g'], params['ln1_b'],
      params['ln2_g'], params['ln2_b'],
      bf(params['ff1_w']), params['ff1_b'],
      bf(params['ff2_w']), params['ff2_b'],
      fc_w_pad, fc_b_pad, sel, selt)

    return out_pad[:, :D].reshape(N_, S, D)


# --------------------------------------------------------------------------
# Deterministic parameter init (shapes from the PyTorch __init__, layer-stacked)
# --------------------------------------------------------------------------
def init_params(key, noise_dim, embed, num_layers, heads, fwd_exp, max_length):
    def rnd(k, shape, scale=0.02):
        return scale * jax.random.normal(k, shape, jnp.float32)

    hidden = fwd_exp * embed
    keys = jax.random.split(key, 10)
    return {
        'we_w': rnd(keys[0], (noise_dim, embed)),
        'we_b': rnd(keys[1], (1, embed)),
        'pos': rnd(keys[2], (max_length, embed)),
        'fc_w': rnd(keys[3], (embed, noise_dim)),
        'fc_b': jnp.zeros((noise_dim,), jnp.float32),
        'in_proj_w': rnd(keys[4], (num_layers, embed, 3 * embed)),
        'in_proj_b': rnd(keys[5], (num_layers, 1, 3 * embed)),
        'out_w': rnd(keys[6], (num_layers, embed, embed)),
        'out_b': jnp.zeros((num_layers, 1, embed), jnp.float32),
        'ln1_g': jnp.ones((num_layers, 1, embed), jnp.float32),
        'ln1_b': jnp.zeros((num_layers, 1, embed), jnp.float32),
        'ln2_g': jnp.ones((num_layers, 1, embed), jnp.float32),
        'ln2_b': jnp.zeros((num_layers, 1, embed), jnp.float32),
        'ff1_w': rnd(keys[7], (num_layers, embed, hidden)),
        'ff1_b': rnd(keys[8], (num_layers, 1, hidden)),
        'ff2_w': rnd(keys[9], (num_layers, hidden, embed)),
        'ff2_b': jnp.zeros((num_layers, 1, embed), jnp.float32),
    }


# --------------------------------------------------------------------------
# Pure-JAX f32 reference (same PyTorch semantics) for a sanity check
# --------------------------------------------------------------------------
def reference_forward(params, x):
    N_, S, D = x.shape
    E, H = EMBED_SIZE, HEADS
    hd = E // H

    def ln(z, g, b):
        mu = jnp.mean(z, axis=-1, keepdims=True)
        zc = z - mu
        var = jnp.mean(zc * zc, axis=-1, keepdims=True)
        return zc * lax.rsqrt(var + LN_EPS) * g + b

    h = (jnp.einsum('nsd,de->nse', x, params['we_w']) + params['we_b'][0]
         + params['pos'][:S][None, :, :])
    for i in range(params['in_proj_w'].shape[0]):
        qkv = jnp.einsum('nse,ef->nsf', h, params['in_proj_w'][i]) + params['in_proj_b'][i, 0]
        q, k, v = qkv[..., :E], qkv[..., E:2 * E], qkv[..., 2 * E:]
        qh = q.reshape(N_, S, H, hd) * (1.0 / math.sqrt(hd))
        kh = k.reshape(N_, S, H, hd)
        vh = v.reshape(N_, S, H, hd)
        scores = jnp.einsum('nshd,mshd->shnm', qh, kh)   # attention across batch axis N
        p = jax.nn.softmax(scores, axis=-1)
        ctx = jnp.einsum('shnm,mshd->nshd', p, vh).reshape(N_, S, E)
        attn = jnp.einsum('nse,ef->nsf', ctx, params['out_w'][i]) + params['out_b'][i, 0]
        x1 = ln(attn + h, params['ln1_g'][i, 0], params['ln1_b'][i, 0])
        ff = jax.nn.relu(jnp.einsum('nse,ef->nsf', x1, params['ff1_w'][i]) + params['ff1_b'][i, 0])
        ff2 = jnp.einsum('nsf,fe->nse', ff, params['ff2_w'][i]) + params['ff2_b'][i, 0]
        h = ln(ff2 + x1, params['ln2_g'][i, 0], params['ln2_b'][i, 0])
    return jnp.einsum('nse,ed->nsd', h, params['fc_w']) + params['fc_b']


if __name__ == "__main__":
    key = jax.random.PRNGKey(0)
    pkey, xkey = jax.random.split(key)

    N, S = 4, 8   # small batch / sequence; S <= MAX_LENGTH
    params = init_params(pkey, NOISE_DIM, EMBED_SIZE, NUM_LAYERS, HEADS,
                         FORWARD_EXPANSION, MAX_LENGTH)
    x = jax.random.normal(xkey, (N, S, NOISE_DIM), jnp.float32)

    fwd = jax.jit(transformer_generator_forward)
    y = jax.block_until_ready(fwd(params, x))

    assert y.shape == (N, S, NOISE_DIM), y.shape
    assert bool(jnp.all(jnp.isfinite(y)))

    # sanity check against a pure-JAX f32 reference (tolerance absorbs bf16 weights)
    with jax.default_matmul_precision('highest'):
        y_ref = reference_forward(params, x)
    err = float(jnp.max(jnp.abs(y - y_ref)))
    assert err < 1e-1, f"max abs diff vs reference: {err}"

    print("KERNEL_OK")
</pallas_src>

<mosaic_0001>
module attributes {stable_mosaic.version = 11 : i64} {
  func.func @_generator_kernel(%arg0: i32, %arg1: memref<32x128xf32, #tpu.memory_space<vmem>>, %arg2: memref<8x128xf32, #tpu.memory_space<vmem>>, %arg3: memref<128x128xbf16, #tpu.memory_space<vmem>>, %arg4: memref<1x128xf32, #tpu.memory_space<vmem>>, %arg5: memref<1x128x384xbf16, #tpu.memory_space<vmem>>, %arg6: memref<1x1x384xf32, #tpu.memory_space<vmem>>, %arg7: memref<1x128x128xbf16, #tpu.memory_space<vmem>>, %arg8: memref<1x1x128xf32, #tpu.memory_space<vmem>>, %arg9: memref<1x1x128xf32, #tpu.memory_space<vmem>>, %arg10: memref<1x1x128xf32, #tpu.memory_space<vmem>>, %arg11: memref<1x1x128xf32, #tpu.memory_space<vmem>>, %arg12: memref<1x1x128xf32, #tpu.memory_space<vmem>>, %arg13: memref<1x128x1024xbf16, #tpu.memory_space<vmem>>, %arg14: memref<1x1x1024xf32, #tpu.memory_space<vmem>>, %arg15: memref<1x1024x128xbf16, #tpu.memory_space<vmem>>, %arg16: memref<1x1x128xf32, #tpu.memory_space<vmem>>, %arg17: memref<128x128xbf16, #tpu.memory_space<vmem>>, %arg18: memref<1x128xf32, #tpu.memory_space<vmem>>, %arg19: memref<128x8xbf16, #tpu.memory_space<vmem>>, %arg20: memref<8x128xbf16, #tpu.memory_space<vmem>>, %arg21: memref<32x128xf32, #tpu.memory_space<vmem>>, %arg22: memref<32x128xf32, #tpu.memory_space<vmem>>) attributes {dimension_semantics = [#tpu.dimension_semantics<arbitrary>], iteration_bounds = array<i64: 6>, scalar_prefetch = 0 : i64, scratch_operands = 1 : i64, tpu.core_type = #tpu.core_type<tc>, window_params = [{pipeline_mode = #tpu.pipeline_mode<synchronous>, transform_indices = @transform_0, window_bounds = array<i64: 32, 128>}, {pipeline_mode = #tpu.pipeline_mode<synchronous>, transform_indices = @transform_1, window_bounds = array<i64: 8, 128>}, {pipeline_mode = #tpu.pipeline_mode<synchronous>, transform_indices = @transform_2, window_bounds = array<i64: 128, 128>}, {pipeline_mode = #tpu.pipeline_mode<synchronous>, transform_indices = @transform_3, window_bounds = array<i64: 1, 128>}, {transform_indices = @transform_4, window_bounds = array<i64: 1, 128, 384>}, {transform_indices = @transform_5, window_bounds = array<i64: 1, 1, 384>}, {transform_indices = @transform_6, window_bounds = array<i64: 1, 128, 128>}, {transform_indices = @transform_7, window_bounds = array<i64: 1, 1, 128>}, {transform_indices = @transform_8, window_bounds = array<i64: 1, 1, 128>}, {transform_indices = @transform_9, window_bounds = array<i64: 1, 1, 128>}, {transform_indices = @transform_10, window_bounds = array<i64: 1, 1, 128>}, {transform_indices = @transform_11, window_bounds = array<i64: 1, 1, 128>}, {transform_indices = @transform_12, window_bounds = array<i64: 1, 128, 1024>}, {transform_indices = @transform_13, window_bounds = array<i64: 1, 1, 1024>}, {transform_indices = @transform_14, window_bounds = array<i64: 1, 1024, 128>}, {transform_indices = @transform_15, window_bounds = array<i64: 1, 1, 128>}, {pipeline_mode = #tpu.pipeline_mode<synchronous>, transform_indices = @transform_16, window_bounds = array<i64: 128, 128>}, {pipeline_mode = #tpu.pipeline_mode<synchronous>, transform_indices = @transform_17, window_bounds = array<i64: 1, 128>}, {pipeline_mode = #tpu.pipeline_mode<synchronous>, transform_indices = @transform_18, window_bounds = array<i64: 128, 8>}, {pipeline_mode = #tpu.pipeline_mode<synchronous>, transform_indices = @transform_19, window_bounds = array<i64: 8, 128>}, {pipeline_mode = #tpu.pipeline_mode<synchronous>, transform_indices = @transform_20, window_bounds = array<i64: 32, 128>}]} {
    %c0_i32 = arith.constant 0 : i32
    %0 = arith.cmpi eq, %arg0, %c0_i32 : i32
    %1 = arith.extui %0 : i1 to i32
    %c0_i32_0 = arith.constant 0 : i32
    %2 = arith.cmpi ne, %1, %c0_i32_0 : i32
    scf.if %2 {
      %c0_96 = arith.constant 0 : index
      %c0_97 = arith.constant 0 : index
      %199 = vector.load %arg1[%c0_96, %c0_97] : memref<32x128xf32, #tpu.memory_space<vmem>>, vector<32x128xf32>
      %c0_98 = arith.constant 0 : index
      %c0_99 = arith.constant 0 : index
      %200 = vector.load %arg3[%c0_98, %c0_99] : memref<128x128xbf16, #tpu.memory_space<vmem>>, vector<128x128xbf16>
      %201 = arith.truncf %199 : vector<32x128xf32> to vector<32x128xbf16>
      %cst_100 = arith.constant dense<0.000000e+00> : vector<32x128xf32>
      %202 = tpu.matmul %201, %200, %cst_100 {dimension_numbers = #tpu.dot_dimension_numbers<[1], [0], [0], [1], [0, 0, 1, 1], [], []>} : vector<32x128xbf16>, vector<128x128xbf16>, vector<32x128xf32> -> vector<32x128xf32>
      %c0_101 = arith.constant 0 : index
      %c0_102 = arith.constant 0 : index
      %203 = vector.load %arg4[%c0_101, %c0_102] : memref<1x128xf32, #tpu.memory_space<vmem>>, vector<1x128xf32>
      %204 = vector.broadcast %203 : vector<1x128xf32> to vector<32x128xf32>
      %205 = arith.addf %202, %204 : vector<32x128xf32>
      %c0_103 = arith.constant 0 : index
      %c0_104 = arith.constant 0 : index
      %206 = vector.load %arg2[%c0_103, %c0_104] : memref<8x128xf32, #tpu.memory_space<vmem>>, vector<8x128xf32>
      %207 = tpu.concatenate %206, %206, %206, %206 in 0 : vector<8x128xf32>, vector<8x128xf32>, vector<8x128xf32>, vector<8x128xf32> -> vector<32x128xf32>
      %208 = arith.addf %205, %207 : vector<32x128xf32>
      %c0_105 = arith.constant 0 : index
      %c0_106 = arith.constant 0 : index
      %209 = vector.load %arg22[%c0_105, %c0_106] : memref<32x128xf32, #tpu.memory_space<vmem>>, vector<32x128xf32>
      tpu.vector_store %arg22[%c0_105, %c0_106], %208 {strides = array<i32>} : memref<32x128xf32, #tpu.memory_space<vmem>>, vector<32x128xf32>,
    } else {
    }
    %c0 = arith.constant 0 : index
    %c0_1 = arith.constant 0 : index
    %3 = vector.load %arg22[%c0, %c0_1] : memref<32x128xf32, #tpu.memory_space<vmem>>, vector<32x128xf32>
    %c0_2 = arith.constant 0 : index
    %c0_3 = arith.constant 0 : index
    %c0_4 = arith.constant 0 : index
    %4 = vector.load %arg5[%c0_2, %c0_3, %c0_4] : memref<1x128x384xbf16, #tpu.memory_space<vmem>>, vector<1x128x384xbf16>
    %5 = vector.shape_cast %4 : vector<1x128x384xbf16> to vector<128x384xbf16>
    %6 = arith.truncf %3 : vector<32x128xf32> to vector<32x128xbf16>
    %cst = arith.constant dense<0.000000e+00> : vector<32x384xf32>
    %7 = tpu.matmul %6, %5, %cst {dimension_numbers = #tpu.dot_dimension_numbers<[1], [0], [0], [1], [0, 0, 1, 1], [], []>} : vector<32x128xbf16>, vector<128x384xbf16>, vector<32x384xf32> -> vector<32x384xf32>
    %c0_5 = arith.constant 0 : index
    %c0_6 = arith.constant 0 : index
    %c0_7 = arith.constant 0 : index
    %8 = vector.load %arg6[%c0_5, %c0_6, %c0_7] : memref<1x1x384xf32, #tpu.memory_space<vmem>>, vector<1x1x384xf32>
    %9 = vector.shape_cast %8 : vector<1x1x384xf32> to vector<1x384xf32>
    %10 = vector.broadcast %9 : vector<1x384xf32> to vector<32x384xf32>
    %11 = arith.addf %7, %10 : vector<32x384xf32>
    %12 = vector.extract_strided_slice %11 {offsets = [0, 0], sizes = [32, 128], strides = [1, 1]} : vector<32x384xf32> to vector<32x128xf32>
    %cst_8 = arith.constant 2.500000e-01 : f32
    %13 = vector.broadcast %cst_8 : f32 to vector<32x128xf32>
    %14 = arith.mulf %12, %13 : vector<32x128xf32>
    %15 = vector.extract_strided_slice %11 {offsets = [0, 128], sizes = [32, 128], strides = [1, 1]} : vector<32x384xf32> to vector<32x128xf32>
    %16 = vector.extract_strided_slice %11 {offsets = [0, 256], sizes = [32, 128], strides = [1, 1]} : vector<32x384xf32> to vector<32x128xf32>
    %17 = tpu.concatenate %14, %14, %14, %14 in 0 : vector<32x128xf32>, vector<32x128xf32>, vector<32x128xf32>, vector<32x128xf32> -> vector<128x128xf32>
    %18 = vector.extract_strided_slice %15 {offsets = [0, 0], sizes = [8, 128], strides = [1, 1]} : vector<32x128xf32> to vector<8x128xf32>
    %19 = tpu.concatenate %18, %18, %18, %18 in 0 : vector<8x128xf32>, vector<8x128xf32>, vector<8x128xf32>, vector<8x128xf32> -> vector<32x128xf32>
    %20 = vector.extract_strided_slice %15 {offsets = [8, 0], sizes = [8, 128], strides = [1, 1]} : vector<32x128xf32> to vector<8x128xf32>
    %21 = tpu.concatenate %20, %20, %20, %20 in 0 : vector<8x128xf32>, vector<8x128xf32>, vector<8x128xf32>, vector<8x128xf32> -> vector<32x128xf32>
    %22 = vector.extract_strided_slice %15 {offsets = [16, 0], sizes = [8, 128], strides = [1, 1]} : vector<32x128xf32> to vector<8x128xf32>
    %23 = tpu.concatenate %22, %22, %22, %22 in 0 : vector<8x128xf32>, vector<8x128xf32>, vector<8x128xf32>, vector<8x128xf32> -> vector<32x128xf32>
    %24 = vector.extract_strided_slice %15 {offsets = [24, 0], sizes = [8, 128], strides = [1, 1]} : vector<32x128xf32> to vector<8x128xf32>
    %25 = tpu.concatenate %24, %24, %24, %24 in 0 : vector<8x128xf32>, vector<8x128xf32>, vector<8x128xf32>, vector<8x128xf32> -> vector<32x128xf32>
    %26 = tpu.concatenate %19, %21, %23, %25 in 0 : vector<32x128xf32>, vector<32x128xf32>, vector<32x128xf32>, vector<32x128xf32> -> vector<128x128xf32>
    %27 = vector.extract_strided_slice %16 {offsets = [0, 0], sizes = [8, 128], strides = [1, 1]} : vector<32x128xf32> to vector<8x128xf32>
    %28 = tpu.concatenate %27, %27, %27, %27 in 0 : vector<8x128xf32>, vector<8x128xf32>, vector<8x128xf32>, vector<8x128xf32> -> vector<32x128xf32>
    %29 = vector.extract_strided_slice %16 {offsets = [8, 0], sizes = [8, 128], strides = [1, 1]} : vector<32x128xf32> to vector<8x128xf32>
    %30 = tpu.concatenate %29, %29, %29, %29 in 0 : vector<8x128xf32>, vector<8x128xf32>, vector<8x128xf32>, vector<8x128xf32> -> vector<32x128xf32>
    %31 = vector.extract_strided_slice %16 {offsets = [16, 0], sizes = [8, 128], strides = [1, 1]} : vector<32x128xf32> to vector<8x128xf32>
    %32 = tpu.concatenate %31, %31, %31, %31 in 0 : vector<8x128xf32>, vector<8x128xf32>, vector<8x128xf32>, vector<8x128xf32> -> vector<32x128xf32>
    %33 = vector.extract_strided_slice %16 {offsets = [24, 0], sizes = [8, 128], strides = [1, 1]} : vector<32x128xf32> to vector<8x128xf32>
    %34 = tpu.concatenate %33, %33, %33, %33 in 0 : vector<8x128xf32>, vector<8x128xf32>, vector<8x128xf32>, vector<8x128xf32> -> vector<32x128xf32>
    %35 = tpu.concatenate %28, %30, %32, %34 in 0 : vector<32x128xf32>, vector<32x128xf32>, vector<32x128xf32>, vector<32x128xf32> -> vector<128x128xf32>
    %36 = arith.mulf %17, %26 : vector<128x128xf32>
    %37 = arith.truncf %36 : vector<128x128xf32> to vector<128x128xbf16>
    %c0_9 = arith.constant 0 : index
    %c0_10 = arith.constant 0 : index
    %38 = vector.load %arg19[%c0_9, %c0_10] : memref<128x8xbf16, #tpu.memory_space<vmem>>, vector<128x8xbf16>
    %cst_11 = arith.constant dense<0.000000e+00> : vector<128x8xf32>
    %39 = tpu.matmul %37, %38, %cst_11 {dimension_numbers = #tpu.dot_dimension_numbers<[1], [0], [0], [1], [0, 0, 1, 1], [], []>} : vector<128x128xbf16>, vector<128x8xbf16>, vector<128x8xf32> -> vector<128x8xf32>
    %40 = vector.extract_strided_slice %39 {offsets = [0, 0], sizes = [32, 8], strides = [1, 1]} : vector<128x8xf32> to vector<32x8xf32>
    %41 = vector.extract_strided_slice %39 {offsets = [32, 0], sizes = [32, 8], strides = [1, 1]} : vector<128x8xf32> to vector<32x8xf32>
    %42 = vector.extract_strided_slice %39 {offsets = [64, 0], sizes = [32, 8], strides = [1, 1]} : vector<128x8xf32> to vector<32x8xf32>
    %43 = vector.extract_strided_slice %39 {offsets = [96, 0], sizes = [32, 8], strides = [1, 1]} : vector<128x8xf32> to vector<32x8xf32>
    %44 = arith.maximumf %40, %41 : vector<32x8xf32>
    %45 = arith.maximumf %44, %42 : vector<32x8xf32>
    %46 = arith.maximumf %45, %43 : vector<32x8xf32>
    %47 = arith.subf %40, %46 : vector<32x8xf32>
    %48 = math.exp %47 : vector<32x8xf32>
    %49 = arith.subf %41, %46 : vector<32x8xf32>
    %50 = math.exp %49 : vector<32x8xf32>
    %51 = arith.subf %42, %46 : vector<32x8xf32>
    %52 = math.exp %51 : vector<32x8xf32>
    %53 = arith.subf %43, %46 : vector<32x8xf32>
    %54 = math.exp %53 : vector<32x8xf32>
    %55 = arith.addf %48, %50 : vector<32x8xf32>
    %56 = arith.addf %55, %52 : vector<32x8xf32>
    %57 = arith.addf %56, %54 : vector<32x8xf32>
    %58 = tpu.reciprocal %57 {approx = true} : vector<32x8xf32> -> vector<32x8xf32>
    %59 = arith.mulf %48, %58 : vector<32x8xf32>
    %60 = arith.mulf %50, %58 : vector<32x8xf32>
    %61 = arith.mulf %52, %58 : vector<32x8xf32>
    %62 = arith.mulf %54, %58 : vector<32x8xf32>
    %63 = tpu.concatenate %59, %60, %61, %62 in 0 : vector<32x8xf32>, vector<32x8xf32>, vector<32x8xf32>, vector<32x8xf32> -> vector<128x8xf32>
    %64 = arith.truncf %63 : vector<128x8xf32> to vector<128x8xbf16>
    %c0_12 = arith.constant 0 : index
    %c0_13 = arith.constant 0 : index
    %65 = vector.load %arg20[%c0_12, %c0_13] : memref<8x128xbf16, #tpu.memory_space<vmem>>, vector<8x128xbf16>
    %cst_14 = arith.constant dense<0.000000e+00> : vector<128x128xf32>
    %66 = tpu.matmul %64, %65, %cst_14 {dimension_numbers = #tpu.dot_dimension_numbers<[1], [0], [0], [1], [0, 0, 1, 1], [], []>} : vector<128x8xbf16>, vector<8x128xbf16>, vector<128x128xf32> -> vector<128x128xf32>
    %67 = arith.mulf %66, %35 : vector<128x128xf32>
    %68 = vector.extract_strided_slice %67 {offsets = [0, 0], sizes = [32, 128], strides = [1, 1]} : vector<128x128xf32> to vector<32x128xf32>
    %69 = vector.extract_strided_slice %67 {offsets = [32, 0], sizes = [32, 128], strides = [1, 1]} : vector<128x128xf32> to vector<32x128xf32>
    %70 = arith.addf %68, %69 : vector<32x128xf32>
    %71 = vector.extract_strided_slice %67 {offsets = [64, 0], sizes = [32, 128], strides = [1, 1]} : vector<128x128xf32> to vector<32x128xf32>
    %72 = arith.addf %70, %71 : vector<32x128xf32>
    %73 = vector.extract_strided_slice %67 {offsets = [96, 0], sizes = [32, 128], strides = [1, 1]} : vector<128x128xf32> to vector<32x128xf32>
    %74 = arith.addf %72, %73 : vector<32x128xf32>
    %c0_15 = arith.constant 0 : index
    %c0_16 = arith.constant 0 : index
    %c0_17 = arith.constant 0 : index
    %75 = vector.load %arg7[%c0_15, %c0_16, %c0_17] : memref<1x128x128xbf16, #tpu.memory_space<vmem>>, vector<1x128x128xbf16>
    %76 = vector.shape_cast %75 : vector<1x128x128xbf16> to vector<128x128xbf16>
    %77 = arith.truncf %74 : vector<32x128xf32> to vector<32x128xbf16>
    %cst_18 = arith.constant dense<0.000000e+00> : vector<32x128xf32>
    %78 = tpu.matmul %77, %76, %cst_18 {dimension_numbers = #tpu.dot_dimension_numbers<[1], [0], [0], [1], [0, 0, 1, 1], [], []>} : vector<32x128xbf16>, vector<128x128xbf16>, vector<32x128xf32> -> vector<32x128xf32>
    %c0_19 = arith.constant 0 : index
    %c0_20 = arith.constant 0 : index
    %c0_21 = arith.constant 0 : index
    %79 = vector.load %arg8[%c0_19, %c0_20, %c0_21] : memref<1x1x128xf32, #tpu.memory_space<vmem>>, vector<1x1x128xf32>
    %80 = vector.shape_cast %79 : vector<1x1x128xf32> to vector<1x128xf32>
    %81 = vector.broadcast %80 : vector<1x128xf32> to vector<32x128xf32>
    %82 = arith.addf %78, %81 : vector<32x128xf32>
    %83 = arith.addf %82, %3 : vector<32x128xf32>
    %c0_22 = arith.constant 0 : index
    %c0_23 = arith.constant 0 : index
    %c0_24 = arith.constant 0 : index
    %84 = vector.load %arg9[%c0_22, %c0_23, %c0_24] : memref<1x1x128xf32, #tpu.memory_space<vmem>>, vector<1x1x128xf32>
    %85 = vector.shape_cast %84 : vector<1x1x128xf32> to vector<1x128xf32>
    %c0_25 = arith.constant 0 : index
    %c0_26 = arith.constant 0 : index
    %c0_27 = arith.constant 0 : index
    %86 = vector.load %arg10[%c0_25, %c0_26, %c0_27] : memref<1x1x128xf32, #tpu.memory_space<vmem>>, vector<1x1x128xf32>
    %87 = vector.shape_cast %86 : vector<1x1x128xf32> to vector<1x128xf32>
    %cst_28 = arith.constant dense<0.000000e+00> : vector<32xf32>
    %88 = vector.multi_reduction <add>, %83, %cst_28 [1] : vector<32x128xf32> to vector<32xf32>
    %89 = vector.shape_cast %88 : vector<32xf32> to vector<32x1xf32>
    %cst_29 = arith.constant 1.280000e+02 : f32
    %90 = vector.broadcast %cst_29 : f32 to vector<32x1xf32>
    %91 = arith.divf %89, %90 : vector<32x1xf32>
    %92 = vector.broadcast %91 : vector<32x1xf32> to vector<32x128xf32>
    %93 = arith.subf %83, %92 : vector<32x128xf32>
    %94 = arith.mulf %93, %93 : vector<32x128xf32>
    %cst_30 = arith.constant dense<0.000000e+00> : vector<32xf32>
    %95 = vector.multi_reduction <add>, %94, %cst_30 [1] : vector<32x128xf32> to vector<32xf32>
    %96 = vector.shape_cast %95 : vector<32xf32> to vector<32x1xf32>
    %cst_31 = arith.constant 1.280000e+02 : f32
    %97 = vector.broadcast %cst_31 : f32 to vector<32x1xf32>
    %98 = arith.divf %96, %97 : vector<32x1xf32>
    %cst_32 = arith.constant 9.99999974E-6 : f32
    %99 = vector.broadcast %cst_32 : f32 to vector<32x1xf32>
    %100 = arith.addf %98, %99 : vector<32x1xf32>
    %101 = math.rsqrt %100 : vector<32x1xf32>
    %102 = vector.broadcast %101 : vector<32x1xf32> to vector<32x128xf32>
    %103 = arith.mulf %93, %102 : vector<32x128xf32>
    %104 = vector.broadcast %85 : vector<1x128xf32> to vector<32x128xf32>
    %105 = arith.mulf %103, %104 : vector<32x128xf32>
    %106 = vector.broadcast %87 : vector<1x128xf32> to vector<32x128xf32>
    %107 = arith.addf %105, %106 : vector<32x128xf32>
    %108 = arith.truncf %107 : vector<32x128xf32> to vector<32x128xbf16>
    %cst_33 = arith.constant 0.000000e+00 : f32
    %109 = vector.broadcast %cst_33 : f32 to vector<32x128xf32>
    %c0_34 = arith.constant 0 : index
    %c0_35 = arith.constant 0 : index
    %c0_36 = arith.constant 0 : index
    %110 = vector.load %arg13[%c0_34, %c0_35, %c0_36] : memref<1x128x1024xbf16, #tpu.memory_space<vmem>>, vector<1x128x256xbf16>
    %111 = vector.shape_cast %110 : vector<1x128x256xbf16> to vector<128x256xbf16>
    %cst_37 = arith.constant dense<0.000000e+00> : vector<32x256xf32>
    %112 = tpu.matmul %108, %111, %cst_37 {dimension_numbers = #tpu.dot_dimension_numbers<[1], [0], [0], [1], [0, 0, 1, 1], [], []>} : vector<32x128xbf16>, vector<128x256xbf16>, vector<32x256xf32> -> vector<32x256xf32>
    %c0_38 = arith.constant 0 : index
    %c0_39 = arith.constant 0 : index
    %c0_40 = arith.constant 0 : index
    %113 = vector.load %arg14[%c0_38, %c0_39, %c0_40] : memref<1x1x1024xf32, #tpu.memory_space<vmem>>, vector<1x1x256xf32>
    %114 = vector.shape_cast %113 : vector<1x1x256xf32> to vector<1x256xf32>
    %115 = vector.broadcast %114 : vector<1x256xf32> to vector<32x256xf32>
    %116 = arith.addf %112, %115 : vector<32x256xf32>
    %cst_41 = arith.constant 0.000000e+00 : f32
    %117 = vector.broadcast %cst_41 : f32 to vector<32x256xf32>
    %118 = arith.maximumf %116, %117 : vector<32x256xf32>
    %119 = arith.truncf %118 : vector<32x256xf32> to vector<32x256xbf16>
    %c0_42 = arith.constant 0 : index
    %c0_43 = arith.constant 0 : index
    %c0_44 = arith.constant 0 : index
    %120 = vector.load %arg15[%c0_42, %c0_43, %c0_44] : memref<1x1024x128xbf16, #tpu.memory_space<vmem>>, vector<1x256x128xbf16>
    %121 = vector.shape_cast %120 : vector<1x256x128xbf16> to vector<256x128xbf16>
    %cst_45 = arith.constant dense<0.000000e+00> : vector<32x128xf32>
    %122 = tpu.matmul %119, %121, %cst_45 {dimension_numbers = #tpu.dot_dimension_numbers<[1], [0], [0], [1], [0, 0, 1, 1], [], []>} : vector<32x256xbf16>, vector<256x128xbf16>, vector<32x128xf32> -> vector<32x128xf32>
    %123 = arith.addf %109, %122 : vector<32x128xf32>
    %c0_46 = arith.constant 0 : index
    %c0_47 = arith.constant 0 : index
    %c256 = arith.constant 256 : index
    %124 = vector.load %arg13[%c0_46, %c0_47, %c256] : memref<1x128x1024xbf16, #tpu.memory_space<vmem>>, vector<1x128x256xbf16>
    %125 = vector.shape_cast %124 : vector<1x128x256xbf16> to vector<128x256xbf16>
    %cst_48 = arith.constant dense<0.000000e+00> : vector<32x256xf32>
    %126 = tpu.matmul %108, %125, %cst_48 {dimension_numbers = #tpu.dot_dimension_numbers<[1], [0], [0], [1], [0, 0, 1, 1], [], []>} : vector<32x128xbf16>, vector<128x256xbf16>, vector<32x256xf32> -> vector<32x256xf32>
    %c0_49 = arith.constant 0 : index
    %c0_50 = arith.constant 0 : index
    %c256_51 = arith.constant 256 : index
    %127 = vector.load %arg14[%c0_49, %c0_50, %c256_51] : memref<1x1x1024xf32, #tpu.memory_space<vmem>>, vector<1x1x256xf32>
    %128 = vector.shape_cast %127 : vector<1x1x256xf32> to vector<1x256xf32>
    %129 = vector.broadcast %128 : vector<1x256xf32> to vector<32x256xf32>
    %130 = arith.addf %126, %129 : vector<32x256xf32>
    %cst_52 = arith.constant 0.000000e+00 : f32
    %131 = vector.broadcast %cst_52 : f32 to vector<32x256xf32>
    %132 = arith.maximumf %130, %131 : vector<32x256xf32>
    %133 = arith.truncf %132 : vector<32x256xf32> to vector<32x256xbf16>
    %c0_53 = arith.constant 0 : index
    %c256_54 = arith.constant 256 : index
    %c0_55 = arith.constant 0 : index
    %134 = vector.load %arg15[%c0_53, %c256_54, %c0_55] : memref<1x1024x128xbf16, #tpu.memory_space<vmem>>, vector<1x256x128xbf16>
    %135 = vector.shape_cast %134 : vector<1x256x128xbf16> to vector<256x128xbf16>
    %cst_56 = arith.constant dense<0.000000e+00> : vector<32x128xf32>
    %136 = tpu.matmul %133, %135, %cst_56 {dimension_numbers = #tpu.dot_dimension_numbers<[1], [0], [0], [1], [0, 0, 1, 1], [], []>} : vector<32x256xbf16>, vector<256x128xbf16>, vector<32x128xf32> -> vector<32x128xf32>
    %137 = arith.addf %123, %136 : vector<32x128xf32>
    %c0_57 = arith.constant 0 : index
    %c0_58 = arith.constant 0 : index
    %c512 = arith.constant 512 : index
    %138 = vector.load %arg13[%c0_57, %c0_58, %c512] : memref<1x128x1024xbf16, #tpu.memory_space<vmem>>, vector<1x128x256xbf16>
    %139 = vector.shape_cast %138 : vector<1x128x256xbf16> to vector<128x256xbf16>
    %cst_59 = arith.constant dense<0.000000e+00> : vector<32x256xf32>
    %140 = tpu.matmul %108, %139, %cst_59 {dimension_numbers = #tpu.dot_dimension_numbers<[1], [0], [0], [1], [0, 0, 1, 1], [], []>} : vector<32x128xbf16>, vector<128x256xbf16>, vector<32x256xf32> -> vector<32x256xf32>
    %c0_60 = arith.constant 0 : index
    %c0_61 = arith.constant 0 : index
    %c512_62 = arith.constant 512 : index
    %141 = vector.load %arg14[%c0_60, %c0_61, %c512_62] : memref<1x1x1024xf32, #tpu.memory_space<vmem>>, vector<1x1x256xf32>
    %142 = vector.shape_cast %141 : vector<1x1x256xf32> to vector<1x256xf32>
    %143 = vector.broadcast %142 : vector<1x256xf32> to vector<32x256xf32>
    %144 = arith.addf %140, %143 : vector<32x256xf32>
    %cst_63 = arith.constant 0.000000e+00 : f32
    %145 = vector.broadcast %cst_63 : f32 to vector<32x256xf32>
    %146 = arith.maximumf %144, %145 : vector<32x256xf32>
    %147 = arith.truncf %146 : vector<32x256xf32> to vector<32x256xbf16>
    %c0_64 = arith.constant 0 : index
    %c512_65 = arith.constant 512 : index
    %c0_66 = arith.constant 0 : index
    %148 = vector.load %arg15[%c0_64, %c512_65, %c0_66] : memref<1x1024x128xbf16, #tpu.memory_space<vmem>>, vector<1x256x128xbf16>
    %149 = vector.shape_cast %148 : vector<1x256x128xbf16> to vector<256x128xbf16>
    %cst_67 = arith.constant dense<0.000000e+00> : vector<32x128xf32>
    %150 = tpu.matmul %147, %149, %cst_67 {dimension_numbers = #tpu.dot_dimension_numbers<[1], [0], [0], [1], [0, 0, 1, 1], [], []>} : vector<32x256xbf16>, vector<256x128xbf16>, vector<32x128xf32> -> vector<32x128xf32>
    %151 = arith.addf %137, %150 : vector<32x128xf32>
    %c0_68 = arith.constant 0 : index
    %c0_69 = arith.constant 0 : index
    %c768 = arith.constant 768 : index
    %152 = vector.load %arg13[%c0_68, %c0_69, %c768] : memref<1x128x1024xbf16, #tpu.memory_space<vmem>>, vector<1x128x256xbf16>
    %153 = vector.shape_cast %152 : vector<1x128x256xbf16> to vector<128x256xbf16>
    %cst_70 = arith.constant dense<0.000000e+00> : vector<32x256xf32>
    %154 = tpu.matmul %108, %153, %cst_70 {dimension_numbers = #tpu.dot_dimension_numbers<[1], [0], [0], [1], [0, 0, 1, 1], [], []>} : vector<32x128xbf16>, vector<128x256xbf16>, vector<32x256xf32> -> vector<32x256xf32>
    %c0_71 = arith.constant 0 : index
    %c0_72 = arith.constant 0 : index
    %c768_73 = arith.constant 768 : index
    %155 = vector.load %arg14[%c0_71, %c0_72, %c768_73] : memref<1x1x1024xf32, #tpu.memory_space<vmem>>, vector<1x1x256xf32>
    %156 = vector.shape_cast %155 : vector<1x1x256xf32> to vector<1x256xf32>
    %157 = vector.broadcast %156 : vector<1x256xf32> to vector<32x256xf32>
    %158 = arith.addf %154, %157 : vector<32x256xf32>
    %cst_74 = arith.constant 0.000000e+00 : f32
    %159 = vector.broadcast %cst_74 : f32 to vector<32x256xf32>
    %160 = arith.maximumf %158, %159 : vector<32x256xf32>
    %161 = arith.truncf %160 : vector<32x256xf32> to vector<32x256xbf16>
    %c0_75 = arith.constant 0 : index
    %c768_76 = arith.constant 768 : index
    %c0_77 = arith.constant 0 : index
    %162 = vector.load %arg15[%c0_75, %c768_76, %c0_77] : memref<1x1024x128xbf16, #tpu.memory_space<vmem>>, vector<1x256x128xbf16>
    %163 = vector.shape_cast %162 : vector<1x256x128xbf16> to vector<256x128xbf16>
    %cst_78 = arith.constant dense<0.000000e+00> : vector<32x128xf32>
    %164 = tpu.matmul %161, %163, %cst_78 {dimension_numbers = #tpu.dot_dimension_numbers<[1], [0], [0], [1], [0, 0, 1, 1], [], []>} : vector<32x256xbf16>, vector<256x128xbf16>, vector<32x128xf32> -> vector<32x128xf32>
    %165 = arith.addf %151, %164 : vector<32x128xf32>
    %c0_79 = arith.constant 0 : index
    %c0_80 = arith.constant 0 : index
    %c0_81 = arith.constant 0 : index
    %166 = vector.load %arg16[%c0_79, %c0_80, %c0_81] : memref<1x1x128xf32, #tpu.memory_space<vmem>>, vector<1x1x128xf32>
    %167 = vector.shape_cast %166 : vector<1x1x128xf32> to vector<1x128xf32>
    %168 = vector.broadcast %167 : vector<1x128xf32> to vector<32x128xf32>
    %169 = arith.addf %165, %168 : vector<32x128xf32>
    %170 = arith.addf %169, %107 : vector<32x128xf32>
    %c0_82 = arith.constant 0 : index
    %c0_83 = arith.constant 0 : index
    %c0_84 = arith.constant 0 : index
    %171 = vector.load %arg11[%c0_82, %c0_83, %c0_84] : memref<1x1x128xf32, #tpu.memory_space<vmem>>, vector<1x1x128xf32>
    %172 = vector.shape_cast %171 : vector<1x1x128xf32> to vector<1x128xf32>
    %c0_85 = arith.constant 0 : index
    %c0_86 = arith.constant 0 : index
    %c0_87 = arith.constant 0 : index
    %173 = vector.load %arg12[%c0_85, %c0_86, %c0_87] : memref<1x1x128xf32, #tpu.memory_space<vmem>>, vector<1x1x128xf32>
    %174 = vector.shape_cast %173 : vector<1x1x128xf32> to vector<1x128xf32>
    %cst_88 = arith.constant dense<0.000000e+00> : vector<32xf32>
    %175 = vector.multi_reduction <add>, %170, %cst_88 [1] : vector<32x128xf32> to vector<32xf32>
    %176 = vector.shape_cast %175 : vector<32xf32> to vector<32x1xf32>
    %cst_89 = arith.constant 1.280000e+02 : f32
    %177 = vector.broadcast %cst_89 : f32 to vector<32x1xf32>
    %178 = arith.divf %176, %177 : vector<32x1xf32>
    %179 = vector.broadcast %178 : vector<32x1xf32> to vector<32x128xf32>
    %180 = arith.subf %170, %179 : vector<32x128xf32>
    %181 = arith.mulf %180, %180 : vector<32x128xf32>
    %cst_90 = arith.constant dense<0.000000e+00> : vector<32xf32>
    %182 = vector.multi_reduction <add>, %181, %cst_90 [1] : vector<32x128xf32> to vector<32xf32>
    %183 = vector.shape_cast %182 : vector<32xf32> to vector<32x1xf32>
    %cst_91 = arith.constant 1.280000e+02 : f32
    %184 = vector.broadcast %cst_91 : f32 to vector<32x1xf32>
    %185 = arith.divf %183, %184 : vector<32x1xf32>
    %cst_92 = arith.constant 9.99999974E-6 : f32
    %186 = vector.broadcast %cst_92 : f32 to vector<32x1xf32>
    %187 = arith.addf %185, %186 : vector<32x1xf32>
    %188 = math.rsqrt %187 : vector<32x1xf32>
    %189 = vector.broadcast %188 : vector<32x1xf32> to vector<32x128xf32>
    %190 = arith.mulf %180, %189 : vector<32x128xf32>
    %191 = vector.broadcast %172 : vector<1x128xf32> to vector<32x128xf32>
    %192 = arith.mulf %190, %191 : vector<32x128xf32>
    %193 = vector.broadcast %174 : vector<1x128xf32> to vector<32x128xf32>
    %194 = arith.addf %192, %193 : vector<32x128xf32>
    %c0_93 = arith.constant 0 : index
    %c0_94 = arith.constant 0 : index
    %195 = vector.load %arg22[%c0_93, %c0_94] : memref<32x128xf32, #tpu.memory_space<vmem>>, vector<32x128xf32>
    tpu.vector_store %arg22[%c0_93, %c0_94], %194 {strides = array<i32>} : memref<32x128xf32, #tpu.memory_space<vmem>>, vector<32x128xf32>,
    %c5_i32 = arith.constant 5 : i32
    %196 = arith.cmpi eq, %arg0, %c5_i32 : i32
    %197 = arith.extui %196 : i1 to i32
    %c0_i32_95 = arith.constant 0 : i32
    %198 = arith.cmpi ne, %197, %c0_i32_95 : i32
    scf.if %198 {
      %c0_96 = arith.constant 0 : index
      %c0_97 = arith.constant 0 : index
      %199 = vector.load %arg17[%c0_96, %c0_97] : memref<128x128xbf16, #tpu.memory_space<vmem>>, vector<128x128xbf16>
      %200 = arith.truncf %194 : vector<32x128xf32> to vector<32x128xbf16>
      %cst_98 = arith.constant dense<0.000000e+00> : vector<32x128xf32>
      %201 = tpu.matmul %200, %199, %cst_98 {dimension_numbers = #tpu.dot_dimension_numbers<[1], [0], [0], [1], [0, 0, 1, 1], [], []>} : vector<32x128xbf16>, vector<128x128xbf16>, vector<32x128xf32> -> vector<32x128xf32>
      %c0_99 = arith.constant 0 : index
      %c0_100 = arith.constant 0 : index
      %202 = vector.load %arg18[%c0_99, %c0_100] : memref<1x128xf32, #tpu.memory_space<vmem>>, vector<1x128xf32>
      %203 = vector.broadcast %202 : vector<1x128xf32> to vector<32x128xf32>
      %204 = arith.addf %201, %203 : vector<32x128xf32>
      %c0_101 = arith.constant 0 : index
      %c0_102 = arith.constant 0 : index
      %205 = vector.load %arg21[%c0_101, %c0_102] : memref<32x128xf32, #tpu.memory_space<vmem>>, vector<32x128xf32>
      tpu.vector_store %arg21[%c0_101, %c0_102], %204 {strides = array<i32>} : memref<32x128xf32, #tpu.memory_space<vmem>>, vector<32x128xf32>,
    } else {
    }
    return
  }
  func.func @transform_0(%arg0: i32) -> (i32, i32) {
    %c0_i32 = arith.constant 0 : i32
    %c0_i32_0 = arith.constant 0 : i32
    %c0_i32_1 = arith.constant 0 : i32
    return %c0_i32, %c0_i32_0 : i32, i32
  }
  func.func @transform_1(%arg0: i32) -> (i32, i32) {
    %c0_i32 = arith.constant 0 : i32
    %c0_i32_0 = arith.constant 0 : i32
    %c0_i32_1 = arith.constant 0 : i32
    return %c0_i32, %c0_i32_0 : i32, i32
  }
  func.func @transform_2(%arg0: i32) -> (i32, i32) {
    %c0_i32 = arith.constant 0 : i32
    %c0_i32_0 = arith.constant 0 : i32
    %c0_i32_1 = arith.constant 0 : i32
    return %c0_i32, %c0_i32_0 : i32, i32
  }
  func.func @transform_3(%arg0: i32) -> (i32, i32) {
    %c0_i32 = arith.constant 0 : i32
    %c0_i32_0 = arith.constant 0 : i32
    %c0_i32_1 = arith.constant 0 : i32
    return %c0_i32, %c0_i32_0 : i32, i32
  }
  func.func @transform_4(%arg0: i32) -> (i32, i32, i32) {
    %c0_i32 = arith.constant 0 : i32
    %c0_i32_0 = arith.constant 0 : i32
    %c0_i32_1 = arith.constant 0 : i32
    return %arg0, %c0_i32, %c0_i32_0 : i32, i32, i32
  }
  func.func @transform_5(%arg0: i32) -> (i32, i32, i32) {
    %c0_i32 = arith.constant 0 : i32
    %c0_i32_0 = arith.constant 0 : i32
    %c0_i32_1 = arith.constant 0 : i32
    return %arg0, %c0_i32, %c0_i32_0 : i32, i32, i32
  }
  func.func @transform_6(%arg0: i32) -> (i32, i32, i32) {
    %c0_i32 = arith.constant 0 : i32
    %c0_i32_0 = arith.constant 0 : i32
    %c0_i32_1 = arith.constant 0 : i32
    return %arg0, %c0_i32, %c0_i32_0 : i32, i32, i32
  }
  func.func @transform_7(%arg0: i32) -> (i32, i32, i32) {
    %c0_i32 = arith.constant 0 : i32
    %c0_i32_0 = arith.constant 0 : i32
    %c0_i32_1 = arith.constant 0 : i32
    return %arg0, %c0_i32, %c0_i32_0 : i32, i32, i32
  }
  func.func @transform_8(%arg0: i32) -> (i32, i32, i32) {
    %c0_i32 = arith.constant 0 : i32
    %c0_i32_0 = arith.constant 0 : i32
    %c0_i32_1 = arith.constant 0 : i32
    return %arg0, %c0_i32, %c0_i32_0 : i32, i32, i32
  }
  func.func @transform_9(%arg0: i32) -> (i32, i32, i32) {
    %c0_i32 = arith.constant 0 : i32
    %c0_i32_0 = arith.constant 0 : i32
    %c0_i32_1 = arith.constant 0 : i32
    return %arg0, %c0_i32, %c0_i32_0 : i32, i32, i32
  }
  func.func @transform_10(%arg0: i32) -> (i32, i32, i32) {
    %c0_i32 = arith.constant 0 : i32
    %c0_i32_0 = arith.constant 0 : i32
    %c0_i32_1 = arith.constant 0 : i32
    return %arg0, %c0_i32, %c0_i32_0 : i32, i32, i32
  }
  func.func @transform_11(%arg0: i32) -> (i32, i32, i32) {
    %c0_i32 = arith.constant 0 : i32
    %c0_i32_0 = arith.constant 0 : i32
    %c0_i32_1 = arith.constant 0 : i32
    return %arg0, %c0_i32, %c0_i32_0 : i32, i32, i32
  }
  func.func @transform_12(%arg0: i32) -> (i32, i32, i32) {
    %c0_i32 = arith.constant 0 : i32
    %c0_i32_0 = arith.constant 0 : i32
    %c0_i32_1 = arith.constant 0 : i32
    return %arg0, %c0_i32, %c0_i32_0 : i32, i32, i32
  }
  func.func @transform_13(%arg0: i32) -> (i32, i32, i32) {
    %c0_i32 = arith.constant 0 : i32
    %c0_i32_0 = arith.constant 0 : i32
    %c0_i32_1 = arith.constant 0 : i32
    return %arg0, %c0_i32, %c0_i32_0 : i32, i32, i32
  }
  func.func @transform_14(%arg0: i32) -> (i32, i32, i32) {
    %c0_i32 = arith.constant 0 : i32
    %c0_i32_0 = arith.constant 0 : i32
    %c0_i32_1 = arith.constant 0 : i32
    return %arg0, %c0_i32, %c0_i32_0 : i32, i32, i32
  }
  func.func @transform_15(%arg0: i32) -> (i32, i32, i32) {
    %c0_i32 = arith.constant 0 : i32
    %c0_i32_0 = arith.constant 0 : i32
    %c0_i32_1 = arith.constant 0 : i32
    return %arg0, %c0_i32, %c0_i32_0 : i32, i32, i32
  }
  func.func @transform_16(%arg0: i32) -> (i32, i32) {
    %c0_i32 = arith.constant 0 : i32
    %c0_i32_0 = arith.constant 0 : i32
    %c0_i32_1 = arith.constant 0 : i32
    return %c0_i32, %c0_i32_0 : i32, i32
  }
  func.func @transform_17(%arg0: i32) -> (i32, i32) {
    %c0_i32 = arith.constant 0 : i32
    %c0_i32_0 = arith.constant 0 : i32
    %c0_i32_1 = arith.constant 0 : i32
    return %c0_i32, %c0_i32_0 : i32, i32
  }
  func.func @transform_18(%arg0: i32) -> (i32, i32) {
    %c0_i32 = arith.constant 0 : i32
    %c0_i32_0 = arith.constant 0 : i32
    %c0_i32_1 = arith.constant 0 : i32
    return %c0_i32, %c0_i32_0 : i32, i32
  }
  func.func @transform_19(%arg0: i32) -> (i32, i32) {
    %c0_i32 = arith.constant 0 : i32
    %c0_i32_0 = arith.constant 0 : i32
    %c0_i32_1 = arith.constant 0 : i32
    return %c0_i32, %c0_i32_0 : i32, i32
  }
  func.func @transform_20(%arg0: i32) -> (i32, i32) {
    %c0_i32 = arith.constant 0 : i32
    %c0_i32_0 = arith.constant 0 : i32
    %c0_i32_1 = arith.constant 0 : i32
    return %c0_i32, %c0_i32_0 : i32, i32
  }
}

</mosaic_0001>

<llo_original>
// kernel: transformer_generator_forward.1
$region0: #{transformer_generator_forward.1}
  #allocation0 [shape = 'u32[]', space=smem, size = 0x4, offset = 0x4, fixed_abs, tag = 'smem constant byte address 0x4 - core index']
  #allocation1 [shape = 'u32[144,128]{1,0:T(1,128)}', space=vmem, size = 0x12000, scoped, tag = 'internal scratch']
  #allocation2 [shape = 'f32[32,128]{1,0:T(8,128)}', space=vmem, size = 0x4000, scoped, tag = 'scratch operand']
  %s0 = inlined_call_operand.vmem [shape: f32[32,128], index: 0, kind: input, shape index: {}]
  %s1 = inlined_call_operand.vmem [shape: f32[8,128], index: 1, kind: input, shape index: {}]
  %s2 = inlined_call_operand.vmem [shape: bf16[128,128], index: 2, kind: input, shape index: {}]
  %s3 = inlined_call_operand.vmem [shape: f32[1,128], index: 3, kind: input, shape index: {}]
  %s4 = inlined_call_operand.vmem [shape: bf16[6,128,384], index: 4, kind: input, shape index: {}]
  %s5 = inlined_call_operand.vmem [shape: f32[6,1,384], index: 5, kind: input, shape index: {}]
  %s6 = inlined_call_operand.vmem [shape: bf16[6,128,128], index: 6, kind: input, shape index: {}]
  %s7 = inlined_call_operand.vmem [shape: f32[6,1,128], index: 7, kind: input, shape index: {}]
  %s8 = inlined_call_operand.vmem [shape: f32[6,1,128], index: 8, kind: input, shape index: {}]
  %s9 = inlined_call_operand.vmem [shape: f32[6,1,128], index: 9, kind: input, shape index: {}]
  %s10 = inlined_call_operand.vmem [shape: f32[6,1,128], index: 10, kind: input, shape index: {}]
  %s11 = inlined_call_operand.vmem [shape: f32[6,1,128], index: 11, kind: input, shape index: {}]
  %s12 = inlined_call_operand.vmem [shape: bf16[6,128,1024], index: 12, kind: input, shape index: {}]
  %s13 = inlined_call_operand.vmem [shape: f32[6,1,1024], index: 13, kind: input, shape index: {}]
  %s14 = inlined_call_operand.vmem [shape: bf16[6,1024,128], index: 14, kind: input, shape index: {}]
  %s15 = inlined_call_operand.vmem [shape: f32[6,1,128], index: 15, kind: input, shape index: {}]
  %s16 = inlined_call_operand.vmem [shape: bf16[128,128], index: 16, kind: input, shape index: {}]
  %s17 = inlined_call_operand.vmem [shape: f32[1,128], index: 17, kind: input, shape index: {}]
  %s18 = inlined_call_operand.vmem [shape: bf16[128,8], index: 18, kind: input, shape index: {}]
  %s19 = inlined_call_operand.vmem [shape: bf16[8,128], index: 19, kind: input, shape index: {}]
  %s20 = inlined_call_operand.vmem [shape: f32[32,128], index: 20, kind: output, shape index: {}]
  %s21 = sld [smem:[#allocation0]]
  $region121: #{transformer_generator_forward.1} parent=0
    _
  %s23 = ssub.s32 1, %s21
  %s24 = scalar_select 0, %s23, %s21
  loop: start=0, step=1, limit=8
  $region2: #{transformer_generator_forward.1} parent=0 // loop_pre_header
    _
  $region3: #{transformer_generator_forward.1} parent=0 // loop_header
    %s26 = sphi 0, %s30
    %p27 = scmp.ge.s32.totalorder %s26, 8
    %s34 = sphi 0, %s34
    %s36 = sphi 0, %s34
    %s37 = sphi 0, %s36
    %s51 = sphi 0, %s37
    %s55 = sphi 0, %s55
    %s57 = sphi 0, %s55
    %s58 = sphi 0, %s57
    %s72 = sphi 0, %s58
    %s76 = sphi 0, %s76
    %s78 = sphi 0, %s76
    %s79 = sphi 0, %s78
    %s93 = sphi 0, %s79
    %s97 = sphi 0, %s97
    %s99 = sphi 0, %s97
    %s100 = sphi 0, %s99
    %s114 = sphi 0, %s100
    %s120 = sphi 0, %s122
    %s123 = sphi 0, %s120
    %s124 = sphi 0, %s123
    %s140 = sphi 0, %s124
    %s146 = sphi 0, %s148
    %s149 = sphi 0, %s146
    %s150 = sphi 0, %s149
    %s166 = sphi 0, %s150
    %s172 = sphi 0, %s174
    %s175 = sphi 0, %s172
    %s176 = sphi 0, %s175
    %s192 = sphi 0, %s176
    %s198 = sphi 0, %s200
    %s201 = sphi 0, %s198
    %s202 = sphi 0, %s201
    %s218 = sphi 0, %s202
    %s224 = sphi 0, %s226
    %s227 = sphi 0, %s224
    %s228 = sphi 0, %s227
    %s244 = sphi 0, %s228
    %s250 = sphi 0, %s252
    %s253 = sphi 0, %s250
    %s254 = sphi 0, %s253
    %s270 = sphi 0, %s254
    %s276 = sphi 0, %s278
    %s279 = sphi 0, %s276
    %s280 = sphi 0, %s279
    %s296 = sphi 0, %s280
    %s302 = sphi 0, %s304
    %s305 = sphi 0, %s302
    %s306 = sphi 0, %s305
    %s322 = sphi 0, %s306
    %s328 = sphi 0, %s330
    %s331 = sphi 0, %s328
    %s332 = sphi 0, %s331
    %s348 = sphi 0, %s332
    %s354 = sphi 0, %s356
    %s357 = sphi 0, %s354
    %s358 = sphi 0, %s357
    %s374 = sphi 0, %s358
    %s380 = sphi 0, %s382
    %s383 = sphi 0, %s380
    %s384 = sphi 0, %s383
    %s400 = sphi 0, %s384
    %s406 = sphi 0, %s408
    %s409 = sphi 0, %s406
    %s410 = sphi 0, %s409
    %s426 = sphi 0, %s410
    %s430 = sphi 0, %s430
    %s432 = sphi 0, %s430
    %s433 = sphi 0, %s432
    %s447 = sphi 0, %s433
    %s451 = sphi 0, %s451
    %s453 = sphi 0, %s451
    %s454 = sphi 0, %s453
    %s468 = sphi 0, %s454
    %s472 = sphi 0, %s472
    %s474 = sphi 0, %s472
    %s475 = sphi 0, %s474
    %s489 = sphi 0, %s475
    %s493 = sphi 0, %s493
    %s495 = sphi 0, %s493
    %s496 = sphi 0, %s495
    %s510 = sphi 0, %s496
    %s514 = sphi 0, %s514
    %s516 = sphi 0, %s514
    %s517 = sphi 0, %s516
    %s531 = sphi 0, %s517
  $region4: #{transformer_generator_forward.1} parent=0 // loop_header_branch
    %29 = sbr.rel (%p27) target = $region8
  $region5: #{transformer_generator_forward.1} parent=0 // loop_body
    %s31 = ssub.s32 %s26, 1
    %s32 = ssub.s32 %s26, 2
    %s33 = sadd.s32 %s26, 1
    %s35 = sadd.s32 %s34, 1
    %p38 = scmp.eq.s32.totalorder %s26, 5
    %p39 = scmp.ne.s32.totalorder %s34, %s36
    %p40 = scmp.eq.s32.totalorder %s26, 0
    %p41 = por %p39, %p40
    %p42 = scmp.ne.s32.totalorder %s34, %s36
    %p43 = scmp.eq.s32.totalorder %s31, 5
    %p44 = por %p42, %p43
    %p45 = scmp.ne.s32.totalorder %s36, %s37
    %p46 = scmp.eq.s32.totalorder %s31, 0
    %p47 = por %p45, %p46
    %p48 = scmp.ne.s32.totalorder %s36, %s37
    %p49 = scmp.eq.s32.totalorder %s32, 5
    %p50 = por %p48, %p49
    %p52 = scmp.ne.s32.totalorder %s37, %s51
    %p53 = scmp.eq.s32.totalorder %s32, 0
    %p54 = por %p52, %p53
    %s56 = sadd.s32 %s55, 1
    %p59 = scmp.eq.s32.totalorder %s26, 5
    %p60 = scmp.ne.s32.totalorder %s55, %s57
    %p61 = scmp.eq.s32.totalorder %s26, 0
    %p62 = por %p60, %p61
    %p63 = scmp.ne.s32.totalorder %s55, %s57
    %p64 = scmp.eq.s32.totalorder %s31, 5
    %p65 = por %p63, %p64
    %p66 = scmp.ne.s32.totalorder %s57, %s58
    %p67 = scmp.eq.s32.totalorder %s31, 0
    %p68 = por %p66, %p67
    %p69 = scmp.ne.s32.totalorder %s57, %s58
    %p70 = scmp.eq.s32.totalorder %s32, 5
    %p71 = por %p69, %p70
    %p73 = scmp.ne.s32.totalorder %s58, %s72
    %p74 = scmp.eq.s32.totalorder %s32, 0
    %p75 = por %p73, %p74
    %s77 = sadd.s32 %s76, 1
    %p80 = scmp.eq.s32.totalorder %s26, 5
    %p81 = scmp.ne.s32.totalorder %s76, %s78
    %p82 = scmp.eq.s32.totalorder %s26, 0
    %p83 = por %p81, %p82
    %p84 = scmp.ne.s32.totalorder %s76, %s78
    %p85 = scmp.eq.s32.totalorder %s31, 5
    %p86 = por %p84, %p85
    %p87 = scmp.ne.s32.totalorder %s78, %s79
    %p88 = scmp.eq.s32.totalorder %s31, 0
    %p89 = por %p87, %p88
    %p90 = scmp.ne.s32.totalorder %s78, %s79
    %p91 = scmp.eq.s32.totalorder %s32, 5
    %p92 = por %p90, %p91
    %p94 = scmp.ne.s32.totalorder %s79, %s93
    %p95 = scmp.eq.s32.totalorder %s32, 0
    %p96 = por %p94, %p95
    %s98 = sadd.s32 %s97, 1
    %p101 = scmp.eq.s32.totalorder %s26, 5
    %p102 = scmp.ne.s32.totalorder %s97, %s99
    %p103 = scmp.eq.s32.totalorder %s26, 0
    %p104 = por %p102, %p103
    %p105 = scmp.ne.s32.totalorder %s97, %s99
    %p106 = scmp.eq.s32.totalorder %s31, 5
    %p107 = por %p105, %p106
    %p108 = scmp.ne.s32.totalorder %s99, %s100
    %p109 = scmp.eq.s32.totalorder %s31, 0
    %p110 = por %p108, %p109
    %p111 = scmp.ne.s32.totalorder %s99, %s100
    %p112 = scmp.eq.s32.totalorder %s32, 5
    %p113 = por %p111, %p112
    %p115 = scmp.ne.s32.totalorder %s100, %s114
    %p116 = scmp.eq.s32.totalorder %s32, 0
    %p117 = por %p115, %p116
    %s118 = ssub.s32 %s26, %s33
    %p119 = scmp.eq.s32.totalorder %s118, 0
    %s121 = sadd.s32 %s120, 1
    %s122 = scalar_select %p119, %s120, %s121
    %p125 = pneg %p119
    %p126 = scmp.eq.s32.totalorder %s26, 5
    %p127 = por %p125, %p126
    %p128 = scmp.ne.s32.totalorder %s120, %s123
    %p129 = scmp.eq.s32.totalorder %s26, 0
    %p130 = por %p128, %p129
    %p131 = scmp.ne.s32.totalorder %s120, %s123
    %p132 = scmp.eq.s32.totalorder %s31, 5
    %p133 = por %p131, %p132
    %p134 = scmp.ne.s32.totalorder %s123, %s124
    %p135 = scmp.eq.s32.totalorder %s31, 0
    %p136 = por %p134, %p135
    %p137 = scmp.ne.s32.totalorder %s123, %s124
    %p138 = scmp.eq.s32.totalorder %s32, 5
    %p139 = por %p137, %p138
    %p141 = scmp.ne.s32.totalorder %s124, %s140
    %p142 = scmp.eq.s32.totalorder %s32, 0
    %p143 = por %p141, %p142
    %s144 = ssub.s32 %s26, %s33
    %p145 = scmp.eq.s32.totalorder %s144, 0
    %s147 = sadd.s32 %s146, 1
    %s148 = scalar_select %p145, %s146, %s147
    %p151 = pneg %p145
    %p152 = scmp.eq.s32.totalorder %s26, 5
    %p153 = por %p151, %p152
    %p154 = scmp.ne.s32.totalorder %s146, %s149
    %p155 = scmp.eq.s32.totalorder %s26, 0
    %p156 = por %p154, %p155
    %p157 = scmp.ne.s32.totalorder %s146, %s149
    %p158 = scmp.eq.s32.totalorder %s31, 5
    %p159 = por %p157, %p158
    %p160 = scmp.ne.s32.totalorder %s149, %s150
    %p161 = scmp.eq.s32.totalorder %s31, 0
    %p162 = por %p160, %p161
    %p163 = scmp.ne.s32.totalorder %s149, %s150
    %p164 = scmp.eq.s32.totalorder %s32, 5
    %p165 = por %p163, %p164
    %p167 = scmp.ne.s32.totalorder %s150, %s166
    %p168 = scmp.eq.s32.totalorder %s32, 0
    %p169 = por %p167, %p168
    %s170 = ssub.s32 %s26, %s33
    %p171 = scmp.eq.s32.totalorder %s170, 0
    %s173 = sadd.s32 %s172, 1
    %s174 = scalar_select %p171, %s172, %s173
    %p177 = pneg %p171
    %p178 = scmp.eq.s32.totalorder %s26, 5
    %p179 = por %p177, %p178
    %p180 = scmp.ne.s32.totalorder %s172, %s175
    %p181 = scmp.eq.s32.totalorder %s26, 0
    %p182 = por %p180, %p181
    %p183 = scmp.ne.s32.totalorder %s172, %s175
    %p184 = scmp.eq.s32.totalorder %s31, 5
    %p185 = por %p183, %p184
    %p186 = scmp.ne.s32.totalorder %s175, %s176
    %p187 = scmp.eq.s32.totalorder %s31, 0
    %p188 = por %p186, %p187
    %p189 = scmp.ne.s32.totalorder %s175, %s176
    %p190 = scmp.eq.s32.totalorder %s32, 5
    %p191 = por %p189, %p190
    %p193 = scmp.ne.s32.totalorder %s176, %s192
    %p194 = scmp.eq.s32.totalorder %s32, 0
    %p195 = por %p193, %p194
    %s196 = ssub.s32 %s26, %s33
    %p197 = scmp.eq.s32.totalorder %s196, 0
    %s199 = sadd.s32 %s198, 1
    %s200 = scalar_select %p197, %s198, %s199
    %p203 = pneg %p197
    %p204 = scmp.eq.s32.totalorder %s26, 5
    %p205 = por %p203, %p204
    %p206 = scmp.ne.s32.totalorder %s198, %s201
    %p207 = scmp.eq.s32.totalorder %s26, 0
    %p208 = por %p206, %p207
    %p209 = scmp.ne.s32.totalorder %s198, %s201
    %p210 = scmp.eq.s32.totalorder %s31, 5
    %p211 = por %p209, %p210
    %p212 = scmp.ne.s32.totalorder %s201, %s202
    %p213 = scmp.eq.s32.totalorder %s31, 0
    %p214 = por %p212, %p213
    %p215 = scmp.ne.s32.totalorder %s201, %s202
    %p216 = scmp.eq.s32.totalorder %s32, 5
    %p217 = por %p215, %p216
    %p219 = scmp.ne.s32.totalorder %s202, %s218
    %p220 = scmp.eq.s32.totalorder %s32, 0
    %p221 = por %p219, %p220
    %s222 = ssub.s32 %s26, %s33
    %p223 = scmp.eq.s32.totalorder %s222, 0
    %s225 = sadd.s32 %s224, 1
    %s226 = scalar_select %p223, %s224, %s225
    %p229 = pneg %p223
    %p230 = scmp.eq.s32.totalorder %s26, 5
    %p231 = por %p229, %p230
    %p232 = scmp.ne.s32.totalorder %s224, %s227
    %p233 = scmp.eq.s32.totalorder %s26, 0
    %p234 = por %p232, %p233
    %p235 = scmp.ne.s32.totalorder %s224, %s227
    %p236 = scmp.eq.s32.totalorder %s31, 5
    %p237 = por %p235, %p236
    %p238 = scmp.ne.s32.totalorder %s227, %s228
    %p239 = scmp.eq.s32.totalorder %s31, 0
    %p240 = por %p238, %p239
    %p241 = scmp.ne.s32.totalorder %s227, %s228
    %p242 = scmp.eq.s32.totalorder %s32, 5
    %p243 = por %p241, %p242
    %p245 = scmp.ne.s32.totalorder %s228, %s244
    %p246 = scmp.eq.s32.totalorder %s32, 0
    %p247 = por %p245, %p246
    %s248 = ssub.s32 %s26, %s33
    %p249 = scmp.eq.s32.totalorder %s248, 0
    %s251 = sadd.s32 %s250, 1
    %s252 = scalar_select %p249, %s250, %s251
    %p255 = pneg %p249
    %p256 = scmp.eq.s32.totalorder %s26, 5
    %p257 = por %p255, %p256
    %p258 = scmp.ne.s32.totalorder %s250, %s253
    %p259 = scmp.eq.s32.totalorder %s26, 0
    %p260 = por %p258, %p259
    %p261 = scmp.ne.s32.totalorder %s250, %s253
    %p262 = scmp.eq.s32.totalorder %s31, 5
    %p263 = por %p261, %p262
    %p264 = scmp.ne.s32.totalorder %s253, %s254
    %p265 = scmp.eq.s32.totalorder %s31, 0
    %p266 = por %p264, %p265
    %p267 = scmp.ne.s32.totalorder %s253, %s254
    %p268 = scmp.eq.s32.totalorder %s32, 5
    %p269 = por %p267, %p268
    %p271 = scmp.ne.s32.totalorder %s254, %s270
    %p272 = scmp.eq.s32.totalorder %s32, 0
    %p273 = por %p271, %p272
    %s274 = ssub.s32 %s26, %s33
    %p275 = scmp.eq.s32.totalorder %s274, 0
    %s277 = sadd.s32 %s276, 1
    %s278 = scalar_select %p275, %s276, %s277
    %p281 = pneg %p275
    %p282 = scmp.eq.s32.totalorder %s26, 5
    %p283 = por %p281, %p282
    %p284 = scmp.ne.s32.totalorder %s276, %s279
    %p285 = scmp.eq.s32.totalorder %s26, 0
    %p286 = por %p284, %p285
    %p287 = scmp.ne.s32.totalorder %s276, %s279
    %p288 = scmp.eq.s32.totalorder %s31, 5
    %p289 = por %p287, %p288
    %p290 = scmp.ne.s32.totalorder %s279, %s280
    %p291 = scmp.eq.s32.totalorder %s31, 0
    %p292 = por %p290, %p291
    %p293 = scmp.ne.s32.totalorder %s279, %s280
    %p294 = scmp.eq.s32.totalorder %s32, 5
    %p295 = por %p293, %p294
    %p297 = scmp.ne.s32.totalorder %s280, %s296
    %p298 = scmp.eq.s32.totalorder %s32, 0
    %p299 = por %p297, %p298
    %s300 = ssub.s32 %s26, %s33
    %p301 = scmp.eq.s32.totalorder %s300, 0
    %s303 = sadd.s32 %s302, 1
    %s304 = scalar_select %p301, %s302, %s303
    %p307 = pneg %p301
    %p308 = scmp.eq.s32.totalorder %s26, 5
    %p309 = por %p307, %p308
    %p310 = scmp.ne.s32.totalorder %s302, %s305
    %p311 = scmp.eq.s32.totalorder %s26, 0
    %p312 = por %p310, %p311
    %p313 = scmp.ne.s32.totalorder %s302, %s305
    %p314 = scmp.eq.s32.totalorder %s31, 5
    %p315 = por %p313, %p314
    %p316 = scmp.ne.s32.totalorder %s305, %s306
    %p317 = scmp.eq.s32.totalorder %s31, 0
    %p318 = por %p316, %p317
    %p319 = scmp.ne.s32.totalorder %s305, %s306
    %p320 = scmp.eq.s32.totalorder %s32, 5
    %p321 = por %p319, %p320
    %p323 = scmp.ne.s32.totalorder %s306, %s322
    %p324 = scmp.eq.s32.totalorder %s32, 0
    %p325 = por %p323, %p324
    %s326 = ssub.s32 %s26, %s33
    %p327 = scmp.eq.s32.totalorder %s326, 0
    %s329 = sadd.s32 %s328, 1
    %s330 = scalar_select %p327, %s328, %s329
    %p333 = pneg %p327
    %p334 = scmp.eq.s32.totalorder %s26, 5
    %p335 = por %p333, %p334
    %p336 = scmp.ne.s32.totalorder %s328, %s331
    %p337 = scmp.eq.s32.totalorder %s26, 0
    %p338 = por %p336, %p337
    %p339 = scmp.ne.s32.totalorder %s328, %s331
    %p340 = scmp.eq.s32.totalorder %s31, 5
    %p341 = por %p339, %p340
    %p342 = scmp.ne.s32.totalorder %s331, %s332
    %p343 = scmp.eq.s32.totalorder %s31, 0
    %p344 = por %p342, %p343
    %p345 = scmp.ne.s32.totalorder %s331, %s332
    %p346 = scmp.eq.s32.totalorder %s32, 5
    %p347 = por %p345, %p346
    %p349 = scmp.ne.s32.totalorder %s332, %s348
    %p350 = scmp.eq.s32.totalorder %s32, 0
    %p351 = por %p349, %p350
    %s352 = ssub.s32 %s26, %s33
    %p353 = scmp.eq.s32.totalorder %s352, 0
    %s355 = sadd.s32 %s354, 1
    %s356 = scalar_select %p353, %s354, %s355
    %p359 = pneg %p353
    %p360 = scmp.eq.s32.totalorder %s26, 5
    %p361 = por %p359, %p360
    %p362 = scmp.ne.s32.totalorder %s354, %s357
    %p363 = scmp.eq.s32.totalorder %s26, 0
    %p364 = por %p362, %p363
    %p365 = scmp.ne.s32.totalorder %s354, %s357
    %p366 = scmp.eq.s32.totalorder %s31, 5
    %p367 = por %p365, %p366
    %p368 = scmp.ne.s32.totalorder %s357, %s358
    %p369 = scmp.eq.s32.totalorder %s31, 0
    %p370 = por %p368, %p369
    %p371 = scmp.ne.s32.totalorder %s357, %s358
    %p372 = scmp.eq.s32.totalorder %s32, 5
    %p373 = por %p371, %p372
    %p375 = scmp.ne.s32.totalorder %s358, %s374
    %p376 = scmp.eq.s32.totalorder %s32, 0
    %p377 = por %p375, %p376
    %s378 = ssub.s32 %s26, %s33
    %p379 = scmp.eq.s32.totalorder %s378, 0
    %s381 = sadd.s32 %s380, 1
    %s382 = scalar_select %p379, %s380, %s381
    %p385 = pneg %p379
    %p386 = scmp.eq.s32.totalorder %s26, 5
    %p387 = por %p385, %p386
    %p388 = scmp.ne.s32.totalorder %s380, %s383
    %p389 = scmp.eq.s32.totalorder %s26, 0
    %p390 = por %p388, %p389
    %p391 = scmp.ne.s32.totalorder %s380, %s383
    %p392 = scmp.eq.s32.totalorder %s31, 5
    %p393 = por %p391, %p392
    %p394 = scmp.ne.s32.totalorder %s383, %s384
    %p395 = scmp.eq.s32.totalorder %s31, 0
    %p396 = por %p394, %p395
    %p397 = scmp.ne.s32.totalorder %s383, %s384
    %p398 = scmp.eq.s32.totalorder %s32, 5
    %p399 = por %p397, %p398
    %p401 = scmp.ne.s32.totalorder %s384, %s400
    %p402 = scmp.eq.s32.totalorder %s32, 0
    %p403 = por %p401, %p402
    %s404 = ssub.s32 %s26, %s33
    %p405 = scmp.eq.s32.totalorder %s404, 0
    %s407 = sadd.s32 %s406, 1
    %s408 = scalar_select %p405, %s406, %s407
    %p411 = pneg %p405
    %p412 = scmp.eq.s32.totalorder %s26, 5
    %p413 = por %p411, %p412
    %p414 = scmp.ne.s32.totalorder %s406, %s409
    %p415 = scmp.eq.s32.totalorder %s26, 0
    %p416 = por %p414, %p415
    %p417 = scmp.ne.s32.totalorder %s406, %s409
    %p418 = scmp.eq.s32.totalorder %s31, 5
    %p419 = por %p417, %p418
    %p420 = scmp.ne.s32.totalorder %s409, %s410
    %p421 = scmp.eq.s32.totalorder %s31, 0
    %p422 = por %p420, %p421
    %p423 = scmp.ne.s32.totalorder %s409, %s410
    %p424 = scmp.eq.s32.totalorder %s32, 5
    %p425 = por %p423, %p424
    %p427 = scmp.ne.s32.totalorder %s410, %s426
    %p428 = scmp.eq.s32.totalorder %s32, 0
    %p429 = por %p427, %p428
    %s431 = sadd.s32 %s430, 1
    %p434 = scmp.eq.s32.totalorder %s26, 5
    %p435 = scmp.ne.s32.totalorder %s430, %s432
    %p436 = scmp.eq.s32.totalorder %s26, 0
    %p437 = por %p435, %p436
    %p438 = scmp.ne.s32.totalorder %s430, %s432
    %p439 = scmp.eq.s32.totalorder %s31, 5
    %p440 = por %p438, %p439
    %p441 = scmp.ne.s32.totalorder %s432, %s433
    %p442 = scmp.eq.s32.totalorder %s31, 0
    %p443 = por %p441, %p442
    %p444 = scmp.ne.s32.totalorder %s432, %s433
    %p445 = scmp.eq.s32.totalorder %s32, 5
    %p446 = por %p444, %p445
    %p448 = scmp.ne.s32.totalorder %s433, %s447
    %p449 = scmp.eq.s32.totalorder %s32, 0
    %p450 = por %p448, %p449
    %s452 = sadd.s32 %s451, 1
    %p455 = scmp.eq.s32.totalorder %s26, 5
    %p456 = scmp.ne.s32.totalorder %s451, %s453
    %p457 = scmp.eq.s32.totalorder %s26, 0
    %p458 = por %p456, %p457
    %p459 = scmp.ne.s32.totalorder %s451, %s453
    %p460 = scmp.eq.s32.totalorder %s31, 5
    %p461 = por %p459, %p460
    %p462 = scmp.ne.s32.totalorder %s453, %s454
    %p463 = scmp.eq.s32.totalorder %s31, 0
    %p464 = por %p462, %p463
    %p465 = scmp.ne.s32.totalorder %s453, %s454
    %p466 = scmp.eq.s32.totalorder %s32, 5
    %p467 = por %p465, %p466
    %p469 = scmp.ne.s32.totalorder %s454, %s468
    %p470 = scmp.eq.s32.totalorder %s32, 0
    %p471 = por %p469, %p470
    %s473 = sadd.s32 %s472, 1
    %p476 = scmp.eq.s32.totalorder %s26, 5
    %p477 = scmp.ne.s32.totalorder %s472, %s474
    %p478 = scmp.eq.s32.totalorder %s26, 0
    %p479 = por %p477, %p478
    %p480 = scmp.ne.s32.totalorder %s472, %s474
    %p481 = scmp.eq.s32.totalorder %s31, 5
    %p482 = por %p480, %p481
    %p483 = scmp.ne.s32.totalorder %s474, %s475
    %p484 = scmp.eq.s32.totalorder %s31, 0
    %p485 = por %p483, %p484
    %p486 = scmp.ne.s32.totalorder %s474, %s475
    %p487 = scmp.eq.s32.totalorder %s32, 5
    %p488 = por %p486, %p487
    %p490 = scmp.ne.s32.totalorder %s475, %s489
    %p491 = scmp.eq.s32.totalorder %s32, 0
    %p492 = por %p490, %p491
    %s494 = sadd.s32 %s493, 1
    %p497 = scmp.eq.s32.totalorder %s26, 5
    %p498 = scmp.ne.s32.totalorder %s493, %s495
    %p499 = scmp.eq.s32.totalorder %s26, 0
    %p500 = por %p498, %p499
    %p501 = scmp.ne.s32.totalorder %s493, %s495
    %p502 = scmp.eq.s32.totalorder %s31, 5
    %p503 = por %p501, %p502
    %p504 = scmp.ne.s32.totalorder %s495, %s496
    %p505 = scmp.eq.s32.totalorder %s31, 0
    %p506 = por %p504, %p505
    %p507 = scmp.ne.s32.totalorder %s495, %s496
    %p508 = scmp.eq.s32.totalorder %s32, 5
    %p509 = por %p507, %p508
    %p511 = scmp.ne.s32.totalorder %s496, %s510
    %p512 = scmp.eq.s32.totalorder %s32, 0
    %p513 = por %p511, %p512
    %s515 = sadd.s32 %s514, 1
    %p518 = scmp.eq.s32.totalorder %s26, 5
    %p519 = scmp.ne.s32.totalorder %s514, %s516
    %p520 = scmp.eq.s32.totalorder %s26, 0
    %p521 = por %p519, %p520
    %p522 = scmp.ne.s32.totalorder %s514, %s516
    %p523 = scmp.eq.s32.totalorder %s31, 5
    %p524 = por %p522, %p523
    %p525 = scmp.ne.s32.totalorder %s516, %s517
    %p526 = scmp.eq.s32.totalorder %s31, 0
    %p527 = por %p525, %p526
    %p528 = scmp.ne.s32.totalorder %s516, %s517
    %p529 = scmp.eq.s32.totalorder %s32, 5
    %p530 = por %p528, %p529
    %p532 = scmp.ne.s32.totalorder %s517, %s531
    %p533 = scmp.eq.s32.totalorder %s32, 0
    %p534 = por %p532, %p533
    %p535 = scmp.le.s32.totalorder 1, %s26
    %p536 = scmp.lt.s32.totalorder %s26, 7
    %p537 = pnand %p535, %p536
    %p538 = pneg %p537
    // Predicated region
    $region9: #{transformer_generator_forward.1} parent=5 // pred_check
      _
    $region10: #{transformer_generator_forward.1} parent=5 // pred_check_branch
      %540 = sbr.rel (%p537) target = $region12
    $region11: #{transformer_generator_forward.1} parent=5 // pred_region
      %s541 = ssub.s32 %s26, 1
      // Predicated region
      $region13: #{transformer_generator_forward.1} parent=11 // pred_check
        %p542 = pneg %p47
      $region14: #{transformer_generator_forward.1} parent=11 // pred_check_branch
        %544 = sbr.rel (%p542) target = $region16
      $region15: #{transformer_generator_forward.1} parent=11 // pred_region
        _
      $region16: #{transformer_generator_forward.1} parent=11 // pred_fallthru
        _
      // Predicated region
      $region17: #{transformer_generator_forward.1} parent=11 // pred_check
        %p545 = pneg %p68
      $region18: #{transformer_generator_forward.1} parent=11 // pred_check_branch
        %547 = sbr.rel (%p545) target = $region20
      $region19: #{transformer_generator_forward.1} parent=11 // pred_region
        _
      $region20: #{transformer_generator_forward.1} parent=11 // pred_fallthru
        _
      // Predicated region
      $region21: #{transformer_generator_forward.1} parent=11 // pred_check
        %p548 = pneg %p89
      $region22: #{transformer_generator_forward.1} parent=11 // pred_check_branch
        %550 = sbr.rel (%p548) target = $region24
      $region23: #{transformer_generator_forward.1} parent=11 // pred_region
        _
      $region24: #{transformer_generator_forward.1} parent=11 // pred_fallthru
        _
      // Predicated region
      $region25: #{transformer_generator_forward.1} parent=11 // pred_check
        %p551 = pneg %p110
      $region26: #{transformer_generator_forward.1} parent=11 // pred_check_branch
        %553 = sbr.rel (%p551) target = $region28
      $region27: #{transformer_generator_forward.1} parent=11 // pred_region
        _
      $region28: #{transformer_generator_forward.1} parent=11 // pred_fallthru
        _
      // Predicated region
      $region29: #{transformer_generator_forward.1} parent=11 // pred_check
        %p554 = pneg %p443
      $region30: #{transformer_generator_forward.1} parent=11 // pred_check_branch
        %556 = sbr.rel (%p554) target = $region32
      $region31: #{transformer_generator_forward.1} parent=11 // pred_region
        _
      $region32: #{transformer_generator_forward.1} parent=11 // pred_fallthru
        _
      // Predicated region
      $region33: #{transformer_generator_forward.1} parent=11 // pred_check
        %p557 = pneg %p464
      $region34: #{transformer_generator_forward.1} parent=11 // pred_check_branch
        %559 = sbr.rel (%p557) target = $region36
      $region35: #{transformer_generator_forward.1} parent=11 // pred_region
        _
      $region36: #{transformer_generator_forward.1} parent=11 // pred_fallthru
        _
      // Predicated region
      $region37: #{transformer_generator_forward.1} parent=11 // pred_check
        %p560 = pneg %p485
      $region38: #{transformer_generator_forward.1} parent=11 // pred_check_branch
        %562 = sbr.rel (%p560) target = $region40
      $region39: #{transformer_generator_forward.1} parent=11 // pred_region
        _
      $region40: #{transformer_generator_forward.1} parent=11 // pred_fallthru
        _
      // Predicated region
      $region41: #{transformer_generator_forward.1} parent=11 // pred_check
        %p563 = pneg %p506
      $region42: #{transformer_generator_forward.1} parent=11 // pred_check_branch
        %565 = sbr.rel (%p563) target = $region44
      $region43: #{transformer_generator_forward.1} parent=11 // pred_region
        _
      $region44: #{transformer_generator_forward.1} parent=11 // pred_fallthru
        _
    $region12: #{transformer_generator_forward.1} parent=5 // pred_fallthru
      _
    %p566 = scmp.lt.s32.totalorder %s26, 6
    // Predicated region
    $region45: #{transformer_generator_forward.1} parent=5 // pred_check
      %p567 = pneg %p566
    $region46: #{transformer_generator_forward.1} parent=5 // pred_check_branch
      %569 = sbr.rel (%p567) target = $region48
    $region47: #{transformer_generator_forward.1} parent=5 // pred_region
      // Predicated region
      $region49: #{transformer_generator_forward.1} parent=47 // pred_check
        %p570 = pneg %p130
      $region50: #{transformer_generator_forward.1} parent=47 // pred_check_branch
        %572 = sbr.rel (%p570) target = $region52
      $region51: #{transformer_generator_forward.1} parent=47 // pred_region
        %p573 = scmp.lt.s32.totalorder %s26, 5
        %s574 = scalar_select %p573, %s26, 5
        %s575 = smul.addr %s574, 48
        %s576 = smul.addr %s575, 4
        %s577 = scalar_lea.vmem %s4, %s576
      $region52: #{transformer_generator_forward.1} parent=47 // pred_fallthru
        _
      // Predicated region
      $region53: #{transformer_generator_forward.1} parent=47 // pred_check
        %p578 = pneg %p156
      $region54: #{transformer_generator_forward.1} parent=47 // pred_check_branch
        %580 = sbr.rel (%p578) target = $region56
      $region55: #{transformer_generator_forward.1} parent=47 // pred_region
        %p581 = scmp.lt.s32.totalorder %s26, 5
        %s582 = scalar_select %p581, %s26, 5
        %s583 = smul.addr %s582, 3
        %s584 = scalar_lea.vmem %s5, %s583
      $region56: #{transformer_generator_forward.1} parent=47 // pred_fallthru
        _
      // Predicated region
      $region57: #{transformer_generator_forward.1} parent=47 // pred_check
        %p585 = pneg %p182
      $region58: #{transformer_generator_forward.1} parent=47 // pred_check_branch
        %587 = sbr.rel (%p585) target = $region60
      $region59: #{transformer_generator_forward.1} parent=47 // pred_region
        %p588 = scmp.lt.s32.totalorder %s26, 5
        %s589 = scalar_select %p588, %s26, 5
        %s590 = smul.addr %s589, 16
        %s591 = smul.addr %s590, 4
        %s592 = scalar_lea.vmem %s6, %s591
      $region60: #{transformer_generator_forward.1} parent=47 // pred_fallthru
        _
      // Predicated region
      $region61: #{transformer_generator_forward.1} parent=47 // pred_check
        %p593 = pneg %p208
      $region62: #{transformer_generator_forward.1} parent=47 // pred_check_branch
        %595 = sbr.rel (%p593) target = $region64
      $region63: #{transformer_generator_forward.1} parent=47 // pred_region
        %p596 = scmp.lt.s32.totalorder %s26, 5
        %s597 = scalar_select %p596, %s26, 5
        %s598 = scalar_lea.vmem %s7, %s597
      $region64: #{transformer_generator_forward.1} parent=47 // pred_fallthru
        _
      // Predicated region
      $region65: #{transformer_generator_forward.1} parent=47 // pred_check
        %p599 = pneg %p234
      $region66: #{transformer_generator_forward.1} parent=47 // pred_check_branch
        %601 = sbr.rel (%p599) target = $region68
      $region67: #{transformer_generator_forward.1} parent=47 // pred_region
        %p602 = scmp.lt.s32.totalorder %s26, 5
        %s603 = scalar_select %p602, %s26, 5
        %s604 = scalar_lea.vmem %s8, %s603
      $region68: #{transformer_generator_forward.1} parent=47 // pred_fallthru
        _
      // Predicated region
      $region69: #{transformer_generator_forward.1} parent=47 // pred_check
        %p605 = pneg %p260
      $region70: #{transformer_generator_forward.1} parent=47 // pred_check_branch
        %607 = sbr.rel (%p605) target = $region72
      $region71: #{transformer_generator_forward.1} parent=47 // pred_region
        %p608 = scmp.lt.s32.totalorder %s26, 5
        %s609 = scalar_select %p608, %s26, 5
        %s610 = scalar_lea.vmem %s9, %s609
      $region72: #{transformer_generator_forward.1} parent=47 // pred_fallthru
        _
      // Predicated region
      $region73: #{transformer_generator_forward.1} parent=47 // pred_check
        %p611 = pneg %p286
      $region74: #{transformer_generator_forward.1} parent=47 // pred_check_branch
        %613 = sbr.rel (%p611) target = $region76
      $region75: #{transformer_generator_forward.1} parent=47 // pred_region
        %p614 = scmp.lt.s32.totalorder %s26, 5
        %s615 = scalar_select %p614, %s26, 5
        %s616 = scalar_lea.vmem %s10, %s615
      $region76: #{transformer_generator_forward.1} parent=47 // pred_fallthru
        _
      // Predicated region
      $region77: #{transformer_generator_forward.1} parent=47 // pred_check
        %p617 = pneg %p312
      $region78: #{transformer_generator_forward.1} parent=47 // pred_check_branch
        %619 = sbr.rel (%p617) target = $region80
      $region79: #{transformer_generator_forward.1} parent=47 // pred_region
        %p620 = scmp.lt.s32.totalorder %s26, 5
        %s621 = scalar_select %p620, %s26, 5
        %s622 = scalar_lea.vmem %s11, %s621
      $region80: #{transformer_generator_forward.1} parent=47 // pred_fallthru
        _
      // Predicated region
      $region81: #{transformer_generator_forward.1} parent=47 // pred_check
        %p623 = pneg %p338
      $region82: #{transformer_generator_forward.1} parent=47 // pred_check_branch
        %625 = sbr.rel (%p623) target = $region84
      $region83: #{transformer_generator_forward.1} parent=47 // pred_region
        %p626 = scmp.lt.s32.totalorder %s26, 5
        %s627 = scalar_select %p626, %s26, 5
        %s628 = smul.addr %s627, 128
        %s629 = smul.addr %s628, 4
        %s630 = scalar_lea.vmem %s12, %s629
      $region84: #{transformer_generator_forward.1} parent=47 // pred_fallthru
        _
      // Predicated region
      $region85: #{transformer_generator_forward.1} parent=47 // pred_check
        %p631 = pneg %p364
      $region86: #{transformer_generator_forward.1} parent=47 // pred_check_branch
        %633 = sbr.rel (%p631) target = $region88
      $region87: #{transformer_generator_forward.1} parent=47 // pred_region
        %p634 = scmp.lt.s32.totalorder %s26, 5
        %s635 = scalar_select %p634, %s26, 5
        %s636 = smul.addr %s635, 8
        %s637 = scalar_lea.vmem %s13, %s636
      $region88: #{transformer_generator_forward.1} parent=47 // pred_fallthru
        _
      // Predicated region
      $region89: #{transformer_generator_forward.1} parent=47 // pred_check
        %p638 = pneg %p390
      $region90: #{transformer_generator_forward.1} parent=47 // pred_check_branch
        %640 = sbr.rel (%p638) target = $region92
      $region91: #{transformer_generator_forward.1} parent=47 // pred_region
        %p641 = scmp.lt.s32.totalorder %s26, 5
        %s642 = scalar_select %p641, %s26, 5
        %s643 = smul.addr %s642, 128
        %s644 = smul.addr %s643, 4
        %s645 = scalar_lea.vmem %s14, %s644
      $region92: #{transformer_generator_forward.1} parent=47 // pred_fallthru
        _
      // Predicated region
      $region93: #{transformer_generator_forward.1} parent=47 // pred_check
        %p646 = pneg %p416
      $region94: #{transformer_generator_forward.1} parent=47 // pred_check_branch
        %648 = sbr.rel (%p646) target = $region96
      $region95: #{transformer_generator_forward.1} parent=47 // pred_region
        %p649 = scmp.lt.s32.totalorder %s26, 5
        %s650 = scalar_select %p649, %s26, 5
        %s651 = scalar_lea.vmem %s15, %s650
      $region96: #{transformer_generator_forward.1} parent=47 // pred_fallthru
        _
    $region48: #{transformer_generator_forward.1} parent=5 // pred_fallthru
      _
    %p652 = scmp.le.s32.totalorder 1, %s26
    %p653 = scmp.lt.s32.totalorder %s26, 7
    %p654 = pnand %p652, %p653
    %p655 = pneg %p654
    // Predicated region
    $region97: #{transformer_generator_forward.1} parent=5 // pred_check
      _
    $region98: #{transformer_generator_forward.1} parent=5 // pred_check_branch
      %657 = sbr.rel (%p654) target = $region100
    $region99: #{transformer_generator_forward.1} parent=5 // pred_region
      %s658 = ssub.s32 %s26, 1
      %p659 = pneg %p47
      %p660 = pneg %p44
      %p661 = pneg %p68
      %p662 = pneg %p65
      %p663 = pneg %p89
      %p664 = pneg %p86
      %p665 = pneg %p110
      %p666 = pneg %p107
      %p667 = scmp.lt.s32.totalorder %s31, 5
      %s668 = scalar_select %p667, %s31, 5
      %s669 = smul.addr %s668, 48
      %s670 = smul.addr %s669, 4
      %s671 = scalar_lea.vmem %s4, %s670
      %p672 = pneg %p136
      %p673 = pneg %p133
      %p674 = scmp.lt.s32.totalorder %s31, 5
      %s675 = scalar_select %p674, %s31, 5
      %s676 = smul.addr %s675, 3
      %s677 = scalar_lea.vmem %s5, %s676
      %p678 = pneg %p162
      %p679 = pneg %p159
      %p680 = scmp.lt.s32.totalorder %s31, 5
      %s681 = scalar_select %p680, %s31, 5
      %s682 = smul.addr %s681, 16
      %s683 = smul.addr %s682, 4
      %s684 = scalar_lea.vmem %s6, %s683
      %p685 = pneg %p188
      %p686 = pneg %p185
      %p687 = scmp.lt.s32.totalorder %s31, 5
      %s688 = scalar_select %p687, %s31, 5
      %s689 = scalar_lea.vmem %s7, %s688
      %p690 = pneg %p214
      %p691 = pneg %p211
      %p692 = scmp.lt.s32.totalorder %s31, 5
      %s693 = scalar_select %p692, %s31, 5
      %s694 = scalar_lea.vmem %s8, %s693
      %p695 = pneg %p240
      %p696 = pneg %p237
      %p697 = scmp.lt.s32.totalorder %s31, 5
      %s698 = scalar_select %p697, %s31, 5
      %s699 = scalar_lea.vmem %s9, %s698
      %p700 = pneg %p266
      %p701 = pneg %p263
      %p702 = scmp.lt.s32.totalorder %s31, 5
      %s703 = scalar_select %p702, %s31, 5
      %s704 = scalar_lea.vmem %s10, %s703
      %p705 = pneg %p292
      %p706 = pneg %p289
      %p707 = scmp.lt.s32.totalorder %s31, 5
      %s708 = scalar_select %p707, %s31, 5
      %s709 = scalar_lea.vmem %s11, %s708
      %p710 = pneg %p318
      %p711 = pneg %p315
      %p712 = scmp.lt.s32.totalorder %s31, 5
      %s713 = scalar_select %p712, %s31, 5
      %s714 = smul.addr %s713, 128
      %s715 = smul.addr %s714, 4
      %s716 = scalar_lea.vmem %s12, %s715
      %p717 = pneg %p344
      %p718 = pneg %p341
      %p719 = scmp.lt.s32.totalorder %s31, 5
      %s720 = scalar_select %p719, %s31, 5
      %s721 = smul.addr %s720, 8
      %s722 = scalar_lea.vmem %s13, %s721
      %p723 = pneg %p370
      %p724 = pneg %p367
      %p725 = scmp.lt.s32.totalorder %s31, 5
      %s726 = scalar_select %p725, %s31, 5
      %s727 = smul.addr %s726, 128
      %s728 = smul.addr %s727, 4
      %s729 = scalar_lea.vmem %s14, %s728
      %p730 = pneg %p396
      %p731 = pneg %p393
      %p732 = scmp.lt.s32.totalorder %s31, 5
      %s733 = scalar_select %p732, %s31, 5
      %s734 = scalar_lea.vmem %s15, %s733
      %p735 = pneg %p422
      %p736 = pneg %p419
      %p737 = pneg %p443
      %p738 = pneg %p440
      %p739 = pneg %p464
      %p740 = pneg %p461
      %p741 = pneg %p485
      %p742 = pneg %p482
      %p743 = pneg %p506
      %p744 = pneg %p503
      %p745 = pneg %p527
      %p746 = pneg %p524
      %p747 = scmp.lt.s32.totalorder %s31, 5
      %s748 = scalar_select %p747, %s31, 5
      %s749 = smul.addr %s748, 48
      %s750 = smul.addr %s749, 4
      %s751 = scalar_lea.vmem %s4, %s750
      %p752 = scmp.lt.s32.totalorder %s31, 5
      %s753 = scalar_select %p752, %s31, 5
      %s754 = smul.addr %s753, 3
      %s755 = scalar_lea.vmem %s5, %s754
      %p756 = scmp.lt.s32.totalorder %s31, 5
      %s757 = scalar_select %p756, %s31, 5
      %s758 = smul.addr %s757, 16
      %s759 = smul.addr %s758, 4
      %s760 = scalar_lea.vmem %s6, %s759
      %p761 = scmp.lt.s32.totalorder %s31, 5
      %s762 = scalar_select %p761, %s31, 5
      %s763 = scalar_lea.vmem %s7, %s762
      %p764 = scmp.lt.s32.totalorder %s31, 5
      %s765 = scalar_select %p764, %s31, 5
      %s766 = scalar_lea.vmem %s8, %s765
      %p767 = scmp.lt.s32.totalorder %s31, 5
      %s768 = scalar_select %p767, %s31, 5
      %s769 = scalar_lea.vmem %s9, %s768
      %p770 = scmp.lt.s32.totalorder %s31, 5
      %s771 = scalar_select %p770, %s31, 5
      %s772 = scalar_lea.vmem %s10, %s771
      %p773 = scmp.lt.s32.totalorder %s31, 5
      %s774 = scalar_select %p773, %s31, 5
      %s775 = scalar_lea.vmem %s11, %s774
      %p776 = scmp.lt.s32.totalorder %s31, 5
      %s777 = scalar_select %p776, %s31, 5
      %s778 = smul.addr %s777, 128
      %s779 = smul.addr %s778, 4
      %s780 = scalar_lea.vmem %s12, %s779
      %p781 = scmp.lt.s32.totalorder %s31, 5
      %s782 = scalar_select %p781, %s31, 5
      %s783 = smul.addr %s782, 8
      %s784 = scalar_lea.vmem %s13, %s783
      %p785 = scmp.lt.s32.totalorder %s31, 5
      %s786 = scalar_select %p785, %s31, 5
      %s787 = smul.addr %s786, 128
      %s788 = smul.addr %s787, 4
      %s789 = scalar_lea.vmem %s14, %s788
      %p790 = scmp.lt.s32.totalorder %s31, 5
      %s791 = scalar_select %p790, %s31, 5
      %s792 = scalar_lea.vmem %s15, %s791
      %p794 = scmp.eq.s32.totalorder %s31, 0
      // Predicated region
      $region101: #{transformer_generator_forward.1} parent=99 // pred_check
        %p795 = pneg %p794
      $region102: #{transformer_generator_forward.1} parent=99 // pred_check_branch
        %797 = sbr.rel (%p795) target = $region104
      $region103: #{transformer_generator_forward.1} parent=99 // pred_region
        %v798 = vld [vmem:[%s0] sm:$0xff]
        %v799 = vld [vmem:[%s0 + $0x8] sm:$0xff]
        %v800 = vld [vmem:[%s0 + $0x10] sm:$0xff]
        %v801 = vld [vmem:[%s0 + $0x18] sm:$0xff]
        %v802 = vld [vmem:[%s2] sm:$0xf]
        %v803 = vld [vmem:[%s2 + $0x4] sm:$0xf]
        %v804 = vld [vmem:[%s2 + $0x8] sm:$0xf]
        %v805 = vld [vmem:[%s2 + $0xc] sm:$0xf]
        %v806 = vld [vmem:[%s2 + $0x10] sm:$0xf]
        %v807 = vld [vmem:[%s2 + $0x14] sm:$0xf]
        %v808 = vld [vmem:[%s2 + $0x18] sm:$0xf]
        %v809 = vld [vmem:[%s2 + $0x1c] sm:$0xf]
        %v810 = vld [vmem:[%s2 + $0x20] sm:$0xf]
        %v811 = vld [vmem:[%s2 + $0x24] sm:$0xf]
        %v812 = vld [vmem:[%s2 + $0x28] sm:$0xf]
        %v813 = vld [vmem:[%s2 + $0x2c] sm:$0xf]
        %v814 = vld [vmem:[%s2 + $0x30] sm:$0xf]
        %v815 = vld [vmem:[%s2 + $0x34] sm:$0xf]
        %v816 = vld [vmem:[%s2 + $0x38] sm:$0xf]
        %v817 = vld [vmem:[%s2 + $0x3c] sm:$0xf]
        %v818 = vpack.c.bf16 %v799, %v798
        %v819 = vpack.c.bf16 %v801, %v800
        %v820 = vld [vmem:[%s3] sm:$0x1]
        %v822 = vlaneseq
        %v823 = vshrl.u32 %v822, 7
        %v824 = vsub.s32 0, %v823
        %v825 = vrot.slane %v820, %v824
        %v843 = vunpack.c.l.b16 %v802
        %v844 = vunpack.c.l.b16 %v803
        %v845 = vunpack.c.l.b16 %v804
        %v846 = vunpack.c.l.b16 %v805
        %v847 = vunpack.c.l.b16 %v806
        %v848 = vunpack.c.l.b16 %v807
        %v849 = vunpack.c.l.b16 %v808
        %v850 = vunpack.c.l.b16 %v809
        %v851 = vunpack.c.l.b16 %v810
        %v852 = vunpack.c.l.b16 %v811
        %v853 = vunpack.c.l.b16 %v812
        %v854 = vunpack.c.l.b16 %v813
        %v855 = vunpack.c.l.b16 %v814
        %v856 = vunpack.c.l.b16 %v815
        %v857 = vunpack.c.l.b16 %v816
        %v858 = vunpack.c.l.b16 %v817
        %v859 = vpack.c.b16 %v844, %v843
        %v860 = vpack.c.b16 %v846, %v845
        %v861 = vpack.c.b16 %v848, %v847
        %v862 = vpack.c.b16 %v850, %v849
        %v863 = vpack.c.b16 %v852, %v851
        %v864 = vpack.c.b16 %v854, %v853
        %v865 = vpack.c.b16 %v856, %v855
        %v866 = vpack.c.b16 %v858, %v857
        %875 = vmatprep.subr.bf16.mxu0 0
        %876 = vmatpush1.bf16.msra.mxu0 %v859
        %877 = vmatprep.subr.bf16.mxu0 0
        %878 = vmatpush1.bf16.msra.mxu0 %v860
        %879 = vmatprep.subr.bf16.mxu0 0
        %880 = vmatpush1.bf16.msra.mxu0 %v861
        %881 = vmatprep.subr.bf16.mxu0 0
        %882 = vmatpush1.bf16.msra.mxu0 %v862
        %883 = vmatprep.subr.bf16.mxu0 0
        %884 = vmatpush1.bf16.msra.mxu0 %v863
        %885 = vmatprep.subr.bf16.mxu0 0
        %886 = vmatpush1.bf16.msra.mxu0 %v864
        %887 = vmatprep.subr.bf16.mxu0 0
        %888 = vmatpush1.bf16.msra.mxu0 %v865
        %889 = vmatprep.subr.bf16.mxu0 0
        %890 = vmatpush1.bf16.msra.mxu0 %v866
        %891 = vmatprep.subr.bf16.mxu0 0
        %892 = vmatpush1.bf16.msra.mxu0 0
        %893 = vmatprep.subr.bf16.mxu0 0
        %894 = vmatpush1.bf16.msra.mxu0 0
        %895 = vmatprep.subr.bf16.mxu0 0
        %896 = vmatpush1.bf16.msra.mxu0 0
        %897 = vmatprep.subr.bf16.mxu0 0
        %898 = vmatpush1.bf16.msra.mxu0 0
        %899 = vmatprep.subr.bf16.mxu0 0
        %900 = vmatpush1.bf16.msra.mxu0 0
        %901 = vmatprep.subr.bf16.mxu0 0
        %902 = vmatpush1.bf16.msra.mxu0 0
        %903 = vmatprep.subr.bf16.mxu0 0
        %904 = vmatpush1.bf16.msra.mxu0 0
        %905 = vmatprep.subr.bf16.mxu0 0
        %906 = vmatpush1.bf16.msra.mxu0 0
        %907 = vmatprep.mubr.bf16.mxu0 0
        %908 = vmatmul.mubr.bf16.gmra.mrb[0].mxu0 %v818
        %v909 = vpop.f32.mrb[0].mxu0
        %v910 = vadd.f32 %v825, %v909
        %v911 = vpop.f32.mrb[0].mxu0
        %v912 = vpop.f32.mrb[0].mxu0
        %v913 = vadd.f32 %v825, %v912
        %v914 = vpop.f32.mrb[0].mxu0
        %915 = vmatprep.mubr.bf16.mxu0 0
        %916 = vmatmul.mubr.bf16.gmra.mrb[0].mxu0 %v819
        %v917 = vpop.f32.mrb[0].mxu0
        %v918 = vadd.f32 %v825, %v917
        %v919 = vpop.f32.mrb[0].mxu0
        %v920 = vpop.f32.mrb[0].mxu0
        %v921 = vadd.f32 %v825, %v920
        %v922 = vpop.f32.mrb[0].mxu0
        %923 = vdwg.mxu0
        %v924 = vld [vmem:[%s1] sm:$0xff]
        %v925 = vadd.f32 %v910, %v924
        %v926 = vadd.f32 %v913, %v924
        %v927 = vadd.f32 %v918, %v924
        %v928 = vadd.f32 %v921, %v924
        %929 = vst [vmem:[#allocation2] sm:$0xff] %v925
        %930 = vst [vmem:[#allocation2 + $0x8] sm:$0xff] %v926
        %931 = vst [vmem:[#allocation2 + $0x10] sm:$0xff] %v927
        %932 = vst [vmem:[#allocation2 + $0x18] sm:$0xff] %v928
      $region104: #{transformer_generator_forward.1} parent=99 // pred_fallthru
        _
      %v933 = vld [vmem:[#allocation2] sm:$0xff]
      %v934 = vld [vmem:[#allocation2 + $0x8] sm:$0xff]
      %v935 = vld [vmem:[#allocation2 + $0x10] sm:$0xff]
      %v936 = vld [vmem:[#allocation2 + $0x18] sm:$0xff]
      %v937 = vld [vmem:[%s751] sm:$0xff]
      %v938 = vld [vmem:[%s751 + $0x8] sm:$0xf]
      %v939 = vld [vmem:[%s751 + $0xc] sm:$0xff]
      %v940 = vld [vmem:[%s751 + $0x14] sm:$0xf]
      %v941 = vld [vmem:[%s751 + $0x18] sm:$0xff]
      %v942 = vld [vmem:[%s751 + $0x20] sm:$0xf]
      %v943 = vld [vmem:[%s751 + $0x24] sm:$0xff]
      %v944 = vld [vmem:[%s751 + $0x2c] sm:$0xf]
      %v945 = vld [vmem:[%s751 + $0x30] sm:$0xff]
      %v946 = vld [vmem:[%s751 + $0x38] sm:$0xf]
      %v947 = vld [vmem:[%s751 + $0x3c] sm:$0xff]
      %v948 = vld [vmem:[%s751 + $0x44] sm:$0xf]
      %v949 = vld [vmem:[%s751 + $0x48] sm:$0xff]
      %v950 = vld [vmem:[%s751 + $0x50] sm:$0xf]
      %v951 = vld [vmem:[%s751 + $0x54] sm:$0xff]
      %v952 = vld [vmem:[%s751 + $0x5c] sm:$0xf]
      %v953 = vld [vmem:[%s751 + $0x60] sm:$0xff]
      %v954 = vld [vmem:[%s751 + $0x68] sm:$0xf]
      %v955 = vld [vmem:[%s751 + $0x6c] sm:$0xff]
      %v956 = vld [vmem:[%s751 + $0x74] sm:$0xf]
      %v957 = vld [vmem:[%s751 + $0x78] sm:$0xff]
      %v958 = vld [vmem:[%s751 + $0x80] sm:$0xf]
      %v959 = vld [vmem:[%s751 + $0x84] sm:$0xff]
      %v960 = vld [vmem:[%s751 + $0x8c] sm:$0xf]
      %v961 = vld [vmem:[%s751 + $0x90] sm:$0xff]
      %v962 = vld [vmem:[%s751 + $0x98] sm:$0xf]
      %v963 = vld [vmem:[%s751 + $0x9c] sm:$0xff]
      %v964 = vld [vmem:[%s751 + $0xa4] sm:$0xf]
      %v965 = vld [vmem:[%s751 + $0xa8] sm:$0xff]
      %v966 = vld [vmem:[%s751 + $0xb0] sm:$0xf]
      %v967 = vld [vmem:[%s751 + $0xb4] sm:$0xff]
      %v968 = vld [vmem:[%s751 + $0xbc] sm:$0xf]
      %v969 = vpack.c.bf16 %v934, %v933
      %v970 = vpack.c.bf16 %v936, %v935
      %v971 = vld [vmem:[%s755] sm:$0x7]
      %v973 = vlaneseq
      %v974 = vshrl.u32 %v973, 7
      %v975 = vsub.s32 0, %v974
      %v976 = vrot.slane %v971, %v975
      %v977 = vlaneseq
      %v978 = vshrl.u32 %v977, 7
      %v979 = vsub.s32 1, %v978
      %v980 = vrot.slane %v971, %v979
      %v981 = vlaneseq
      %v982 = vshrl.u32 %v981, 7
      %v983 = vsub.s32 2, %v982
      %v984 = vrot.slane %v971, %v983
      %v1020 = vunpack.c.l.b16 %v937
      %v1021 = vunpack.c.h.b16 %v937
      %v1022 = vunpack.c.l.b16 %v938
      %v1023 = vunpack.c.l.b16 %v939
      %v1024 = vunpack.c.h.b16 %v939
      %v1025 = vunpack.c.l.b16 %v940
      %v1026 = vunpack.c.l.b16 %v941
      %v1027 = vunpack.c.h.b16 %v941
      %v1028 = vunpack.c.l.b16 %v942
      %v1029 = vunpack.c.l.b16 %v943
      %v1030 = vunpack.c.h.b16 %v943
      %v1031 = vunpack.c.l.b16 %v944
      %v1032 = vunpack.c.l.b16 %v945
      %v1033 = vunpack.c.h.b16 %v945
      %v1034 = vunpack.c.l.b16 %v946
      %v1035 = vunpack.c.l.b16 %v947
      %v1036 = vunpack.c.h.b16 %v947
      %v1037 = vunpack.c.l.b16 %v948
      %v1038 = vunpack.c.l.b16 %v949
      %v1039 = vunpack.c.h.b16 %v949
      %v1040 = vunpack.c.l.b16 %v950
      %v1041 = vunpack.c.l.b16 %v951
      %v1042 = vunpack.c.h.b16 %v951
      %v1043 = vunpack.c.l.b16 %v952
      %v1044 = vunpack.c.l.b16 %v953
      %v1045 = vunpack.c.h.b16 %v953
      %v1046 = vunpack.c.l.b16 %v954
      %v1047 = vunpack.c.l.b16 %v955
      %v1048 = vunpack.c.h.b16 %v955
      %v1049 = vunpack.c.l.b16 %v956
      %v1050 = vunpack.c.l.b16 %v957
      %v1051 = vunpack.c.h.b16 %v957
      %v1052 = vunpack.c.l.b16 %v958
      %v1053 = vunpack.c.l.b16 %v959
      %v1054 = vunpack.c.h.b16 %v959
      %v1055 = vunpack.c.l.b16 %v960
      %v1056 = vunpack.c.l.b16 %v961
      %v1057 = vunpack.c.h.b16 %v961
      %v1058 = vunpack.c.l.b16 %v962
      %v1059 = vunpack.c.l.b16 %v963
      %v1060 = vunpack.c.h.b16 %v963
      %v1061 = vunpack.c.l.b16 %v964
      %v1062 = vunpack.c.l.b16 %v965
      %v1063 = vunpack.c.h.b16 %v965
      %v1064 = vunpack.c.l.b16 %v966
      %v1065 = vunpack.c.l.b16 %v967
      %v1066 = vunpack.c.h.b16 %v967
      %v1067 = vunpack.c.l.b16 %v968
      %v1068 = vpack.c.b16 %v1023, %v1020
      %v1069 = vpack.c.b16 %v1024, %v1021
      %v1070 = vpack.c.b16 %v1025, %v1022
      %v1071 = vpack.c.b16 %v1029, %v1026
      %v1072 = vpack.c.b16 %v1030, %v1027
      %v1073 = vpack.c.b16 %v1031, %v1028
      %v1074 = vpack.c.b16 %v1035, %v1032
      %v1075 = vpack.c.b16 %v1036, %v1033
      %v1076 = vpack.c.b16 %v1037, %v1034
      %v1077 = vpack.c.b16 %v1041, %v1038
      %v1078 = vpack.c.b16 %v1042, %v1039
      %v1079 = vpack.c.b16 %v1043, %v1040
      %v1080 = vpack.c.b16 %v1047, %v1044
      %v1081 = vpack.c.b16 %v1048, %v1045
      %v1082 = vpack.c.b16 %v1049, %v1046
      %v1083 = vpack.c.b16 %v1053, %v1050
      %v1084 = vpack.c.b16 %v1054, %v1051
      %v1085 = vpack.c.b16 %v1055, %v1052
      %v1086 = vpack.c.b16 %v1059, %v1056
      %v1087 = vpack.c.b16 %v1060, %v1057
      %v1088 = vpack.c.b16 %v1061, %v1058
      %v1089 = vpack.c.b16 %v1065, %v1062
      %v1090 = vpack.c.b16 %v1066, %v1063
      %v1091 = vpack.c.b16 %v1067, %v1064
      %1116 = vmatprep.subr.bf16.mxu0 %v1069
      %1117 = vmatpush1.bf16.msra.mxu0 %v1068
      %1118 = vmatprep.subr.bf16.mxu0 %v1072
      %1119 = vmatpush1.bf16.msra.mxu0 %v1071
      %1120 = vmatprep.subr.bf16.mxu0 %v1075
      %1121 = vmatpush1.bf16.msra.mxu0 %v1074
      %1122 = vmatprep.subr.bf16.mxu0 %v1078
      %1123 = vmatpush1.bf16.msra.mxu0 %v1077
      %1124 = vmatprep.subr.bf16.mxu0 %v1081
      %1125 = vmatpush1.bf16.msra.mxu0 %v1080
      %1126 = vmatprep.subr.bf16.mxu0 %v1084
      %1127 = vmatpush1.bf16.msra.mxu0 %v1083
      %1128 = vmatprep.subr.bf16.mxu0 %v1087
      %1129 = vmatpush1.bf16.msra.mxu0 %v1086
      %1130 = vmatprep.subr.bf16.mxu0 %v1090
      %1131 = vmatpush1.bf16.msra.mxu0 %v1089
      %1132 = vmatprep.subr.bf16.mxu0 0
      %1133 = vmatpush1.bf16.msra.mxu0 0
      %1134 = vmatprep.subr.bf16.mxu0 0
      %1135 = vmatpush1.bf16.msra.mxu0 0
      %1136 = vmatprep.subr.bf16.mxu0 0
      %1137 = vmatpush1.bf16.msra.mxu0 0
      %1138 = vmatprep.subr.bf16.mxu0 0
      %1139 = vmatpush1.bf16.msra.mxu0 0
      %1140 = vmatprep.subr.bf16.mxu0 0
      %1141 = vmatpush1.bf16.msra.mxu0 0
      %1142 = vmatprep.subr.bf16.mxu0 0
      %1143 = vmatpush1.bf16.msra.mxu0 0
      %1144 = vmatprep.subr.bf16.mxu0 0
      %1145 = vmatpush1.bf16.msra.mxu0 0
      %1146 = vmatprep.subr.bf16.mxu0 0
      %1147 = vmatpush1.bf16.msra.mxu0 0
      %1148 = vmatprep.mubr.bf16.mxu0 0
      %1149 = vmatmul.mubr.bf16.gmra.mrb[0].mxu0 %v969
      %v1150 = vpop.f32.mrb[0].mxu0
      %v1151 = vadd.f32 %v976, %v1150
      %v1152 = vpop.f32.mrb[0].mxu0
      %v1153 = vadd.f32 %v980, %v1152
      %v1154 = vpop.f32.mrb[0].mxu0
      %v1155 = vadd.f32 %v976, %v1154
      %v1156 = vpop.f32.mrb[0].mxu0
      %v1157 = vadd.f32 %v980, %v1156
      %1158 = vmatprep.mubr.bf16.mxu0 0
      %1159 = vmatmul.mubr.bf16.gmra.mrb[0].mxu0 %v970
      %v1160 = vpop.f32.mrb[0].mxu0
      %v1161 = vadd.f32 %v976, %v1160
      %v1162 = vpop.f32.mrb[0].mxu0
      %v1163 = vadd.f32 %v980, %v1162
      %v1164 = vpop.f32.mrb[0].mxu0
      %v1165 = vadd.f32 %v976, %v1164
      %v1166 = vpop.f32.mrb[0].mxu0
      %v1167 = vadd.f32 %v980, %v1166
      %1168 = vdwg.mxu0
      %1169 = vmatprep.subr.bf16.mxu0 0
      %1170 = vmatpush1.bf16.msra.mxu0 %v1070
      %1171 = vmatprep.subr.bf16.mxu0 0
      %1172 = vmatpush1.bf16.msra.mxu0 %v1073
      %1173 = vmatprep.subr.bf16.mxu0 0
      %1174 = vmatpush1.bf16.msra.mxu0 %v1076
      %1175 = vmatprep.subr.bf16.mxu0 0
      %1176 = vmatpush1.bf16.msra.mxu0 %v1079
      %1177 = vmatprep.subr.bf16.mxu0 0
      %1178 = vmatpush1.bf16.msra.mxu0 %v1082
      %1179 = vmatprep.subr.bf16.mxu0 0
      %1180 = vmatpush1.bf16.msra.mxu0 %v1085
      %1181 = vmatprep.subr.bf16.mxu0 0
      %1182 = vmatpush1.bf16.msra.mxu0 %v1088
      %1183 = vmatprep.subr.bf16.mxu0 0
      %1184 = vmatpush1.bf16.msra.mxu0 %v1091
      %1185 = vmatprep.subr.bf16.mxu0 0
      %1186 = vmatpush1.bf16.msra.mxu0 0
      %1187 = vmatprep.subr.bf16.mxu0 0
      %1188 = vmatpush1.bf16.msra.mxu0 0
      %1189 = vmatprep.subr.bf16.mxu0 0
      %1190 = vmatpush1.bf16.msra.mxu0 0
      %1191 = vmatprep.subr.bf16.mxu0 0
      %1192 = vmatpush1.bf16.msra.mxu0 0
      %1193 = vmatprep.subr.bf16.mxu0 0
      %1194 = vmatpush1.bf16.msra.mxu0 0
      %1195 = vmatprep.subr.bf16.mxu0 0
      %1196 = vmatpush1.bf16.msra.mxu0 0
      %1197 = vmatprep.subr.bf16.mxu0 0
      %1198 = vmatpush1.bf16.msra.mxu0 0
      %1199 = vmatprep.subr.bf16.mxu0 0
      %1200 = vmatpush1.bf16.msra.mxu0 0
      %1201 = vmatprep.mubr.bf16.mxu0 0
      %1202 = vmatmul.mubr.bf16.gmra.mrb[0].mxu0 %v969
      %v1203 = vpop.f32.mrb[0].mxu0
      %v1204 = vadd.f32 %v984, %v1203
      %v1205 = vpop.f32.mrb[0].mxu0
      %v1206 = vpop.f32.mrb[0].mxu0
      %v1207 = vadd.f32 %v984, %v1206
      %v1208 = vpop.f32.mrb[0].mxu0
      %1209 = vmatprep.mubr.bf16.mxu0 0
      %1210 = vmatmul.mubr.bf16.gmra.mrb[0].mxu0 %v970
      %v1211 = vpop.f32.mrb[0].mxu0
      %v1212 = vadd.f32 %v984, %v1211
      %v1213 = vpop.f32.mrb[0].mxu0
      %v1214 = vpop.f32.mrb[0].mxu0
      %v1215 = vadd.f32 %v984, %v1214
      %v1216 = vpop.f32.mrb[0].mxu0
      %1217 = vdwg.mxu0
      %v1218 = vmul.f32 %v1151, 0.25
      %v1219 = vmul.f32 %v1155, 0.25
      %v1220 = vmul.f32 %v1161, 0.25
      %v1221 = vmul.f32 %v1165, 0.25
      %v1222 = vmul.f32 %v1218, %v1153
      %v1223 = vmul.f32 %v1219, %v1153
      %v1224 = vmul.f32 %v1220, %v1153
      %v1225 = vmul.f32 %v1221, %v1153
      %v1226 = vmul.f32 %v1218, %v1157
      %v1227 = vmul.f32 %v1219, %v1157
      %v1228 = vmul.f32 %v1220, %v1157
      %v1229 = vmul.f32 %v1221, %v1157
      %v1230 = vmul.f32 %v1218, %v1163
      %v1231 = vmul.f32 %v1219, %v1163
      %v1232 = vmul.f32 %v1220, %v1163
      %v1233 = vmul.f32 %v1221, %v1163
      %v1234 = vmul.f32 %v1218, %v1167
      %v1235 = vmul.f32 %v1219, %v1167
      %v1236 = vmul.f32 %v1220, %v1167
      %v1237 = vmul.f32 %v1221, %v1167
      %v1238 = vpack.c.bf16 %v1223, %v1222
      %v1239 = vpack.c.bf16 %v1225, %v1224
      %v1240 = vpack.c.bf16 %v1227, %v1226
      %v1241 = vpack.c.bf16 %v1229, %v1228
      %v1242 = vpack.c.bf16 %v1231, %v1230
      %v1243 = vpack.c.bf16 %v1233, %v1232
      %v1244 = vpack.c.bf16 %v1235, %v1234
      %v1245 = vpack.c.bf16 %v1237, %v1236
      %v1246 = vld [vmem:[%s18] sm:$0xf]
      %v1247 = vld [vmem:[%s18 + $0x4] sm:$0xf]
      %v1248 = vld [vmem:[%s18 + $0x8] sm:$0xf]
      %v1249 = vld [vmem:[%s18 + $0xc] sm:$0xf]
      %v1250 = vld [vmem:[%s18 + $0x10] sm:$0xf]
      %v1251 = vld [vmem:[%s18 + $0x14] sm:$0xf]
      %v1252 = vld [vmem:[%s18 + $0x18] sm:$0xf]
      %v1253 = vld [vmem:[%s18 + $0x1c] sm:$0xf]
      %v1254 = vld [vmem:[%s18 + $0x20] sm:$0xf]
      %v1255 = vld [vmem:[%s18 + $0x24] sm:$0xf]
      %v1256 = vld [vmem:[%s18 + $0x28] sm:$0xf]
      %v1257 = vld [vmem:[%s18 + $0x2c] sm:$0xf]
      %v1258 = vld [vmem:[%s18 + $0x30] sm:$0xf]
      %v1259 = vld [vmem:[%s18 + $0x34] sm:$0xf]
      %v1260 = vld [vmem:[%s18 + $0x38] sm:$0xf]
      %v1261 = vld [vmem:[%s18 + $0x3c] sm:$0xf]
      %v1278 = vunpack.c.l.b16 %v1246
      %v1279 = vunpack.c.l.b16 %v1247
      %v1280 = vunpack.c.l.b16 %v1248
      %v1281 = vunpack.c.l.b16 %v1249
      %v1282 = vunpack.c.l.b16 %v1250
      %v1283 = vunpack.c.l.b16 %v1251
      %v1284 = vunpack.c.l.b16 %v1252
      %v1285 = vunpack.c.l.b16 %v1253
      %v1286 = vunpack.c.l.b16 %v1254
      %v1287 = vunpack.c.l.b16 %v1255
      %v1288 = vunpack.c.l.b16 %v1256
      %v1289 = vunpack.c.l.b16 %v1257
      %v1290 = vunpack.c.l.b16 %v1258
      %v1291 = vunpack.c.l.b16 %v1259
      %v1292 = vunpack.c.l.b16 %v1260
      %v1293 = vunpack.c.l.b16 %v1261
      %v1294 = vpack.c.b16 %v1279, %v1278
      %v1295 = vpack.c.b16 %v1281, %v1280
      %v1296 = vpack.c.b16 %v1283, %v1282
      %v1297 = vpack.c.b16 %v1285, %v1284
      %v1298 = vpack.c.b16 %v1287, %v1286
      %v1299 = vpack.c.b16 %v1289, %v1288
      %v1300 = vpack.c.b16 %v1291, %v1290
      %v1301 = vpack.c.b16 %v1293, %v1292
      %1310 = vmatprep.subr.bf16.mxu0 0
      %1311 = vmatpush1.bf16.msra.mxu0 %v1294
      %1312 = vmatprep.subr.bf16.mxu0 0
      %1313 = vmatpush1.bf16.msra.mxu0 %v1295
      %1314 = vmatprep.subr.bf16.mxu0 0
      %1315 = vmatpush1.bf16.msra.mxu0 %v1296
      %1316 = vmatprep.subr.bf16.mxu0 0
      %1317 = vmatpush1.bf16.msra.mxu0 %v1297
      %1318 = vmatprep.subr.bf16.mxu0 0
      %1319 = vmatpush1.bf16.msra.mxu0 %v1298
      %1320 = vmatprep.subr.bf16.mxu0 0
      %1321 = vmatpush1.bf16.msra.mxu0 %v1299
      %1322 = vmatprep.subr.bf16.mxu0 0
      %1323 = vmatpush1.bf16.msra.mxu0 %v1300
      %1324 = vmatprep.subr.bf16.mxu0 0
      %1325 = vmatpush1.bf16.msra.mxu0 %v1301
      %1326 = vmatprep.subr.bf16.mxu0 0
      %1327 = vmatpush1.bf16.msra.mxu0 0
      %1328 = vmatprep.subr.bf16.mxu0 0
      %1329 = vmatpush1.bf16.msra.mxu0 0
      %1330 = vmatprep.subr.bf16.mxu0 0
      %1331 = vmatpush1.bf16.msra.mxu0 0
      %1332 = vmatprep.subr.bf16.mxu0 0
      %1333 = vmatpush1.bf16.msra.mxu0 0
      %1334 = vmatprep.subr.bf16.mxu0 0
      %1335 = vmatpush1.bf16.msra.mxu0 0
      %1336 = vmatprep.subr.bf16.mxu0 0
      %1337 = vmatpush1.bf16.msra.mxu0 0
      %1338 = vmatprep.subr.bf16.mxu0 0
      %1339 = vmatpush1.bf16.msra.mxu0 0
      %1340 = vmatprep.subr.bf16.mxu0 0
      %1341 = vmatpush1.bf16.msra.mxu0 0
      %1342 = vmatprep.mubr.bf16.mxu0 0
      %1343 = vmatmul.mubr.bf16.gmra.mrb[0].mxu0 %v1238
      %v1344 = vpop.f32.mrb[0].mxu0
      %v1345 = vadd.f32 0.0, %v1344
      %v1346 = vpop.f32.mrb[0].mxu0
      %v1347 = vpop.f32.mrb[0].mxu0
      %v1348 = vadd.f32 0.0, %v1347
      %v1349 = vpop.f32.mrb[0].mxu0
      %1350 = vmatprep.mubr.bf16.mxu0 0
      %1351 = vmatmul.mubr.bf16.gmra.mrb[0].mxu0 %v1239
      %v1352 = vpop.f32.mrb[0].mxu0
      %v1353 = vadd.f32 0.0, %v1352
      %v1354 = vpop.f32.mrb[0].mxu0
      %v1355 = vpop.f32.mrb[0].mxu0
      %v1356 = vadd.f32 0.0, %v1355
      %v1357 = vpop.f32.mrb[0].mxu0
      %1358 = vmatprep.mubr.bf16.mxu0 0
      %1359 = vmatmul.mubr.bf16.gmra.mrb[0].mxu0 %v1240
      %v1360 = vpop.f32.mrb[0].mxu0
      %v1361 = vadd.f32 0.0, %v1360
      %v1362 = vpop.f32.mrb[0].mxu0
      %v1363 = vpop.f32.mrb[0].mxu0
      %v1364 = vadd.f32 0.0, %v1363
      %v1365 = vpop.f32.mrb[0].mxu0
      %1366 = vmatprep.mubr.bf16.mxu0 0
      %1367 = vmatmul.mubr.bf16.gmra.mrb[0].mxu0 %v1241
      %v1368 = vpop.f32.mrb[0].mxu0
      %v1369 = vadd.f32 0.0, %v1368
      %v1370 = vpop.f32.mrb[0].mxu0
      %v1371 = vpop.f32.mrb[0].mxu0
      %v1372 = vadd.f32 0.0, %v1371
      %v1373 = vpop.f32.mrb[0].mxu0
      %1374 = vmatprep.mubr.bf16.mxu0 0
      %1375 = vmatmul.mubr.bf16.gmra.mrb[0].mxu0 %v1242
      %v1376 = vpop.f32.mrb[0].mxu0
      %v1377 = vadd.f32 0.0, %v1376
      %v1378 = vpop.f32.mrb[0].mxu0
      %v1379 = vpop.f32.mrb[0].mxu0
      %v1380 = vadd.f32 0.0, %v1379
      %v1381 = vpop.f32.mrb[0].mxu0
      %1382 = vmatprep.mubr.bf16.mxu0 0
      %1383 = vmatmul.mubr.bf16.gmra.mrb[0].mxu0 %v1243
      %v1384 = vpop.f32.mrb[0].mxu0
      %v1385 = vadd.f32 0.0, %v1384
      %v1386 = vpop.f32.mrb[0].mxu0
      %v1387 = vpop.f32.mrb[0].mxu0
      %v1388 = vadd.f32 0.0, %v1387
      %v1389 = vpop.f32.mrb[0].mxu0
      %1390 = vmatprep.mubr.bf16.mxu0 0
      %1391 = vmatmul.mubr.bf16.gmra.mrb[0].mxu0 %v1244
      %v1392 = vpop.f32.mrb[0].mxu0
      %v1393 = vadd.f32 0.0, %v1392
      %v1394 = vpop.f32.mrb[0].mxu0
      %v1395 = vpop.f32.mrb[0].mxu0
      %v1396 = vadd.f32 0.0, %v1395
      %v1397 = vpop.f32.mrb[0].mxu0
      %1398 = vmatprep.mubr.bf16.mxu0 0
      %1399 = vmatmul.mubr.bf16.gmra.mrb[0].mxu0 %v1245
      %v1400 = vpop.f32.mrb[0].mxu0
      %v1401 = vadd.f32 0.0, %v1400
      %v1402 = vpop.f32.mrb[0].mxu0
      %v1403 = vpop.f32.mrb[0].mxu0
      %v1404 = vadd.f32 0.0, %v1403
      %v1405 = vpop.f32.mrb[0].mxu0
      %1406 = vdwg.mxu0
      %v1407 = vmax.f32 %v1345, %v1361
      %v1408 = vmax.f32 %v1348, %v1364
      %v1409 = vmax.f32 %v1353, %v1369
      %v1410 = vmax.f32 %v1356, %v1372
      %v1411 = vmax.f32 %v1407, %v1377
      %v1412 = vmax.f32 %v1408, %v1380
      %v1413 = vmax.f32 %v1409, %v1385
      %v1414 = vmax.f32 %v1410, %v1388
      %v1415 = vmax.f32 %v1411, %v1393
      %v1416 = vmax.f32 %v1412, %v1396
      %v1417 = vmax.f32 %v1413, %v1401
      %v1418 = vmax.f32 %v1414, %v1404
      %v1419 = vsub.f32 %v1345, %v1415
      %v1420 = vsub.f32 %v1348, %v1416
      %v1421 = vsub.f32 %v1353, %v1417
      %v1422 = vsub.f32 %v1356, %v1418
      %v1423 = vmul.f32 %v1419, 1.442695
      %v1424 = vpow.pop %v1423
      %v1425 = vmul.f32 %v1420, 1.442695
      %v1426 = vpow.pop %v1425
      %v1427 = vmul.f32 %v1421, 1.442695
      %v1428 = vpow.pop %v1427
      %v1429 = vmul.f32 %v1422, 1.442695
      %v1430 = vpow.pop %v1429
      %v1431 = vsub.f32 %v1361, %v1415
      %v1432 = vsub.f32 %v1364, %v1416
      %v1433 = vsub.f32 %v1369, %v1417
      %v1434 = vsub.f32 %v1372, %v1418
      %v1435 = vmul.f32 %v1431, 1.442695
      %v1436 = vpow.pop %v1435
      %v1437 = vmul.f32 %v1432, 1.442695
      %v1438 = vpow.pop %v1437
      %v1439 = vmul.f32 %v1433, 1.442695
      %v1440 = vpow.pop %v1439
      %v1441 = vmul.f32 %v1434, 1.442695
      %v1442 = vpow.pop %v1441
      %v1443 = vsub.f32 %v1377, %v1415
      %v1444 = vsub.f32 %v1380, %v1416
      %v1445 = vsub.f32 %v1385, %v1417
      %v1446 = vsub.f32 %v1388, %v1418
      %v1447 = vmul.f32 %v1443, 1.442695
      %v1448 = vpow.pop %v1447
      %v1449 = vmul.f32 %v1444, 1.442695
      %v1450 = vpow.pop %v1449
      %v1451 = vmul.f32 %v1445, 1.442695
      %v1452 = vpow.pop %v1451
      %v1453 = vmul.f32 %v1446, 1.442695
      %v1454 = vpow.pop %v1453
      %v1455 = vsub.f32 %v1393, %v1415
      %v1456 = vsub.f32 %v1396, %v1416
      %v1457 = vsub.f32 %v1401, %v1417
      %v1458 = vsub.f32 %v1404, %v1418
      %v1459 = vmul.f32 %v1455, 1.442695
      %v1460 = vpow.pop %v1459
      %v1461 = vmul.f32 %v1456, 1.442695
      %v1462 = vpow.pop %v1461
      %v1463 = vmul.f32 %v1457, 1.442695
      %v1464 = vpow.pop %v1463
      %v1465 = vmul.f32 %v1458, 1.442695
      %v1466 = vpow.pop %v1465
      %v1467 = vadd.f32 %v1424, %v1436
      %v1468 = vadd.f32 %v1426, %v1438
      %v1469 = vadd.f32 %v1428, %v1440
      %v1470 = vadd.f32 %v1430, %v1442
      %v1471 = vadd.f32 %v1467, %v1448
      %v1472 = vadd.f32 %v1468, %v1450
      %v1473 = vadd.f32 %v1469, %v1452
      %v1474 = vadd.f32 %v1470, %v1454
      %v1475 = vadd.f32 %v1471, %v1460
      %v1476 = vadd.f32 %v1472, %v1462
      %v1477 = vadd.f32 %v1473, %v1464
      %v1478 = vadd.f32 %v1474, %v1466
      %v1479 = vrcp.pop %v1475
      %v1480 = vrcp.pop %v1476
      %v1481 = vrcp.pop %v1477
      %v1482 = vrcp.pop %v1478
      %v1483 = vmul.f32 %v1424, %v1479
      %v1484 = vmul.f32 %v1426, %v1480
      %v1485 = vmul.f32 %v1428, %v1481
      %v1486 = vmul.f32 %v1430, %v1482
      %v1487 = vmul.f32 %v1436, %v1479
      %v1488 = vmul.f32 %v1438, %v1480
      %v1489 = vmul.f32 %v1440, %v1481
      %v1490 = vmul.f32 %v1442, %v1482
      %v1491 = vmul.f32 %v1448, %v1479
      %v1492 = vmul.f32 %v1450, %v1480
      %v1493 = vmul.f32 %v1452, %v1481
      %v1494 = vmul.f32 %v1454, %v1482
      %v1495 = vmul.f32 %v1460, %v1479
      %v1496 = vmul.f32 %v1462, %v1480
      %v1497 = vmul.f32 %v1464, %v1481
      %v1498 = vmul.f32 %v1466, %v1482
      %v1499 = vpack.c.bf16 %v1484, %v1483
      %v1500 = vpack.c.bf16 %v1486, %v1485
      %v1501 = vpack.c.bf16 %v1488, %v1487
      %v1502 = vpack.c.bf16 %v1490, %v1489
      %v1503 = vpack.c.bf16 %v1492, %v1491
      %v1504 = vpack.c.bf16 %v1494, %v1493
      %v1505 = vpack.c.bf16 %v1496, %v1495
      %v1506 = vpack.c.bf16 %v1498, %v1497
      %v1507 = vld [vmem:[%s19] sm:$0xf]
      %vm1508 = vcmask 64512
      %v1510 = vsel %vm1508, %v1499, 0
      %v1513 = vsel %vm1508, %v1500, 0
      %v1516 = vsel %vm1508, %v1501, 0
      %v1519 = vsel %vm1508, %v1502, 0
      %v1522 = vsel %vm1508, %v1503, 0
      %v1525 = vsel %vm1508, %v1504, 0
      %v1528 = vsel %vm1508, %v1505, 0
      %v1531 = vsel %vm1508, %v1506, 0
      %vm1533 = vcmask 1043456
      %v1535 = vsel %vm1533, %v1507, 0
      %1537 = vmatprep.subr.bf16.mxu0 0
      %1538 = vmatpush1.bf16.msra.mxu0 %v1535
      %1539 = vmatprep.subr.bf16.mxu0 0
      %1540 = vmatpush1.bf16.msra.mxu0 0
      %1541 = vmatprep.subr.bf16.mxu0 0
      %1542 = vmatpush1.bf16.msra.mxu0 0
      %1543 = vmatprep.subr.bf16.mxu0 0
      %1544 = vmatpush1.bf16.msra.mxu0 0
      %1545 = vmatprep.subr.bf16.mxu0 0
      %1546 = vmatpush1.bf16.msra.mxu0 0
      %1547 = vmatprep.subr.bf16.mxu0 0
      %1548 = vmatpush1.bf16.msra.mxu0 0
      %1549 = vmatprep.subr.bf16.mxu0 0
      %1550 = vmatpush1.bf16.msra.mxu0 0
      %1551 = vmatprep.subr.bf16.mxu0 0
      %1552 = vmatpush1.bf16.msra.mxu0 0
      %1553 = vmatprep.subr.bf16.mxu0 0
      %1554 = vmatpush1.bf16.msra.mxu0 0
      %1555 = vmatprep.subr.bf16.mxu0 0
      %1556 = vmatpush1.bf16.msra.mxu0 0
      %1557 = vmatprep.subr.bf16.mxu0 0
      %1558 = vmatpush1.bf16.msra.mxu0 0
      %1559 = vmatprep.subr.bf16.mxu0 0
      %1560 = vmatpush1.bf16.msra.mxu0 0
      %1561 = vmatprep.subr.bf16.mxu0 0
      %1562 = vmatpush1.bf16.msra.mxu0 0
      %1563 = vmatprep.subr.bf16.mxu0 0
      %1564 = vmatpush1.bf16.msra.mxu0 0
      %1565 = vmatprep.subr.bf16.mxu0 0
      %1566 = vmatpush1.bf16.msra.mxu0 0
      %1567 = vmatprep.subr.bf16.mxu0 0
      %1568 = vmatpush1.bf16.msra.mxu0 0
      %1569 = vmatprep.mubr.bf16.mxu0 0
      %1570 = vmatmul.mubr.bf16.gmra.mrb[0].mxu0 %v1510
      %v1571 = vpop.f32.mrb[0].mxu0
      %v1572 = vadd.f32 0.0, %v1571
      %v1573 = vpop.f32.mrb[0].mxu0
      %v1574 = vpop.f32.mrb[0].mxu0
      %v1575 = vadd.f32 0.0, %v1574
      %v1576 = vpop.f32.mrb[0].mxu0
      %1577 = vmatprep.mubr.bf16.mxu0 0
      %1578 = vmatmul.mubr.bf16.gmra.mrb[0].mxu0 %v1513
      %v1579 = vpop.f32.mrb[0].mxu0
      %v1580 = vadd.f32 0.0, %v1579
      %v1581 = vpop.f32.mrb[0].mxu0
      %v1582 = vpop.f32.mrb[0].mxu0
      %v1583 = vadd.f32 0.0, %v1582
      %v1584 = vpop.f32.mrb[0].mxu0
      %1585 = vmatprep.mubr.bf16.mxu0 0
      %1586 = vmatmul.mubr.bf16.gmra.mrb[0].mxu0 %v1516
      %v1587 = vpop.f32.mrb[0].mxu0
      %v1588 = vadd.f32 0.0, %v1587
      %v1589 = vpop.f32.mrb[0].mxu0
      %v1590 = vpop.f32.mrb[0].mxu0
      %v1591 = vadd.f32 0.0, %v1590
      %v1592 = vpop.f32.mrb[0].mxu0
      %1593 = vmatprep.mubr.bf16.mxu0 0
      %1594 = vmatmul.mubr.bf16.gmra.mrb[0].mxu0 %v1519
      %v1595 = vpop.f32.mrb[0].mxu0
      %v1596 = vadd.f32 0.0, %v1595
      %v1597 = vpop.f32.mrb[0].mxu0
      %v1598 = vpop.f32.mrb[0].mxu0
      %v1599 = vadd.f32 0.0, %v1598
      %v1600 = vpop.f32.mrb[0].mxu0
      %1601 = vmatprep.mubr.bf16.mxu0 0
      %1602 = vmatmul.mubr.bf16.gmra.mrb[0].mxu0 %v1522
      %v1603 = vpop.f32.mrb[0].mxu0
      %v1604 = vadd.f32 0.0, %v1603
      %v1605 = vpop.f32.mrb[0].mxu0
      %v1606 = vpop.f32.mrb[0].mxu0
      %v1607 = vadd.f32 0.0, %v1606
      %v1608 = vpop.f32.mrb[0].mxu0
      %1609 = vmatprep.mubr.bf16.mxu0 0
      %1610 = vmatmul.mubr.bf16.gmra.mrb[0].mxu0 %v1525
      %v1611 = vpop.f32.mrb[0].mxu0
      %v1612 = vadd.f32 0.0, %v1611
      %v1613 = vpop.f32.mrb[0].mxu0
      %v1614 = vpop.f32.mrb[0].mxu0
      %v1615 = vadd.f32 0.0, %v1614
      %v1616 = vpop.f32.mrb[0].mxu0
      %1617 = vmatprep.mubr.bf16.mxu0 0
      %1618 = vmatmul.mubr.bf16.gmra.mrb[0].mxu0 %v1528
      %v1619 = vpop.f32.mrb[0].mxu0
      %v1620 = vadd.f32 0.0, %v1619
      %v1621 = vpop.f32.mrb[0].mxu0
      %v1622 = vpop.f32.mrb[0].mxu0
      %v1623 = vadd.f32 0.0, %v1622
      %v1624 = vpop.f32.mrb[0].mxu0
      %1625 = vmatprep.mubr.bf16.mxu0 0
      %1626 = vmatmul.mubr.bf16.gmra.mrb[0].mxu0 %v1531
      %v1627 = vpop.f32.mrb[0].mxu0
      %v1628 = vadd.f32 0.0, %v1627
      %v1629 = vpop.f32.mrb[0].mxu0
      %v1630 = vpop.f32.mrb[0].mxu0
      %v1631 = vadd.f32 0.0, %v1630
      %v1632 = vpop.f32.mrb[0].mxu0
      %1633 = vdwg.mxu0
      %v1634 = vmul.f32 %v1572, %v1204
      %v1635 = vmul.f32 %v1575, %v1204
      %v1636 = vmul.f32 %v1580, %v1204
      %v1637 = vmul.f32 %v1583, %v1204
      %v1638 = vmul.f32 %v1588, %v1207
      %v1639 = vmul.f32 %v1591, %v1207
      %v1640 = vmul.f32 %v1596, %v1207
      %v1641 = vmul.f32 %v1599, %v1207
      %v1642 = vmul.f32 %v1604, %v1212
      %v1643 = vmul.f32 %v1607, %v1212
      %v1644 = vmul.f32 %v1612, %v1212
      %v1645 = vmul.f32 %v1615, %v1212
      %v1646 = vmul.f32 %v1620, %v1215
      %v1647 = vmul.f32 %v1623, %v1215
      %v1648 = vmul.f32 %v1628, %v1215
      %v1649 = vmul.f32 %v1631, %v1215
      %v1650 = vadd.f32 %v1634, %v1638
      %v1651 = vadd.f32 %v1635, %v1639
      %v1652 = vadd.f32 %v1636, %v1640
      %v1653 = vadd.f32 %v1637, %v1641
      %v1654 = vadd.f32 %v1650, %v1642
      %v1655 = vadd.f32 %v1651, %v1643
      %v1656 = vadd.f32 %v1652, %v1644
      %v1657 = vadd.f32 %v1653, %v1645
      %v1658 = vadd.f32 %v1654, %v1646
      %v1659 = vadd.f32 %v1655, %v1647
      %v1660 = vadd.f32 %v1656, %v1648
      %v1661 = vadd.f32 %v1657, %v1649
      %v1662 = vld [vmem:[%s760] sm:$0xf]
      %v1663 = vld [vmem:[%s760 + $0x4] sm:$0xf]
      %v1664 = vld [vmem:[%s760 + $0x8] sm:$0xf]
      %v1665 = vld [vmem:[%s760 + $0xc] sm:$0xf]
      %v1666 = vld [vmem:[%s760 + $0x10] sm:$0xf]
      %v1667 = vld [vmem:[%s760 + $0x14] sm:$0xf]
      %v1668 = vld [vmem:[%s760 + $0x18] sm:$0xf]
      %v1669 = vld [vmem:[%s760 + $0x1c] sm:$0xf]
      %v1670 = vld [vmem:[%s760 + $0x20] sm:$0xf]
      %v1671 = vld [vmem:[%s760 + $0x24] sm:$0xf]
      %v1672 = vld [vmem:[%s760 + $0x28] sm:$0xf]
      %v1673 = vld [vmem:[%s760 + $0x2c] sm:$0xf]
      %v1674 = vld [vmem:[%s760 + $0x30] sm:$0xf]
      %v1675 = vld [vmem:[%s760 + $0x34] sm:$0xf]
      %v1676 = vld [vmem:[%s760 + $0x38] sm:$0xf]
      %v1677 = vld [vmem:[%s760 + $0x3c] sm:$0xf]
      %v1678 = vpack.c.bf16 %v1659, %v1658
      %v1679 = vpack.c.bf16 %v1661, %v1660
      %v1680 = vld [vmem:[%s763] sm:$0x1]
      %v1682 = vlaneseq
      %v1683 = vshrl.u32 %v1682, 7
      %v1684 = vsub.s32 0, %v1683
      %v1685 = vrot.slane %v1680, %v1684
      %v1703 = vunpack.c.l.b16 %v1662
      %v1704 = vunpack.c.l.b16 %v1663
      %v1705 = vunpack.c.l.b16 %v1664
      %v1706 = vunpack.c.l.b16 %v1665
      %v1707 = vunpack.c.l.b16 %v1666
      %v1708 = vunpack.c.l.b16 %v1667
      %v1709 = vunpack.c.l.b16 %v1668
      %v1710 = vunpack.c.l.b16 %v1669
      %v1711 = vunpack.c.l.b16 %v1670
      %v1712 = vunpack.c.l.b16 %v1671
      %v1713 = vunpack.c.l.b16 %v1672
      %v1714 = vunpack.c.l.b16 %v1673
      %v1715 = vunpack.c.l.b16 %v1674
      %v1716 = vunpack.c.l.b16 %v1675
      %v1717 = vunpack.c.l.b16 %v1676
      %v1718 = vunpack.c.l.b16 %v1677
      %v1719 = vpack.c.b16 %v1704, %v1703
      %v1720 = vpack.c.b16 %v1706, %v1705
      %v1721 = vpack.c.b16 %v1708, %v1707
      %v1722 = vpack.c.b16 %v1710, %v1709
      %v1723 = vpack.c.b16 %v1712, %v1711
      %v1724 = vpack.c.b16 %v1714, %v1713
      %v1725 = vpack.c.b16 %v1716, %v1715
      %v1726 = vpack.c.b16 %v1718, %v1717
      %1735 = vmatprep.subr.bf16.mxu0 0
      %1736 = vmatpush1.bf16.msra.mxu0 %v1719
      %1737 = vmatprep.subr.bf16.mxu0 0
      %1738 = vmatpush1.bf16.msra.mxu0 %v1720
      %1739 = vmatprep.subr.bf16.mxu0 0
      %1740 = vmatpush1.bf16.msra.mxu0 %v1721
      %1741 = vmatprep.subr.bf16.mxu0 0
      %1742 = vmatpush1.bf16.msra.mxu0 %v1722
      %1743 = vmatprep.subr.bf16.mxu0 0
      %1744 = vmatpush1.bf16.msra.mxu0 %v1723
      %1745 = vmatprep.subr.bf16.mxu0 0
      %1746 = vmatpush1.bf16.msra.mxu0 %v1724
      %1747 = vmatprep.subr.bf16.mxu0 0
      %1748 = vmatpush1.bf16.msra.mxu0 %v1725
      %1749 = vmatprep.subr.bf16.mxu0 0
      %1750 = vmatpush1.bf16.msra.mxu0 %v1726
      %1751 = vmatprep.subr.bf16.mxu0 0
      %1752 = vmatpush1.bf16.msra.mxu0 0
      %1753 = vmatprep.subr.bf16.mxu0 0
      %1754 = vmatpush1.bf16.msra.mxu0 0
      %1755 = vmatprep.subr.bf16.mxu0 0
      %1756 = vmatpush1.bf16.msra.mxu0 0
      %1757 = vmatprep.subr.bf16.mxu0 0
      %1758 = vmatpush1.bf16.msra.mxu0 0
      %1759 = vmatprep.subr.bf16.mxu0 0
      %1760 = vmatpush1.bf16.msra.mxu0 0
      %1761 = vmatprep.subr.bf16.mxu0 0
      %1762 = vmatpush1.bf16.msra.mxu0 0
      %1763 = vmatprep.subr.bf16.mxu0 0
      %1764 = vmatpush1.bf16.msra.mxu0 0
      %1765 = vmatprep.subr.bf16.mxu0 0
      %1766 = vmatpush1.bf16.msra.mxu0 0
      %1767 = vmatprep.mubr.bf16.mxu0 0
      %1768 = vmatmul.mubr.bf16.gmra.mrb[0].mxu0 %v1678
      %v1769 = vpop.f32.mrb[0].mxu0
      %v1770 = vadd.f32 %v1685, %v1769
      %v1771 = vpop.f32.mrb[0].mxu0
      %v1772 = vpop.f32.mrb[0].mxu0
      %v1773 = vadd.f32 %v1685, %v1772
      %v1774 = vpop.f32.mrb[0].mxu0
      %1775 = vmatprep.mubr.bf16.mxu0 0
      %1776 = vmatmul.mubr.bf16.gmra.mrb[0].mxu0 %v1679
      %v1777 = vpop.f32.mrb[0].mxu0
      %v1778 = vadd.f32 %v1685, %v1777
      %v1779 = vpop.f32.mrb[0].mxu0
      %v1780 = vpop.f32.mrb[0].mxu0
      %v1781 = vadd.f32 %v1685, %v1780
      %v1782 = vpop.f32.mrb[0].mxu0
      %1783 = vdwg.mxu0
      %v1784 = vadd.f32 %v1770, %v933
      %v1785 = vadd.f32 %v1773, %v934
      %v1786 = vadd.f32 %v1778, %v935
      %v1787 = vadd.f32 %v1781, %v936
      %v1788 = vld [vmem:[%s766] sm:$0x1]
      %v1789 = vld [vmem:[%s769] sm:$0x1]
      %1790 = vadd.xlane.f32.xlu0 %v1784
      %v1791 = vpop.xlane.xlu0 %1790
      %1792 = vadd.xlane.f32.xlu0 %v1785
      %v1793 = vpop.xlane.xlu0 %1792
      %1794 = vadd.xlane.f32.xlu0 %v1786
      %v1795 = vpop.xlane.xlu0 %1794
      %1796 = vadd.xlane.f32.xlu0 %v1787
      %v1797 = vpop.xlane.xlu0 %1796
      %v1798 = vrcp.pop 128.0
      %v1799 = vmul.f32 %v1791, %v1798
      %v1800 = vmul.f32 %v1793, %v1798
      %v1801 = vmul.f32 %v1795, %v1798
      %v1802 = vmul.f32 %v1797, %v1798
      %v1803 = vsub.f32 %v1784, %v1799
      %v1804 = vsub.f32 %v1785, %v1800
      %v1805 = vsub.f32 %v1786, %v1801
      %v1806 = vsub.f32 %v1787, %v1802
      %v1807 = vmul.f32 %v1803, %v1803
      %v1808 = vmul.f32 %v1804, %v1804
      %v1809 = vmul.f32 %v1805, %v1805
      %v1810 = vmul.f32 %v1806, %v1806
      %1811 = vadd.xlane.f32.xlu0 %v1807
      %v1812 = vpop.xlane.xlu0 %1811
      %1813 = vadd.xlane.f32.xlu0 %v1808
      %v1814 = vpop.xlane.xlu0 %1813
      %1815 = vadd.xlane.f32.xlu0 %v1809
      %v1816 = vpop.xlane.xlu0 %1815
      %1817 = vadd.xlane.f32.xlu0 %v1810
      %v1818 = vpop.xlane.xlu0 %1817
      %v1819 = vmul.f32 %v1812, %v1798
      %v1820 = vmul.f32 %v1814, %v1798
      %v1821 = vmul.f32 %v1816, %v1798
      %v1822 = vmul.f32 %v1818, %v1798
      %v1823 = vadd.f32 %v1819, 1e-05
      %v1824 = vadd.f32 %v1820, 1e-05
      %v1825 = vadd.f32 %v1821, 1e-05
      %v1826 = vadd.f32 %v1822, 1e-05
      %v1827 = vrsqrt.pop %v1823
      %v1828 = vrsqrt.pop %v1824
      %v1829 = vrsqrt.pop %v1825
      %v1830 = vrsqrt.pop %v1826
      %v1831 = vmul.f32 %v1803, %v1827
      %v1832 = vmul.f32 %v1804, %v1828
      %v1833 = vmul.f32 %v1805, %v1829
      %v1834 = vmul.f32 %v1806, %v1830
      %v1836 = vlaneseq
      %v1837 = vshrl.u32 %v1836, 7
      %v1838 = vsub.s32 0, %v1837
      %v1839 = vrot.slane %v1788, %v1838
      %v1841 = vmul.f32 %v1831, %v1839
      %v1842 = vmul.f32 %v1832, %v1839
      %v1843 = vmul.f32 %v1833, %v1839
      %v1844 = vmul.f32 %v1834, %v1839
      %v1846 = vlaneseq
      %v1847 = vshrl.u32 %v1846, 7
      %v1848 = vsub.s32 0, %v1847
      %v1849 = vrot.slane %v1789, %v1848
      %v1851 = vadd.f32 %v1841, %v1849
      %v1852 = vadd.f32 %v1842, %v1849
      %v1853 = vadd.f32 %v1843, %v1849
      %v1854 = vadd.f32 %v1844, %v1849
      %v1855 = vpack.c.bf16 %v1852, %v1851
      %v1856 = vpack.c.bf16 %v1854, %v1853
      %v1857 = vld [vmem:[%s780] sm:$0xff]
      %v1858 = vld [vmem:[%s780 + $0x20] sm:$0xff]
      %v1859 = vld [vmem:[%s780 + $0x40] sm:$0xff]
      %v1860 = vld [vmem:[%s780 + $0x60] sm:$0xff]
      %v1861 = vld [vmem:[%s780 + $0x80] sm:$0xff]
      %v1862 = vld [vmem:[%s780 + $0xa0] sm:$0xff]
      %v1863 = vld [vmem:[%s780 + $0xc0] sm:$0xff]
      %v1864 = vld [vmem:[%s780 + $0xe0] sm:$0xff]
      %v1865 = vld [vmem:[%s780 + $0x100] sm:$0xff]
      %v1866 = vld [vmem:[%s780 + $0x120] sm:$0xff]
      %v1867 = vld [vmem:[%s780 + $0x140] sm:$0xff]
      %v1868 = vld [vmem:[%s780 + $0x160] sm:$0xff]
      %v1869 = vld [vmem:[%s780 + $0x180] sm:$0xff]
      %v1870 = vld [vmem:[%s780 + $0x1a0] sm:$0xff]
      %v1871 = vld [vmem:[%s780 + $0x1c0] sm:$0xff]
      %v1872 = vld [vmem:[%s780 + $0x1e0] sm:$0xff]
      %v1873 = vld [vmem:[%s784] sm:$0x3]
      %v1875 = vlaneseq
      %v1876 = vshrl.u32 %v1875, 7
      %v1877 = vsub.s32 0, %v1876
      %v1878 = vrot.slane %v1873, %v1877
      %v1879 = vlaneseq
      %v1880 = vshrl.u32 %v1879, 7
      %v1881 = vsub.s32 1, %v1880
      %v1882 = vrot.slane %v1873, %v1881
      %v1901 = vunpack.c.l.b16 %v1857
      %v1902 = vunpack.c.h.b16 %v1857
      %v1903 = vunpack.c.l.b16 %v1858
      %v1904 = vunpack.c.h.b16 %v1858
      %v1905 = vunpack.c.l.b16 %v1859
      %v1906 = vunpack.c.h.b16 %v1859
      %v1907 = vunpack.c.l.b16 %v1860
      %v1908 = vunpack.c.h.b16 %v1860
      %v1909 = vunpack.c.l.b16 %v1861
      %v1910 = vunpack.c.h.b16 %v1861
      %v1911 = vunpack.c.l.b16 %v1862
      %v1912 = vunpack.c.h.b16 %v1862
      %v1913 = vunpack.c.l.b16 %v1863
      %v1914 = vunpack.c.h.b16 %v1863
      %v1915 = vunpack.c.l.b16 %v1864
      %v1916 = vunpack.c.h.b16 %v1864
      %v1917 = vunpack.c.l.b16 %v1865
      %v1918 = vunpack.c.h.b16 %v1865
      %v1919 = vunpack.c.l.b16 %v1866
      %v1920 = vunpack.c.h.b16 %v1866
      %v1921 = vunpack.c.l.b16 %v1867
      %v1922 = vunpack.c.h.b16 %v1867
      %v1923 = vunpack.c.l.b16 %v1868
      %v1924 = vunpack.c.h.b16 %v1868
      %v1925 = vunpack.c.l.b16 %v1869
      %v1926 = vunpack.c.h.b16 %v1869
      %v1927 = vunpack.c.l.b16 %v1870
      %v1928 = vunpack.c.h.b16 %v1870
      %v1929 = vunpack.c.l.b16 %v1871
      %v1930 = vunpack.c.h.b16 %v1871
      %v1931 = vunpack.c.l.b16 %v1872
      %v1932 = vunpack.c.h.b16 %v1872
      %v1933 = vpack.c.b16 %v1903, %v1901
      %v1934 = vpack.c.b16 %v1904, %v1902
      %v1935 = vpack.c.b16 %v1907, %v1905
      %v1936 = vpack.c.b16 %v1908, %v1906
      %v1937 = vpack.c.b16 %v1911, %v1909
      %v1938 = vpack.c.b16 %v1912, %v1910
      %v1939 = vpack.c.b16 %v1915, %v1913
      %v1940 = vpack.c.b16 %v1916, %v1914
      %v1941 = vpack.c.b16 %v1919, %v1917
      %v1942 = vpack.c.b16 %v1920, %v1918
      %v1943 = vpack.c.b16 %v1923, %v1921
      %v1944 = vpack.c.b16 %v1924, %v1922
      %v1945 = vpack.c.b16 %v1927, %v1925
      %v1946 = vpack.c.b16 %v1928, %v1926
      %v1947 = vpack.c.b16 %v1931, %v1929
      %v1948 = vpack.c.b16 %v1932, %v1930
      %1965 = vmatprep.subr.bf16.mxu0 %v1934
      %1966 = vmatpush1.bf16.msra.mxu0 %v1933
      %1967 = vmatprep.subr.bf16.mxu0 %v1936
      %1968 = vmatpush1.bf16.msra.mxu0 %v1935
      %1969 = vmatprep.subr.bf16.mxu0 %v1938
      %1970 = vmatpush1.bf16.msra.mxu0 %v1937
      %1971 = vmatprep.subr.bf16.mxu0 %v1940
      %1972 = vmatpush1.bf16.msra.mxu0 %v1939
      %1973 = vmatprep.subr.bf16.mxu0 %v1942
      %1974 = vmatpush1.bf16.msra.mxu0 %v1941
      %1975 = vmatprep.subr.bf16.mxu0 %v1944
      %1976 = vmatpush1.bf16.msra.mxu0 %v1943
      %1977 = vmatprep.subr.bf16.mxu0 %v1946
      %1978 = vmatpush1.bf16.msra.mxu0 %v1945
      %1979 = vmatprep.subr.bf16.mxu0 %v1948
      %1980 = vmatpush1.bf16.msra.mxu0 %v1947
      %1981 = vmatprep.subr.bf16.mxu0 0
      %1982 = vmatpush1.bf16.msra.mxu0 0
      %1983 = vmatprep.subr.bf16.mxu0 0
      %1984 = vmatpush1.bf16.msra.mxu0 0
      %1985 = vmatprep.subr.bf16.mxu0 0
      %1986 = vmatpush1.bf16.msra.mxu0 0
      %1987 = vmatprep.subr.bf16.mxu0 0
      %1988 = vmatpush1.bf16.msra.mxu0 0
      %1989 = vmatprep.subr.bf16.mxu0 0
      %1990 = vmatpush1.bf16.msra.mxu0 0
      %1991 = vmatprep.subr.bf16.mxu0 0
      %1992 = vmatpush1.bf16.msra.mxu0 0
      %1993 = vmatprep.subr.bf16.mxu0 0
      %1994 = vmatpush1.bf16.msra.mxu0 0
      %1995 = vmatprep.subr.bf16.mxu0 0
      %1996 = vmatpush1.bf16.msra.mxu0 0
      %1997 = vmatprep.mubr.bf16.mxu0 0
      %1998 = vmatmul.mubr.bf16.gmra.mrb[0].mxu0 %v1855
      %v1999 = vpop.f32.mrb[0].mxu0
      %v2000 = vadd.f32 %v1878, %v1999
      %v2001 = vpop.f32.mrb[0].mxu0
      %v2002 = vadd.f32 %v1882, %v2001
      %v2003 = vpop.f32.mrb[0].mxu0
      %v2004 = vadd.f32 %v1878, %v2003
      %v2005 = vpop.f32.mrb[0].mxu0
      %v2006 = vadd.f32 %v1882, %v2005
      %2007 = vmatprep.mubr.bf16.mxu0 0
      %2008 = vmatmul.mubr.bf16.gmra.mrb[0].mxu0 %v1856
      %v2009 = vpop.f32.mrb[0].mxu0
      %v2010 = vadd.f32 %v1878, %v2009
      %v2011 = vpop.f32.mrb[0].mxu0
      %v2012 = vadd.f32 %v1882, %v2011
      %v2013 = vpop.f32.mrb[0].mxu0
      %v2014 = vadd.f32 %v1878, %v2013
      %v2015 = vpop.f32.mrb[0].mxu0
      %v2016 = vadd.f32 %v1882, %v2015
      %2017 = vdwg.mxu0
      %v2018 = vmax.f32 %v2000, 0.0
      %v2019 = vmax.f32 %v2002, 0.0
      %v2020 = vmax.f32 %v2004, 0.0
      %v2021 = vmax.f32 %v2006, 0.0
      %v2022 = vmax.f32 %v2010, 0.0
      %v2023 = vmax.f32 %v2012, 0.0
      %v2024 = vmax.f32 %v2014, 0.0
      %v2025 = vmax.f32 %v2016, 0.0
      %v2026 = vpack.c.bf16 %v2020, %v2018
      %v2027 = vpack.c.bf16 %v2021, %v2019
      %v2028 = vpack.c.bf16 %v2024, %v2022
      %v2029 = vpack.c.bf16 %v2025, %v2023
      %v2030 = vld [vmem:[%s789] sm:$0xf]
      %v2031 = vld [vmem:[%s789 + $0x4] sm:$0xf]
      %v2032 = vld [vmem:[%s789 + $0x8] sm:$0xf]
      %v2033 = vld [vmem:[%s789 + $0xc] sm:$0xf]
      %v2034 = vld [vmem:[%s789 + $0x10] sm:$0xf]
      %v2035 = vld [vmem:[%s789 + $0x14] sm:$0xf]
      %v2036 = vld [vmem:[%s789 + $0x18] sm:$0xf]
      %v2037 = vld [vmem:[%s789 + $0x1c] sm:$0xf]
      %v2038 = vld [vmem:[%s789 + $0x20] sm:$0xf]
      %v2039 = vld [vmem:[%s789 + $0x24] sm:$0xf]
      %v2040 = vld [vmem:[%s789 + $0x28] sm:$0xf]
      %v2041 = vld [vmem:[%s789 + $0x2c] sm:$0xf]
      %v2042 = vld [vmem:[%s789 + $0x30] sm:$0xf]
      %v2043 = vld [vmem:[%s789 + $0x34] sm:$0xf]
      %v2044 = vld [vmem:[%s789 + $0x38] sm:$0xf]
      %v2045 = vld [vmem:[%s789 + $0x3c] sm:$0xf]
      %v2046 = vld [vmem:[%s789 + $0x40] sm:$0xf]
      %v2047 = vld [vmem:[%s789 + $0x44] sm:$0xf]
      %v2048 = vld [vmem:[%s789 + $0x48] sm:$0xf]
      %v2049 = vld [vmem:[%s789 + $0x4c] sm:$0xf]
      %v2050 = vld [vmem:[%s789 + $0x50] sm:$0xf]
      %v2051 = vld [vmem:[%s789 + $0x54] sm:$0xf]
      %v2052 = vld [vmem:[%s789 + $0x58] sm:$0xf]
      %v2053 = vld [vmem:[%s789 + $0x5c] sm:$0xf]
      %v2054 = vld [vmem:[%s789 + $0x60] sm:$0xf]
      %v2055 = vld [vmem:[%s789 + $0x64] sm:$0xf]
      %v2056 = vld [vmem:[%s789 + $0x68] sm:$0xf]
      %v2057 = vld [vmem:[%s789 + $0x6c] sm:$0xf]
      %v2058 = vld [vmem:[%s789 + $0x70] sm:$0xf]
      %v2059 = vld [vmem:[%s789 + $0x74] sm:$0xf]
      %v2060 = vld [vmem:[%s789 + $0x78] sm:$0xf]
      %v2061 = vld [vmem:[%s789 + $0x7c] sm:$0xf]
      %v2062 = vld [vmem:[%s780 + $0x8] sm:$0xff]
      %v2063 = vld [vmem:[%s780 + $0x28] sm:$0xff]
      %v2064 = vld [vmem:[%s780 + $0x48] sm:$0xff]
      %v2065 = vld [vmem:[%s780 + $0x68] sm:$0xff]
      %v2066 = vld [vmem:[%s780 + $0x88] sm:$0xff]
      %v2067 = vld [vmem:[%s780 + $0xa8] sm:$0xff]
      %v2068 = vld [vmem:[%s780 + $0xc8] sm:$0xff]
      %v2069 = vld [vmem:[%s780 + $0xe8] sm:$0xff]
      %v2070 = vld [vmem:[%s780 + $0x108] sm:$0xff]
      %v2071 = vld [vmem:[%s780 + $0x128] sm:$0xff]
      %v2072 = vld [vmem:[%s780 + $0x148] sm:$0xff]
      %v2073 = vld [vmem:[%s780 + $0x168] sm:$0xff]
      %v2074 = vld [vmem:[%s780 + $0x188] sm:$0xff]
      %v2075 = vld [vmem:[%s780 + $0x1a8] sm:$0xff]
      %v2076 = vld [vmem:[%s780 + $0x1c8] sm:$0xff]
      %v2077 = vld [vmem:[%s780 + $0x1e8] sm:$0xff]
      %v2078 = vld [vmem:[%s784 + $0x2] sm:$0x3]
      %v2080 = vlaneseq
      %v2081 = vshrl.u32 %v2080, 7
      %v2082 = vsub.s32 0, %v2081
      %v2083 = vrot.slane %v2078, %v2082
      %v2084 = vlaneseq
      %v2085 = vshrl.u32 %v2084, 7
      %v2086 = vsub.s32 1, %v2085
      %v2087 = vrot.slane %v2078, %v2086
      %v2106 = vunpack.c.l.b16 %v2062
      %v2107 = vunpack.c.h.b16 %v2062
      %v2108 = vunpack.c.l.b16 %v2063
      %v2109 = vunpack.c.h.b16 %v2063
      %v2110 = vunpack.c.l.b16 %v2064
      %v2111 = vunpack.c.h.b16 %v2064
      %v2112 = vunpack.c.l.b16 %v2065
      %v2113 = vunpack.c.h.b16 %v2065
      %v2114 = vunpack.c.l.b16 %v2066
      %v2115 = vunpack.c.h.b16 %v2066
      %v2116 = vunpack.c.l.b16 %v2067
      %v2117 = vunpack.c.h.b16 %v2067
      %v2118 = vunpack.c.l.b16 %v2068
      %v2119 = vunpack.c.h.b16 %v2068
      %v2120 = vunpack.c.l.b16 %v2069
      %v2121 = vunpack.c.h.b16 %v2069
      %v2122 = vunpack.c.l.b16 %v2070
      %v2123 = vunpack.c.h.b16 %v2070
      %v2124 = vunpack.c.l.b16 %v2071
      %v2125 = vunpack.c.h.b16 %v2071
      %v2126 = vunpack.c.l.b16 %v2072
      %v2127 = vunpack.c.h.b16 %v2072
      %v2128 = vunpack.c.l.b16 %v2073
      %v2129 = vunpack.c.h.b16 %v2073
      %v2130 = vunpack.c.l.b16 %v2074
      %v2131 = vunpack.c.h.b16 %v2074
      %v2132 = vunpack.c.l.b16 %v2075
      %v2133 = vunpack.c.h.b16 %v2075
      %v2134 = vunpack.c.l.b16 %v2076
      %v2135 = vunpack.c.h.b16 %v2076
      %v2136 = vunpack.c.l.b16 %v2077
      %v2137 = vunpack.c.h.b16 %v2077
      %v2138 = vpack.c.b16 %v2108, %v2106
      %v2139 = vpack.c.b16 %v2109, %v2107
      %v2140 = vpack.c.b16 %v2112, %v2110
      %v2141 = vpack.c.b16 %v2113, %v2111
      %v2142 = vpack.c.b16 %v2116, %v2114
      %v2143 = vpack.c.b16 %v2117, %v2115
      %v2144 = vpack.c.b16 %v2120, %v2118
      %v2145 = vpack.c.b16 %v2121, %v2119
      %v2146 = vpack.c.b16 %v2124, %v2122
      %v2147 = vpack.c.b16 %v2125, %v2123
      %v2148 = vpack.c.b16 %v2128, %v2126
      %v2149 = vpack.c.b16 %v2129, %v2127
      %v2150 = vpack.c.b16 %v2132, %v2130
      %v2151 = vpack.c.b16 %v2133, %v2131
      %v2152 = vpack.c.b16 %v2136, %v2134
      %v2153 = vpack.c.b16 %v2137, %v2135
      %2170 = vmatprep.subr.bf16.mxu0 %v2139
      %2171 = vmatpush1.bf16.msra.mxu0 %v2138
      %2172 = vmatprep.subr.bf16.mxu0 %v2141
      %2173 = vmatpush1.bf16.msra.mxu0 %v2140
      %2174 = vmatprep.subr.bf16.mxu0 %v2143
      %2175 = vmatpush1.bf16.msra.mxu0 %v2142
      %2176 = vmatprep.subr.bf16.mxu0 %v2145
      %2177 = vmatpush1.bf16.msra.mxu0 %v2144
      %2178 = vmatprep.subr.bf16.mxu0 %v2147
      %2179 = vmatpush1.bf16.msra.mxu0 %v2146
      %2180 = vmatprep.subr.bf16.mxu0 %v2149
      %2181 = vmatpush1.bf16.msra.mxu0 %v2148
      %2182 = vmatprep.subr.bf16.mxu0 %v2151
      %2183 = vmatpush1.bf16.msra.mxu0 %v2150
      %2184 = vmatprep.subr.bf16.mxu0 %v2153
      %2185 = vmatpush1.bf16.msra.mxu0 %v2152
      %2186 = vmatprep.subr.bf16.mxu0 0
      %2187 = vmatpush1.bf16.msra.mxu0 0
      %2188 = vmatprep.subr.bf16.mxu0 0
      %2189 = vmatpush1.bf16.msra.mxu0 0
      %2190 = vmatprep.subr.bf16.mxu0 0
      %2191 = vmatpush1.bf16.msra.mxu0 0
      %2192 = vmatprep.subr.bf16.mxu0 0
      %2193 = vmatpush1.bf16.msra.mxu0 0
      %2194 = vmatprep.subr.bf16.mxu0 0
      %2195 = vmatpush1.bf16.msra.mxu0 0
      %2196 = vmatprep.subr.bf16.mxu0 0
      %2197 = vmatpush1.bf16.msra.mxu0 0
      %2198 = vmatprep.subr.bf16.mxu0 0
      %2199 = vmatpush1.bf16.msra.mxu0 0
      %2200 = vmatprep.subr.bf16.mxu0 0
      %2201 = vmatpush1.bf16.msra.mxu0 0
      %2202 = vmatprep.mubr.bf16.mxu0 0
      %2203 = vmatmul.mubr.bf16.gmra.mrb[0].mxu0 %v1855
      %v2204 = vpop.f32.mrb[0].mxu0
      %v2205 = vadd.f32 %v2083, %v2204
      %v2206 = vpop.f32.mrb[0].mxu0
      %v2207 = vadd.f32 %v2087, %v2206
      %v2208 = vpop.f32.mrb[0].mxu0
      %v2209 = vadd.f32 %v2083, %v2208
      %v2210 = vpop.f32.mrb[0].mxu0
      %v2211 = vadd.f32 %v2087, %v2210
      %2212 = vmatprep.mubr.bf16.mxu0 0
      %2213 = vmatmul.mubr.bf16.gmra.mrb[0].mxu0 %v1856
      %v2214 = vpop.f32.mrb[0].mxu0
      %v2215 = vadd.f32 %v2083, %v2214
      %v2216 = vpop.f32.mrb[0].mxu0
      %v2217 = vadd.f32 %v2087, %v2216
      %v2218 = vpop.f32.mrb[0].mxu0
      %v2219 = vadd.f32 %v2083, %v2218
      %v2220 = vpop.f32.mrb[0].mxu0
      %v2221 = vadd.f32 %v2087, %v2220
      %2222 = vdwg.mxu0
      %v2223 = vmax.f32 %v2205, 0.0
      %v2224 = vmax.f32 %v2207, 0.0
      %v2225 = vmax.f32 %v2209, 0.0
      %v2226 = vmax.f32 %v2211, 0.0
      %v2227 = vmax.f32 %v2215, 0.0
      %v2228 = vmax.f32 %v2217, 0.0
      %v2229 = vmax.f32 %v2219, 0.0
      %v2230 = vmax.f32 %v2221, 0.0
      %v2231 = vpack.c.bf16 %v2225, %v2223
      %v2232 = vpack.c.bf16 %v2226, %v2224
      %v2233 = vpack.c.bf16 %v2229, %v2227
      %v2234 = vpack.c.bf16 %v2230, %v2228
      %v2235 = vld [vmem:[%s789 + $0x80] sm:$0xf]
      %v2236 = vld [vmem:[%s789 + $0x84] sm:$0xf]
      %v2237 = vld [vmem:[%s789 + $0x88] sm:$0xf]
      %v2238 = vld [vmem:[%s789 + $0x8c] sm:$0xf]
      %v2239 = vld [vmem:[%s789 + $0x90] sm:$0xf]
      %v2240 = vld [vmem:[%s789 + $0x94] sm:$0xf]
      %v2241 = vld [vmem:[%s789 + $0x98] sm:$0xf]
      %v2242 = vld [vmem:[%s789 + $0x9c] sm:$0xf]
      %v2243 = vld [vmem:[%s789 + $0xa0] sm:$0xf]
      %v2244 = vld [vmem:[%s789 + $0xa4] sm:$0xf]
      %v2245 = vld [vmem:[%s789 + $0xa8] sm:$0xf]
      %v2246 = vld [vmem:[%s789 + $0xac] sm:$0xf]
      %v2247 = vld [vmem:[%s789 + $0xb0] sm:$0xf]
      %v2248 = vld [vmem:[%s789 + $0xb4] sm:$0xf]
      %v2249 = vld [vmem:[%s789 + $0xb8] sm:$0xf]
      %v2250 = vld [vmem:[%s789 + $0xbc] sm:$0xf]
      %v2251 = vld [vmem:[%s789 + $0xc0] sm:$0xf]
      %v2252 = vld [vmem:[%s789 + $0xc4] sm:$0xf]
      %v2253 = vld [vmem:[%s789 + $0xc8] sm:$0xf]
      %v2254 = vld [vmem:[%s789 + $0xcc] sm:$0xf]
      %v2255 = vld [vmem:[%s789 + $0xd0] sm:$0xf]
      %v2256 = vld [vmem:[%s789 + $0xd4] sm:$0xf]
      %v2257 = vld [vmem:[%s789 + $0xd8] sm:$0xf]
      %v2258 = vld [vmem:[%s789 + $0xdc] sm:$0xf]
      %v2259 = vld [vmem:[%s789 + $0xe0] sm:$0xf]
      %v2260 = vld [vmem:[%s789 + $0xe4] sm:$0xf]
      %v2261 = vld [vmem:[%s789 + $0xe8] sm:$0xf]
      %v2262 = vld [vmem:[%s789 + $0xec] sm:$0xf]
      %v2263 = vld [vmem:[%s789 + $0xf0] sm:$0xf]
      %v2264 = vld [vmem:[%s789 + $0xf4] sm:$0xf]
      %v2265 = vld [vmem:[%s789 + $0xf8] sm:$0xf]
      %v2266 = vld [vmem:[%s789 + $0xfc] sm:$0xf]
      %v2299 = vunpack.c.l.b16 %v2235
      %v2300 = vunpack.c.l.b16 %v2236
      %v2301 = vunpack.c.l.b16 %v2237
      %v2302 = vunpack.c.l.b16 %v2238
      %v2303 = vunpack.c.l.b16 %v2239
      %v2304 = vunpack.c.l.b16 %v2240
      %v2305 = vunpack.c.l.b16 %v2241
      %v2306 = vunpack.c.l.b16 %v2242
      %v2307 = vunpack.c.l.b16 %v2243
      %v2308 = vunpack.c.l.b16 %v2244
      %v2309 = vunpack.c.l.b16 %v2245
      %v2310 = vunpack.c.l.b16 %v2246
      %v2311 = vunpack.c.l.b16 %v2247
      %v2312 = vunpack.c.l.b16 %v2248
      %v2313 = vunpack.c.l.b16 %v2249
      %v2314 = vunpack.c.l.b16 %v2250
      %v2315 = vunpack.c.l.b16 %v2251
      %v2316 = vunpack.c.l.b16 %v2252
      %v2317 = vunpack.c.l.b16 %v2253
      %v2318 = vunpack.c.l.b16 %v2254
      %v2319 = vunpack.c.l.b16 %v2255
      %v2320 = vunpack.c.l.b16 %v2256
      %v2321 = vunpack.c.l.b16 %v2257
      %v2322 = vunpack.c.l.b16 %v2258
      %v2323 = vunpack.c.l.b16 %v2259
      %v2324 = vunpack.c.l.b16 %v2260
      %v2325 = vunpack.c.l.b16 %v2261
      %v2326 = vunpack.c.l.b16 %v2262
      %v2327 = vunpack.c.l.b16 %v2263
      %v2328 = vunpack.c.l.b16 %v2264
      %v2329 = vunpack.c.l.b16 %v2265
      %v2330 = vunpack.c.l.b16 %v2266
      %v2331 = vpack.c.b16 %v2300, %v2299
      %v2332 = vpack.c.b16 %v2302, %v2301
      %v2333 = vpack.c.b16 %v2304, %v2303
      %v2334 = vpack.c.b16 %v2306, %v2305
      %v2335 = vpack.c.b16 %v2308, %v2307
      %v2336 = vpack.c.b16 %v2310, %v2309
      %v2337 = vpack.c.b16 %v2312, %v2311
      %v2338 = vpack.c.b16 %v2314, %v2313
      %v2339 = vpack.c.b16 %v2316, %v2315
      %v2340 = vpack.c.b16 %v2318, %v2317
      %v2341 = vpack.c.b16 %v2320, %v2319
      %v2342 = vpack.c.b16 %v2322, %v2321
      %v2343 = vpack.c.b16 %v2324, %v2323
      %v2344 = vpack.c.b16 %v2326, %v2325
      %v2345 = vpack.c.b16 %v2328, %v2327
      %v2346 = vpack.c.b16 %v2330, %v2329
      %2363 = vmatprep.subr.bf16.mxu0 0
      %2364 = vmatpush1.bf16.msra.mxu0 %v2331
      %2365 = vmatprep.subr.bf16.mxu0 0
      %2366 = vmatpush1.bf16.msra.mxu0 %v2332
      %2367 = vmatprep.subr.bf16.mxu0 0
      %2368 = vmatpush1.bf16.msra.mxu0 %v2333
      %2369 = vmatprep.subr.bf16.mxu0 0
      %2370 = vmatpush1.bf16.msra.mxu0 %v2334
      %2371 = vmatprep.subr.bf16.mxu0 0
      %2372 = vmatpush1.bf16.msra.mxu0 %v2335
      %2373 = vmatprep.subr.bf16.mxu0 0
      %2374 = vmatpush1.bf16.msra.mxu0 %v2336
      %2375 = vmatprep.subr.bf16.mxu0 0
      %2376 = vmatpush1.bf16.msra.mxu0 %v2337
      %2377 = vmatprep.subr.bf16.mxu0 0
      %2378 = vmatpush1.bf16.msra.mxu0 %v2338
      %2379 = vmatprep.subr.bf16.mxu0 0
      %2380 = vmatpush1.bf16.msra.mxu0 %v2339
      %2381 = vmatprep.subr.bf16.mxu0 0
      %2382 = vmatpush1.bf16.msra.mxu0 %v2340
      %2383 = vmatprep.subr.bf16.mxu0 0
      %2384 = vmatpush1.bf16.msra.mxu0 %v2341
      %2385 = vmatprep.subr.bf16.mxu0 0
      %2386 = vmatpush1.bf16.msra.mxu0 %v2342
      %2387 = vmatprep.subr.bf16.mxu0 0
      %2388 = vmatpush1.bf16.msra.mxu0 %v2343
      %2389 = vmatprep.subr.bf16.mxu0 0
      %2390 = vmatpush1.bf16.msra.mxu0 %v2344
      %2391 = vmatprep.subr.bf16.mxu0 0
      %2392 = vmatpush1.bf16.msra.mxu0 %v2345
      %2393 = vmatprep.subr.bf16.mxu0 0
      %2394 = vmatpush1.bf16.msra.mxu0 %v2346
      %2395 = vmatprep.mubr.bf16.mxu0 %v2232
      %2396 = vmatmul.mubr.bf16.gmra.mrb[0].mxu0 %v2231
      %v2397 = vpop.f32.mrb[0].mxu0
      %v2398 = vadd.f32 0.0, %v2397
      %v2399 = vpop.f32.mrb[0].mxu0
      %v2400 = vpop.f32.mrb[0].mxu0
      %v2401 = vadd.f32 0.0, %v2400
      %v2402 = vpop.f32.mrb[0].mxu0
      %2403 = vmatprep.mubr.bf16.mxu0 %v2234
      %2404 = vmatmul.mubr.bf16.gmra.mrb[0].mxu0 %v2233
      %v2405 = vpop.f32.mrb[0].mxu0
      %v2406 = vadd.f32 0.0, %v2405
      %v2407 = vpop.f32.mrb[0].mxu0
      %v2408 = vpop.f32.mrb[0].mxu0
      %v2409 = vadd.f32 0.0, %v2408
      %v2410 = vpop.f32.mrb[0].mxu0
      %2411 = vdwg.mxu0
      %v2444 = vunpack.c.l.b16 %v2030
      %v2445 = vunpack.c.l.b16 %v2031
      %v2446 = vunpack.c.l.b16 %v2032
      %v2447 = vunpack.c.l.b16 %v2033
      %v2448 = vunpack.c.l.b16 %v2034
      %v2449 = vunpack.c.l.b16 %v2035
      %v2450 = vunpack.c.l.b16 %v2036
      %v2451 = vunpack.c.l.b16 %v2037
      %v2452 = vunpack.c.l.b16 %v2038
      %v2453 = vunpack.c.l.b16 %v2039
      %v2454 = vunpack.c.l.b16 %v2040
      %v2455 = vunpack.c.l.b16 %v2041
      %v2456 = vunpack.c.l.b16 %v2042
      %v2457 = vunpack.c.l.b16 %v2043
      %v2458 = vunpack.c.l.b16 %v2044
      %v2459 = vunpack.c.l.b16 %v2045
      %v2460 = vunpack.c.l.b16 %v2046
      %v2461 = vunpack.c.l.b16 %v2047
      %v2462 = vunpack.c.l.b16 %v2048
      %v2463 = vunpack.c.l.b16 %v2049
      %v2464 = vunpack.c.l.b16 %v2050
      %v2465 = vunpack.c.l.b16 %v2051
      %v2466 = vunpack.c.l.b16 %v2052
      %v2467 = vunpack.c.l.b16 %v2053
      %v2468 = vunpack.c.l.b16 %v2054
      %v2469 = vunpack.c.l.b16 %v2055
      %v2470 = vunpack.c.l.b16 %v2056
      %v2471 = vunpack.c.l.b16 %v2057
      %v2472 = vunpack.c.l.b16 %v2058
      %v2473 = vunpack.c.l.b16 %v2059
      %v2474 = vunpack.c.l.b16 %v2060
      %v2475 = vunpack.c.l.b16 %v2061
      %v2476 = vpack.c.b16 %v2445, %v2444
      %v2477 = vpack.c.b16 %v2447, %v2446
      %v2478 = vpack.c.b16 %v2449, %v2448
      %v2479 = vpack.c.b16 %v2451, %v2450
      %v2480 = vpack.c.b16 %v2453, %v2452
      %v2481 = vpack.c.b16 %v2455, %v2454
      %v2482 = vpack.c.b16 %v2457, %v2456
      %v2483 = vpack.c.b16 %v2459, %v2458
      %v2484 = vpack.c.b16 %v2461, %v2460
      %v2485 = vpack.c.b16 %v2463, %v2462
      %v2486 = vpack.c.b16 %v2465, %v2464
      %v2487 = vpack.c.b16 %v2467, %v2466
      %v2488 = vpack.c.b16 %v2469, %v2468
      %v2489 = vpack.c.b16 %v2471, %v2470
      %v2490 = vpack.c.b16 %v2473, %v2472
      %v2491 = vpack.c.b16 %v2475, %v2474
      %2508 = vmatprep.subr.bf16.mxu0 0
      %2509 = vmatpush1.bf16.msra.mxu0 %v2476
      %2510 = vmatprep.subr.bf16.mxu0 0
      %2511 = vmatpush1.bf16.msra.mxu0 %v2477
      %2512 = vmatprep.subr.bf16.mxu0 0
      %2513 = vmatpush1.bf16.msra.mxu0 %v2478
      %2514 = vmatprep.subr.bf16.mxu0 0
      %2515 = vmatpush1.bf16.msra.mxu0 %v2479
      %2516 = vmatprep.subr.bf16.mxu0 0
      %2517 = vmatpush1.bf16.msra.mxu0 %v2480
      %2518 = vmatprep.subr.bf16.mxu0 0
      %2519 = vmatpush1.bf16.msra.mxu0 %v2481
      %2520 = vmatprep.subr.bf16.mxu0 0
      %2521 = vmatpush1.bf16.msra.mxu0 %v2482
      %2522 = vmatprep.subr.bf16.mxu0 0
      %2523 = vmatpush1.bf16.msra.mxu0 %v2483
      %2524 = vmatprep.subr.bf16.mxu0 0
      %2525 = vmatpush1.bf16.msra.mxu0 %v2484
      %2526 = vmatprep.subr.bf16.mxu0 0
      %2527 = vmatpush1.bf16.msra.mxu0 %v2485
      %2528 = vmatprep.subr.bf16.mxu0 0
      %2529 = vmatpush1.bf16.msra.mxu0 %v2486
      %2530 = vmatprep.subr.bf16.mxu0 0
      %2531 = vmatpush1.bf16.msra.mxu0 %v2487
      %2532 = vmatprep.subr.bf16.mxu0 0
      %2533 = vmatpush1.bf16.msra.mxu0 %v2488
      %2534 = vmatprep.subr.bf16.mxu0 0
      %2535 = vmatpush1.bf16.msra.mxu0 %v2489
      %2536 = vmatprep.subr.bf16.mxu0 0
      %2537 = vmatpush1.bf16.msra.mxu0 %v2490
      %2538 = vmatprep.subr.bf16.mxu0 0
      %2539 = vmatpush1.bf16.msra.mxu0 %v2491
      %2540 = vmatprep.mubr.bf16.mxu0 %v2027
      %2541 = vmatmul.mubr.bf16.gmra.mrb[0].mxu0 %v2026
      %v2542 = vpop.f32.mrb[0].mxu0
      %v2543 = vadd.f32 %v2398, %v2542
      %v2544 = vpop.f32.mrb[0].mxu0
      %v2545 = vpop.f32.mrb[0].mxu0
      %v2546 = vadd.f32 %v2401, %v2545
      %v2547 = vpop.f32.mrb[0].mxu0
      %2548 = vmatprep.mubr.bf16.mxu0 %v2029
      %2549 = vmatmul.mubr.bf16.gmra.mrb[0].mxu0 %v2028
      %v2550 = vpop.f32.mrb[0].mxu0
      %v2551 = vadd.f32 %v2406, %v2550
      %v2552 = vpop.f32.mrb[0].mxu0
      %v2553 = vpop.f32.mrb[0].mxu0
      %v2554 = vadd.f32 %v2409, %v2553
      %v2555 = vpop.f32.mrb[0].mxu0
      %2556 = vdwg.mxu0
      %v2557 = vld [vmem:[%s780 + $0x10] sm:$0xff]
      %v2558 = vld [vmem:[%s780 + $0x30] sm:$0xff]
      %v2559 = vld [vmem:[%s780 + $0x50] sm:$0xff]
      %v2560 = vld [vmem:[%s780 + $0x70] sm:$0xff]
      %v2561 = vld [vmem:[%s780 + $0x90] sm:$0xff]
      %v2562 = vld [vmem:[%s780 + $0xb0] sm:$0xff]
      %v2563 = vld [vmem:[%s780 + $0xd0] sm:$0xff]
      %v2564 = vld [vmem:[%s780 + $0xf0] sm:$0xff]
      %v2565 = vld [vmem:[%s780 + $0x110] sm:$0xff]
      %v2566 = vld [vmem:[%s780 + $0x130] sm:$0xff]
      %v2567 = vld [vmem:[%s780 + $0x150] sm:$0xff]
      %v2568 = vld [vmem:[%s780 + $0x170] sm:$0xff]
      %v2569 = vld [vmem:[%s780 + $0x190] sm:$0xff]
      %v2570 = vld [vmem:[%s780 + $0x1b0] sm:$0xff]
      %v2571 = vld [vmem:[%s780 + $0x1d0] sm:$0xff]
      %v2572 = vld [vmem:[%s780 + $0x1f0] sm:$0xff]
      %v2573 = vld [vmem:[%s784 + $0x4] sm:$0x3]
      %v2575 = vlaneseq
      %v2576 = vshrl.u32 %v2575, 7
      %v2577 = vsub.s32 0, %v2576
      %v2578 = vrot.slane %v2573, %v2577
      %v2579 = vlaneseq
      %v2580 = vshrl.u32 %v2579, 7
      %v2581 = vsub.s32 1, %v2580
      %v2582 = vrot.slane %v2573, %v2581
      %v2601 = vunpack.c.l.b16 %v2557
      %v2602 = vunpack.c.h.b16 %v2557
      %v2603 = vunpack.c.l.b16 %v2558
      %v2604 = vunpack.c.h.b16 %v2558
      %v2605 = vunpack.c.l.b16 %v2559
      %v2606 = vunpack.c.h.b16 %v2559
      %v2607 = vunpack.c.l.b16 %v2560
      %v2608 = vunpack.c.h.b16 %v2560
      %v2609 = vunpack.c.l.b16 %v2561
      %v2610 = vunpack.c.h.b16 %v2561
      %v2611 = vunpack.c.l.b16 %v2562
      %v2612 = vunpack.c.h.b16 %v2562
      %v2613 = vunpack.c.l.b16 %v2563
      %v2614 = vunpack.c.h.b16 %v2563
      %v2615 = vunpack.c.l.b16 %v2564
      %v2616 = vunpack.c.h.b16 %v2564
      %v2617 = vunpack.c.l.b16 %v2565
      %v2618 = vunpack.c.h.b16 %v2565
      %v2619 = vunpack.c.l.b16 %v2566
      %v2620 = vunpack.c.h.b16 %v2566
      %v2621 = vunpack.c.l.b16 %v2567
      %v2622 = vunpack.c.h.b16 %v2567
      %v2623 = vunpack.c.l.b16 %v2568
      %v2624 = vunpack.c.h.b16 %v2568
      %v2625 = vunpack.c.l.b16 %v2569
      %v2626 = vunpack.c.h.b16 %v2569
      %v2627 = vunpack.c.l.b16 %v2570
      %v2628 = vunpack.c.h.b16 %v2570
      %v2629 = vunpack.c.l.b16 %v2571
      %v2630 = vunpack.c.h.b16 %v2571
      %v2631 = vunpack.c.l.b16 %v2572
      %v2632 = vunpack.c.h.b16 %v2572
      %v2633 = vpack.c.b16 %v2603, %v2601
      %v2634 = vpack.c.b16 %v2604, %v2602
      %v2635 = vpack.c.b16 %v2607, %v2605
      %v2636 = vpack.c.b16 %v2608, %v2606
      %v2637 = vpack.c.b16 %v2611, %v2609
      %v2638 = vpack.c.b16 %v2612, %v2610
      %v2639 = vpack.c.b16 %v2615, %v2613
      %v2640 = vpack.c.b16 %v2616, %v2614
      %v2641 = vpack.c.b16 %v2619, %v2617
      %v2642 = vpack.c.b16 %v2620, %v2618
      %v2643 = vpack.c.b16 %v2623, %v2621
      %v2644 = vpack.c.b16 %v2624, %v2622
      %v2645 = vpack.c.b16 %v2627, %v2625
      %v2646 = vpack.c.b16 %v2628, %v2626
      %v2647 = vpack.c.b16 %v2631, %v2629
      %v2648 = vpack.c.b16 %v2632, %v2630
      %2665 = vmatprep.subr.bf16.mxu0 %v2634
      %2666 = vmatpush1.bf16.msra.mxu0 %v2633
      %2667 = vmatprep.subr.bf16.mxu0 %v2636
      %2668 = vmatpush1.bf16.msra.mxu0 %v2635
      %2669 = vmatprep.subr.bf16.mxu0 %v2638
      %2670 = vmatpush1.bf16.msra.mxu0 %v2637
      %2671 = vmatprep.subr.bf16.mxu0 %v2640
      %2672 = vmatpush1.bf16.msra.mxu0 %v2639
      %2673 = vmatprep.subr.bf16.mxu0 %v2642
      %2674 = vmatpush1.bf16.msra.mxu0 %v2641
      %2675 = vmatprep.subr.bf16.mxu0 %v2644
      %2676 = vmatpush1.bf16.msra.mxu0 %v2643
      %2677 = vmatprep.subr.bf16.mxu0 %v2646
      %2678 = vmatpush1.bf16.msra.mxu0 %v2645
      %2679 = vmatprep.subr.bf16.mxu0 %v2648
      %2680 = vmatpush1.bf16.msra.mxu0 %v2647
      %2681 = vmatprep.subr.bf16.mxu0 0
      %2682 = vmatpush1.bf16.msra.mxu0 0
      %2683 = vmatprep.subr.bf16.mxu0 0
      %2684 = vmatpush1.bf16.msra.mxu0 0
      %2685 = vmatprep.subr.bf16.mxu0 0
      %2686 = vmatpush1.bf16.msra.mxu0 0
      %2687 = vmatprep.subr.bf16.mxu0 0
      %2688 = vmatpush1.bf16.msra.mxu0 0
      %2689 = vmatprep.subr.bf16.mxu0 0
      %2690 = vmatpush1.bf16.msra.mxu0 0
      %2691 = vmatprep.subr.bf16.mxu0 0
      %2692 = vmatpush1.bf16.msra.mxu0 0
      %2693 = vmatprep.subr.bf16.mxu0 0
      %2694 = vmatpush1.bf16.msra.mxu0 0
      %2695 = vmatprep.subr.bf16.mxu0 0
      %2696 = vmatpush1.bf16.msra.mxu0 0
      %2697 = vmatprep.mubr.bf16.mxu0 0
      %2698 = vmatmul.mubr.bf16.gmra.mrb[0].mxu0 %v1855
      %v2699 = vpop.f32.mrb[0].mxu0
      %v2700 = vadd.f32 %v2578, %v2699
      %v2701 = vpop.f32.mrb[0].mxu0
      %v2702 = vadd.f32 %v2582, %v2701
      %v2703 = vpop.f32.mrb[0].mxu0
      %v2704 = vadd.f32 %v2578, %v2703
      %v2705 = vpop.f32.mrb[0].mxu0
      %v2706 = vadd.f32 %v2582, %v2705
      %2707 = vmatprep.mubr.bf16.mxu0 0
      %2708 = vmatmul.mubr.bf16.gmra.mrb[0].mxu0 %v1856
      %v2709 = vpop.f32.mrb[0].mxu0
      %v2710 = vadd.f32 %v2578, %v2709
      %v2711 = vpop.f32.mrb[0].mxu0
      %v2712 = vadd.f32 %v2582, %v2711
      %v2713 = vpop.f32.mrb[0].mxu0
      %v2714 = vadd.f32 %v2578, %v2713
      %v2715 = vpop.f32.mrb[0].mxu0
      %v2716 = vadd.f32 %v2582, %v2715
      %2717 = vdwg.mxu0
      %v2718 = vmax.f32 %v2700, 0.0
      %v2719 = vmax.f32 %v2702, 0.0
      %v2720 = vmax.f32 %v2704, 0.0
      %v2721 = vmax.f32 %v2706, 0.0
      %v2722 = vmax.f32 %v2710, 0.0
      %v2723 = vmax.f32 %v2712, 0.0
      %v2724 = vmax.f32 %v2714, 0.0
      %v2725 = vmax.f32 %v2716, 0.0
      %v2726 = vpack.c.bf16 %v2720, %v2718
      %v2727 = vpack.c.bf16 %v2721, %v2719
      %v2728 = vpack.c.bf16 %v2724, %v2722
      %v2729 = vpack.c.bf16 %v2725, %v2723
      %v2730 = vld [vmem:[%s789 + $0x100] sm:$0xf]
      %v2731 = vld [vmem:[%s789 + $0x104] sm:$0xf]
      %v2732 = vld [vmem:[%s789 + $0x108] sm:$0xf]
      %v2733 = vld [vmem:[%s789 + $0x10c] sm:$0xf]
      %v2734 = vld [vmem:[%s789 + $0x110] sm:$0xf]
      %v2735 = vld [vmem:[%s789 + $0x114] sm:$0xf]
      %v2736 = vld [vmem:[%s789 + $0x118] sm:$0xf]
      %v2737 = vld [vmem:[%s789 + $0x11c] sm:$0xf]
      %v2738 = vld [vmem:[%s789 + $0x120] sm:$0xf]
      %v2739 = vld [vmem:[%s789 + $0x124] sm:$0xf]
      %v2740 = vld [vmem:[%s789 + $0x128] sm:$0xf]
      %v2741 = vld [vmem:[%s789 + $0x12c] sm:$0xf]
      %v2742 = vld [vmem:[%s789 + $0x130] sm:$0xf]
      %v2743 = vld [vmem:[%s789 + $0x134] sm:$0xf]
      %v2744 = vld [vmem:[%s789 + $0x138] sm:$0xf]
      %v2745 = vld [vmem:[%s789 + $0x13c] sm:$0xf]
      %v2746 = vld [vmem:[%s789 + $0x140] sm:$0xf]
      %v2747 = vld [vmem:[%s789 + $0x144] sm:$0xf]
      %v2748 = vld [vmem:[%s789 + $0x148] sm:$0xf]
      %v2749 = vld [vmem:[%s789 + $0x14c] sm:$0xf]
      %v2750 = vld [vmem:[%s789 + $0x150] sm:$0xf]
      %v2751 = vld [vmem:[%s789 + $0x154] sm:$0xf]
      %v2752 = vld [vmem:[%s789 + $0x158] sm:$0xf]
      %v2753 = vld [vmem:[%s789 + $0x15c] sm:$0xf]
      %v2754 = vld [vmem:[%s789 + $0x160] sm:$0xf]
      %v2755 = vld [vmem:[%s789 + $0x164] sm:$0xf]
      %v2756 = vld [vmem:[%s789 + $0x168] sm:$0xf]
      %v2757 = vld [vmem:[%s789 + $0x16c] sm:$0xf]
      %v2758 = vld [vmem:[%s789 + $0x170] sm:$0xf]
      %v2759 = vld [vmem:[%s789 + $0x174] sm:$0xf]
      %v2760 = vld [vmem:[%s789 + $0x178] sm:$0xf]
      %v2761 = vld [vmem:[%s789 + $0x17c] sm:$0xf]
      %v2794 = vunpack.c.l.b16 %v2730
      %v2795 = vunpack.c.l.b16 %v2731
      %v2796 = vunpack.c.l.b16 %v2732
      %v2797 = vunpack.c.l.b16 %v2733
      %v2798 = vunpack.c.l.b16 %v2734
      %v2799 = vunpack.c.l.b16 %v2735
      %v2800 = vunpack.c.l.b16 %v2736
      %v2801 = vunpack.c.l.b16 %v2737
      %v2802 = vunpack.c.l.b16 %v2738
      %v2803 = vunpack.c.l.b16 %v2739
      %v2804 = vunpack.c.l.b16 %v2740
      %v2805 = vunpack.c.l.b16 %v2741
      %v2806 = vunpack.c.l.b16 %v2742
      %v2807 = vunpack.c.l.b16 %v2743
      %v2808 = vunpack.c.l.b16 %v2744
      %v2809 = vunpack.c.l.b16 %v2745
      %v2810 = vunpack.c.l.b16 %v2746
      %v2811 = vunpack.c.l.b16 %v2747
      %v2812 = vunpack.c.l.b16 %v2748
      %v2813 = vunpack.c.l.b16 %v2749
      %v2814 = vunpack.c.l.b16 %v2750
      %v2815 = vunpack.c.l.b16 %v2751
      %v2816 = vunpack.c.l.b16 %v2752
      %v2817 = vunpack.c.l.b16 %v2753
      %v2818 = vunpack.c.l.b16 %v2754
      %v2819 = vunpack.c.l.b16 %v2755
      %v2820 = vunpack.c.l.b16 %v2756
      %v2821 = vunpack.c.l.b16 %v2757
      %v2822 = vunpack.c.l.b16 %v2758
      %v2823 = vunpack.c.l.b16 %v2759
      %v2824 = vunpack.c.l.b16 %v2760
      %v2825 = vunpack.c.l.b16 %v2761
      %v2826 = vpack.c.b16 %v2795, %v2794
      %v2827 = vpack.c.b16 %v2797, %v2796
      %v2828 = vpack.c.b16 %v2799, %v2798
      %v2829 = vpack.c.b16 %v2801, %v2800
      %v2830 = vpack.c.b16 %v2803, %v2802
      %v2831 = vpack.c.b16 %v2805, %v2804
      %v2832 = vpack.c.b16 %v2807, %v2806
      %v2833 = vpack.c.b16 %v2809, %v2808
      %v2834 = vpack.c.b16 %v2811, %v2810
      %v2835 = vpack.c.b16 %v2813, %v2812
      %v2836 = vpack.c.b16 %v2815, %v2814
      %v2837 = vpack.c.b16 %v2817, %v2816
      %v2838 = vpack.c.b16 %v2819, %v2818
      %v2839 = vpack.c.b16 %v2821, %v2820
      %v2840 = vpack.c.b16 %v2823, %v2822
      %v2841 = vpack.c.b16 %v2825, %v2824
      %2858 = vmatprep.subr.bf16.mxu0 0
      %2859 = vmatpush1.bf16.msra.mxu0 %v2826
      %2860 = vmatprep.subr.bf16.mxu0 0
      %2861 = vmatpush1.bf16.msra.mxu0 %v2827
      %2862 = vmatprep.subr.bf16.mxu0 0
      %2863 = vmatpush1.bf16.msra.mxu0 %v2828
      %2864 = vmatprep.subr.bf16.mxu0 0
      %2865 = vmatpush1.bf16.msra.mxu0 %v2829
      %2866 = vmatprep.subr.bf16.mxu0 0
      %2867 = vmatpush1.bf16.msra.mxu0 %v2830
      %2868 = vmatprep.subr.bf16.mxu0 0
      %2869 = vmatpush1.bf16.msra.mxu0 %v2831
      %2870 = vmatprep.subr.bf16.mxu0 0
      %2871 = vmatpush1.bf16.msra.mxu0 %v2832
      %2872 = vmatprep.subr.bf16.mxu0 0
      %2873 = vmatpush1.bf16.msra.mxu0 %v2833
      %2874 = vmatprep.subr.bf16.mxu0 0
      %2875 = vmatpush1.bf16.msra.mxu0 %v2834
      %2876 = vmatprep.subr.bf16.mxu0 0
      %2877 = vmatpush1.bf16.msra.mxu0 %v2835
      %2878 = vmatprep.subr.bf16.mxu0 0
      %2879 = vmatpush1.bf16.msra.mxu0 %v2836
      %2880 = vmatprep.subr.bf16.mxu0 0
      %2881 = vmatpush1.bf16.msra.mxu0 %v2837
      %2882 = vmatprep.subr.bf16.mxu0 0
      %2883 = vmatpush1.bf16.msra.mxu0 %v2838
      %2884 = vmatprep.subr.bf16.mxu0 0
      %2885 = vmatpush1.bf16.msra.mxu0 %v2839
      %2886 = vmatprep.subr.bf16.mxu0 0
      %2887 = vmatpush1.bf16.msra.mxu0 %v2840
      %2888 = vmatprep.subr.bf16.mxu0 0
      %2889 = vmatpush1.bf16.msra.mxu0 %v2841
      %2890 = vmatprep.mubr.bf16.mxu0 %v2727
      %2891 = vmatmul.mubr.bf16.gmra.mrb[0].mxu0 %v2726
      %v2892 = vpop.f32.mrb[0].mxu0
      %v2893 = vadd.f32 0.0, %v2892
      %v2894 = vpop.f32.mrb[0].mxu0
      %v2895 = vpop.f32.mrb[0].mxu0
      %v2896 = vadd.f32 0.0, %v2895
      %v2897 = vpop.f32.mrb[0].mxu0
      %2898 = vmatprep.mubr.bf16.mxu0 %v2729
      %2899 = vmatmul.mubr.bf16.gmra.mrb[0].mxu0 %v2728
      %v2900 = vpop.f32.mrb[0].mxu0
      %v2901 = vadd.f32 0.0, %v2900
      %v2902 = vpop.f32.mrb[0].mxu0
      %v2903 = vpop.f32.mrb[0].mxu0
      %v2904 = vadd.f32 0.0, %v2903
      %v2905 = vpop.f32.mrb[0].mxu0
      %2906 = vdwg.mxu0
      %v2907 = vadd.f32 %v2543, %v2893
      %v2908 = vadd.f32 %v2546, %v2896
      %v2909 = vadd.f32 %v2551, %v2901
      %v2910 = vadd.f32 %v2554, %v2904
      %v2911 = vld [vmem:[%s780 + $0x18] sm:$0xff]
      %v2912 = vld [vmem:[%s780 + $0x38] sm:$0xff]
      %v2913 = vld [vmem:[%s780 + $0x58] sm:$0xff]
      %v2914 = vld [vmem:[%s780 + $0x78] sm:$0xff]
      %v2915 = vld [vmem:[%s780 + $0x98] sm:$0xff]
      %v2916 = vld [vmem:[%s780 + $0xb8] sm:$0xff]
      %v2917 = vld [vmem:[%s780 + $0xd8] sm:$0xff]
      %v2918 = vld [vmem:[%s780 + $0xf8] sm:$0xff]
      %v2919 = vld [vmem:[%s780 + $0x118] sm:$0xff]
      %v2920 = vld [vmem:[%s780 + $0x138] sm:$0xff]
      %v2921 = vld [vmem:[%s780 + $0x158] sm:$0xff]
      %v2922 = vld [vmem:[%s780 + $0x178] sm:$0xff]
      %v2923 = vld [vmem:[%s780 + $0x198] sm:$0xff]
      %v2924 = vld [vmem:[%s780 + $0x1b8] sm:$0xff]
      %v2925 = vld [vmem:[%s780 + $0x1d8] sm:$0xff]
      %v2926 = vld [vmem:[%s780 + $0x1f8] sm:$0xff]
      %v2927 = vld [vmem:[%s784 + $0x6] sm:$0x3]
      %v2929 = vlaneseq
      %v2930 = vshrl.u32 %v2929, 7
      %v2931 = vsub.s32 0, %v2930
      %v2932 = vrot.slane %v2927, %v2931
      %v2933 = vlaneseq
      %v2934 = vshrl.u32 %v2933, 7
      %v2935 = vsub.s32 1, %v2934
      %v2936 = vrot.slane %v2927, %v2935
      %v2955 = vunpack.c.l.b16 %v2911
      %v2956 = vunpack.c.h.b16 %v2911
      %v2957 = vunpack.c.l.b16 %v2912
      %v2958 = vunpack.c.h.b16 %v2912
      %v2959 = vunpack.c.l.b16 %v2913
      %v2960 = vunpack.c.h.b16 %v2913
      %v2961 = vunpack.c.l.b16 %v2914
      %v2962 = vunpack.c.h.b16 %v2914
      %v2963 = vunpack.c.l.b16 %v2915
      %v2964 = vunpack.c.h.b16 %v2915
      %v2965 = vunpack.c.l.b16 %v2916
      %v2966 = vunpack.c.h.b16 %v2916
      %v2967 = vunpack.c.l.b16 %v2917
      %v2968 = vunpack.c.h.b16 %v2917
      %v2969 = vunpack.c.l.b16 %v2918
      %v2970 = vunpack.c.h.b16 %v2918
      %v2971 = vunpack.c.l.b16 %v2919
      %v2972 = vunpack.c.h.b16 %v2919
      %v2973 = vunpack.c.l.b16 %v2920
      %v2974 = vunpack.c.h.b16 %v2920
      %v2975 = vunpack.c.l.b16 %v2921
      %v2976 = vunpack.c.h.b16 %v2921
      %v2977 = vunpack.c.l.b16 %v2922
      %v2978 = vunpack.c.h.b16 %v2922
      %v2979 = vunpack.c.l.b16 %v2923
      %v2980 = vunpack.c.h.b16 %v2923
      %v2981 = vunpack.c.l.b16 %v2924
      %v2982 = vunpack.c.h.b16 %v2924
      %v2983 = vunpack.c.l.b16 %v2925
      %v2984 = vunpack.c.h.b16 %v2925
      %v2985 = vunpack.c.l.b16 %v2926
      %v2986 = vunpack.c.h.b16 %v2926
      %v2987 = vpack.c.b16 %v2957, %v2955
      %v2988 = vpack.c.b16 %v2958, %v2956
      %v2989 = vpack.c.b16 %v2961, %v2959
      %v2990 = vpack.c.b16 %v2962, %v2960
      %v2991 = vpack.c.b16 %v2965, %v2963
      %v2992 = vpack.c.b16 %v2966, %v2964
      %v2993 = vpack.c.b16 %v2969, %v2967
      %v2994 = vpack.c.b16 %v2970, %v2968
      %v2995 = vpack.c.b16 %v2973, %v2971
      %v2996 = vpack.c.b16 %v2974, %v2972
      %v2997 = vpack.c.b16 %v2977, %v2975
      %v2998 = vpack.c.b16 %v2978, %v2976
      %v2999 = vpack.c.b16 %v2981, %v2979
      %v3000 = vpack.c.b16 %v2982, %v2980
      %v3001 = vpack.c.b16 %v2985, %v2983
      %v3002 = vpack.c.b16 %v2986, %v2984
      %3019 = vmatprep.subr.bf16.mxu0 %v2988
      %3020 = vmatpush1.bf16.msra.mxu0 %v2987
      %3021 = vmatprep.subr.bf16.mxu0 %v2990
      %3022 = vmatpush1.bf16.msra.mxu0 %v2989
      %3023 = vmatprep.subr.bf16.mxu0 %v2992
      %3024 = vmatpush1.bf16.msra.mxu0 %v2991
      %3025 = vmatprep.subr.bf16.mxu0 %v2994
      %3026 = vmatpush1.bf16.msra.mxu0 %v2993
      %3027 = vmatprep.subr.bf16.mxu0 %v2996
      %3028 = vmatpush1.bf16.msra.mxu0 %v2995
      %3029 = vmatprep.subr.bf16.mxu0 %v2998
      %3030 = vmatpush1.bf16.msra.mxu0 %v2997
      %3031 = vmatprep.subr.bf16.mxu0 %v3000
      %3032 = vmatpush1.bf16.msra.mxu0 %v2999
      %3033 = vmatprep.subr.bf16.mxu0 %v3002
      %3034 = vmatpush1.bf16.msra.mxu0 %v3001
      %3035 = vmatprep.subr.bf16.mxu0 0
      %3036 = vmatpush1.bf16.msra.mxu0 0
      %3037 = vmatprep.subr.bf16.mxu0 0
      %3038 = vmatpush1.bf16.msra.mxu0 0
      %3039 = vmatprep.subr.bf16.mxu0 0
      %3040 = vmatpush1.bf16.msra.mxu0 0
      %3041 = vmatprep.subr.bf16.mxu0 0
      %3042 = vmatpush1.bf16.msra.mxu0 0
      %3043 = vmatprep.subr.bf16.mxu0 0
      %3044 = vmatpush1.bf16.msra.mxu0 0
      %3045 = vmatprep.subr.bf16.mxu0 0
      %3046 = vmatpush1.bf16.msra.mxu0 0
      %3047 = vmatprep.subr.bf16.mxu0 0
      %3048 = vmatpush1.bf16.msra.mxu0 0
      %3049 = vmatprep.subr.bf16.mxu0 0
      %3050 = vmatpush1.bf16.msra.mxu0 0
      %3051 = vmatprep.mubr.bf16.mxu0 0
      %3052 = vmatmul.mubr.bf16.gmra.mrb[0].mxu0 %v1855
      %v3053 = vpop.f32.mrb[0].mxu0
      %v3054 = vadd.f32 %v2932, %v3053
      %v3055 = vpop.f32.mrb[0].mxu0
      %v3056 = vadd.f32 %v2936, %v3055
      %v3057 = vpop.f32.mrb[0].mxu0
      %v3058 = vadd.f32 %v2932, %v3057
      %v3059 = vpop.f32.mrb[0].mxu0
      %v3060 = vadd.f32 %v2936, %v3059
      %3061 = vmatprep.mubr.bf16.mxu0 0
      %3062 = vmatmul.mubr.bf16.gmra.mrb[0].mxu0 %v1856
      %v3063 = vpop.f32.mrb[0].mxu0
      %v3064 = vadd.f32 %v2932, %v3063
      %v3065 = vpop.f32.mrb[0].mxu0
      %v3066 = vadd.f32 %v2936, %v3065
      %v3067 = vpop.f32.mrb[0].mxu0
      %v3068 = vadd.f32 %v2932, %v3067
      %v3069 = vpop.f32.mrb[0].mxu0
      %v3070 = vadd.f32 %v2936, %v3069
      %3071 = vdwg.mxu0
      %v3072 = vmax.f32 %v3054, 0.0
      %v3073 = vmax.f32 %v3056, 0.0
      %v3074 = vmax.f32 %v3058, 0.0
      %v3075 = vmax.f32 %v3060, 0.0
      %v3076 = vmax.f32 %v3064, 0.0
      %v3077 = vmax.f32 %v3066, 0.0
      %v3078 = vmax.f32 %v3068, 0.0
      %v3079 = vmax.f32 %v3070, 0.0
      %v3080 = vpack.c.bf16 %v3074, %v3072
      %v3081 = vpack.c.bf16 %v3075, %v3073
      %v3082 = vpack.c.bf16 %v3078, %v3076
      %v3083 = vpack.c.bf16 %v3079, %v3077
      %v3084 = vld [vmem:[%s789 + $0x180] sm:$0xf]
      %v3085 = vld [vmem:[%s789 + $0x184] sm:$0xf]
      %v3086 = vld [vmem:[%s789 + $0x188] sm:$0xf]
      %v3087 = vld [vmem:[%s789 + $0x18c] sm:$0xf]
      %v3088 = vld [vmem:[%s789 + $0x190] sm:$0xf]
      %v3089 = vld [vmem:[%s789 + $0x194] sm:$0xf]
      %v3090 = vld [vmem:[%s789 + $0x198] sm:$0xf]
      %v3091 = vld [vmem:[%s789 + $0x19c] sm:$0xf]
      %v3092 = vld [vmem:[%s789 + $0x1a0] sm:$0xf]
      %v3093 = vld [vmem:[%s789 + $0x1a4] sm:$0xf]
      %v3094 = vld [vmem:[%s789 + $0x1a8] sm:$0xf]
      %v3095 = vld [vmem:[%s789 + $0x1ac] sm:$0xf]
      %v3096 = vld [vmem:[%s789 + $0x1b0] sm:$0xf]
      %v3097 = vld [vmem:[%s789 + $0x1b4] sm:$0xf]
      %v3098 = vld [vmem:[%s789 + $0x1b8] sm:$0xf]
      %v3099 = vld [vmem:[%s789 + $0x1bc] sm:$0xf]
      %v3100 = vld [vmem:[%s789 + $0x1c0] sm:$0xf]
      %v3101 = vld [vmem:[%s789 + $0x1c4] sm:$0xf]
      %v3102 = vld [vmem:[%s789 + $0x1c8] sm:$0xf]
      %v3103 = vld [vmem:[%s789 + $0x1cc] sm:$0xf]
      %v3104 = vld [vmem:[%s789 + $0x1d0] sm:$0xf]
      %v3105 = vld [vmem:[%s789 + $0x1d4] sm:$0xf]
      %v3106 = vld [vmem:[%s789 + $0x1d8] sm:$0xf]
      %v3107 = vld [vmem:[%s789 + $0x1dc] sm:$0xf]
      %v3108 = vld [vmem:[%s789 + $0x1e0] sm:$0xf]
      %v3109 = vld [vmem:[%s789 + $0x1e4] sm:$0xf]
      %v3110 = vld [vmem:[%s789 + $0x1e8] sm:$0xf]
      %v3111 = vld [vmem:[%s789 + $0x1ec] sm:$0xf]
      %v3112 = vld [vmem:[%s789 + $0x1f0] sm:$0xf]
      %v3113 = vld [vmem:[%s789 + $0x1f4] sm:$0xf]
      %v3114 = vld [vmem:[%s789 + $0x1f8] sm:$0xf]
      %v3115 = vld [vmem:[%s789 + $0x1fc] sm:$0xf]
      %v3148 = vunpack.c.l.b16 %v3084
      %v3149 = vunpack.c.l.b16 %v3085
      %v3150 = vunpack.c.l.b16 %v3086
      %v3151 = vunpack.c.l.b16 %v3087
      %v3152 = vunpack.c.l.b16 %v3088
      %v3153 = vunpack.c.l.b16 %v3089
      %v3154 = vunpack.c.l.b16 %v3090
      %v3155 = vunpack.c.l.b16 %v3091
      %v3156 = vunpack.c.l.b16 %v3092
      %v3157 = vunpack.c.l.b16 %v3093
      %v3158 = vunpack.c.l.b16 %v3094
      %v3159 = vunpack.c.l.b16 %v3095
      %v3160 = vunpack.c.l.b16 %v3096
      %v3161 = vunpack.c.l.b16 %v3097
      %v3162 = vunpack.c.l.b16 %v3098
      %v3163 = vunpack.c.l.b16 %v3099
      %v3164 = vunpack.c.l.b16 %v3100
      %v3165 = vunpack.c.l.b16 %v3101
      %v3166 = vunpack.c.l.b16 %v3102
      %v3167 = vunpack.c.l.b16 %v3103
      %v3168 = vunpack.c.l.b16 %v3104
      %v3169 = vunpack.c.l.b16 %v3105
      %v3170 = vunpack.c.l.b16 %v3106
      %v3171 = vunpack.c.l.b16 %v3107
      %v3172 = vunpack.c.l.b16 %v3108
      %v3173 = vunpack.c.l.b16 %v3109
      %v3174 = vunpack.c.l.b16 %v3110
      %v3175 = vunpack.c.l.b16 %v3111
      %v3176 = vunpack.c.l.b16 %v3112
      %v3177 = vunpack.c.l.b16 %v3113
      %v3178 = vunpack.c.l.b16 %v3114
      %v3179 = vunpack.c.l.b16 %v3115
      %v3180 = vpack.c.b16 %v3149, %v3148
      %v3181 = vpack.c.b16 %v3151, %v3150
      %v3182 = vpack.c.b16 %v3153, %v3152
      %v3183 = vpack.c.b16 %v3155, %v3154
      %v3184 = vpack.c.b16 %v3157, %v3156
      %v3185 = vpack.c.b16 %v3159, %v3158
      %v3186 = vpack.c.b16 %v3161, %v3160
      %v3187 = vpack.c.b16 %v3163, %v3162
      %v3188 = vpack.c.b16 %v3165, %v3164
      %v3189 = vpack.c.b16 %v3167, %v3166
      %v3190 = vpack.c.b16 %v3169, %v3168
      %v3191 = vpack.c.b16 %v3171, %v3170
      %v3192 = vpack.c.b16 %v3173, %v3172
      %v3193 = vpack.c.b16 %v3175, %v3174
      %v3194 = vpack.c.b16 %v3177, %v3176
      %v3195 = vpack.c.b16 %v3179, %v3178
      %3212 = vmatprep.subr.bf16.mxu0 0
      %3213 = vmatpush1.bf16.msra.mxu0 %v3180
      %3214 = vmatprep.subr.bf16.mxu0 0
      %3215 = vmatpush1.bf16.msra.mxu0 %v3181
      %3216 = vmatprep.subr.bf16.mxu0 0
      %3217 = vmatpush1.bf16.msra.mxu0 %v3182
      %3218 = vmatprep.subr.bf16.mxu0 0
      %3219 = vmatpush1.bf16.msra.mxu0 %v3183
      %3220 = vmatprep.subr.bf16.mxu0 0
      %3221 = vmatpush1.bf16.msra.mxu0 %v3184
      %3222 = vmatprep.subr.bf16.mxu0 0
      %3223 = vmatpush1.bf16.msra.mxu0 %v3185
      %3224 = vmatprep.subr.bf16.mxu0 0
      %3225 = vmatpush1.bf16.msra.mxu0 %v3186
      %3226 = vmatprep.subr.bf16.mxu0 0
      %3227 = vmatpush1.bf16.msra.mxu0 %v3187
      %3228 = vmatprep.subr.bf16.mxu0 0
      %3229 = vmatpush1.bf16.msra.mxu0 %v3188
      %3230 = vmatprep.subr.bf16.mxu0 0
      %3231 = vmatpush1.bf16.msra.mxu0 %v3189
      %3232 = vmatprep.subr.bf16.mxu0 0
      %3233 = vmatpush1.bf16.msra.mxu0 %v3190
      %3234 = vmatprep.subr.bf16.mxu0 0
      %3235 = vmatpush1.bf16.msra.mxu0 %v3191
      %3236 = vmatprep.subr.bf16.mxu0 0
      %3237 = vmatpush1.bf16.msra.mxu0 %v3192
      %3238 = vmatprep.subr.bf16.mxu0 0
      %3239 = vmatpush1.bf16.msra.mxu0 %v3193
      %3240 = vmatprep.subr.bf16.mxu0 0
      %3241 = vmatpush1.bf16.msra.mxu0 %v3194
      %3242 = vmatprep.subr.bf16.mxu0 0
      %3243 = vmatpush1.bf16.msra.mxu0 %v3195
      %3244 = vmatprep.mubr.bf16.mxu0 %v3081
      %3245 = vmatmul.mubr.bf16.gmra.mrb[0].mxu0 %v3080
      %v3246 = vpop.f32.mrb[0].mxu0
      %v3247 = vadd.f32 0.0, %v3246
      %v3248 = vpop.f32.mrb[0].mxu0
      %v3249 = vpop.f32.mrb[0].mxu0
      %v3250 = vadd.f32 0.0, %v3249
      %v3251 = vpop.f32.mrb[0].mxu0
      %3252 = vmatprep.mubr.bf16.mxu0 %v3083
      %3253 = vmatmul.mubr.bf16.gmra.mrb[0].mxu0 %v3082
      %v3254 = vpop.f32.mrb[0].mxu0
      %v3255 = vadd.f32 0.0, %v3254
      %v3256 = vpop.f32.mrb[0].mxu0
      %v3257 = vpop.f32.mrb[0].mxu0
      %v3258 = vadd.f32 0.0, %v3257
      %v3259 = vpop.f32.mrb[0].mxu0
      %3260 = vdwg.mxu0
      %v3261 = vadd.f32 %v2907, %v3247
      %v3262 = vadd.f32 %v2908, %v3250
      %v3263 = vadd.f32 %v2909, %v3255
      %v3264 = vadd.f32 %v2910, %v3258
      %v3265 = vld [vmem:[%s792] sm:$0x1]
      %v3267 = vlaneseq
      %v3268 = vshrl.u32 %v3267, 7
      %v3269 = vsub.s32 0, %v3268
      %v3270 = vrot.slane %v3265, %v3269
      %v3272 = vadd.f32 %v3261, %v3270
      %v3273 = vadd.f32 %v3262, %v3270
      %v3274 = vadd.f32 %v3263, %v3270
      %v3275 = vadd.f32 %v3264, %v3270
      %v3276 = vadd.f32 %v3272, %v1851
      %v3277 = vadd.f32 %v3273, %v1852
      %v3278 = vadd.f32 %v3274, %v1853
      %v3279 = vadd.f32 %v3275, %v1854
      %v3280 = vld [vmem:[%s772] sm:$0x1]
      %v3281 = vld [vmem:[%s775] sm:$0x1]
      %3282 = vadd.xlane.f32.xlu0 %v3276
      %v3283 = vpop.xlane.xlu0 %3282
      %3284 = vadd.xlane.f32.xlu0 %v3277
      %v3285 = vpop.xlane.xlu0 %3284
      %3286 = vadd.xlane.f32.xlu0 %v3278
      %v3287 = vpop.xlane.xlu0 %3286
      %3288 = vadd.xlane.f32.xlu0 %v3279
      %v3289 = vpop.xlane.xlu0 %3288
      %v3290 = vmul.f32 %v3283, %v1798
      %v3291 = vmul.f32 %v3285, %v1798
      %v3292 = vmul.f32 %v3287, %v1798
      %v3293 = vmul.f32 %v3289, %v1798
      %v3294 = vsub.f32 %v3276, %v3290
      %v3295 = vsub.f32 %v3277, %v3291
      %v3296 = vsub.f32 %v3278, %v3292
      %v3297 = vsub.f32 %v3279, %v3293
      %v3298 = vmul.f32 %v3294, %v3294
      %v3299 = vmul.f32 %v3295, %v3295
      %v3300 = vmul.f32 %v3296, %v3296
      %v3301 = vmul.f32 %v3297, %v3297
      %3302 = vadd.xlane.f32.xlu0 %v3298
      %v3303 = vpop.xlane.xlu0 %3302
      %3304 = vadd.xlane.f32.xlu0 %v3299
      %v3305 = vpop.xlane.xlu0 %3304
      %3306 = vadd.xlane.f32.xlu0 %v3300
      %v3307 = vpop.xlane.xlu0 %3306
      %3308 = vadd.xlane.f32.xlu0 %v3301
      %v3309 = vpop.xlane.xlu0 %3308
      %v3310 = vmul.f32 %v3303, %v1798
      %v3311 = vmul.f32 %v3305, %v1798
      %v3312 = vmul.f32 %v3307, %v1798
      %v3313 = vmul.f32 %v3309, %v1798
      %v3314 = vadd.f32 %v3310, 1e-05
      %v3315 = vadd.f32 %v3311, 1e-05
      %v3316 = vadd.f32 %v3312, 1e-05
      %v3317 = vadd.f32 %v3313, 1e-05
      %v3318 = vrsqrt.pop %v3314
      %v3319 = vrsqrt.pop %v3315
      %v3320 = vrsqrt.pop %v3316
      %v3321 = vrsqrt.pop %v3317
      %v3322 = vmul.f32 %v3294, %v3318
      %v3323 = vmul.f32 %v3295, %v3319
      %v3324 = vmul.f32 %v3296, %v3320
      %v3325 = vmul.f32 %v3297, %v3321
      %v3327 = vlaneseq
      %v3328 = vshrl.u32 %v3327, 7
      %v3329 = vsub.s32 0, %v3328
      %v3330 = vrot.slane %v3280, %v3329
      %v3332 = vmul.f32 %v3322, %v3330
      %v3333 = vmul.f32 %v3323, %v3330
      %v3334 = vmul.f32 %v3324, %v3330
      %v3335 = vmul.f32 %v3325, %v3330
      %v3337 = vlaneseq
      %v3338 = vshrl.u32 %v3337, 7
      %v3339 = vsub.s32 0, %v3338
      %v3340 = vrot.slane %v3281, %v3339
      %v3342 = vadd.f32 %v3332, %v3340
      %v3343 = vadd.f32 %v3333, %v3340
      %v3344 = vadd.f32 %v3334, %v3340
      %v3345 = vadd.f32 %v3335, %v3340
      %3346 = vst [vmem:[#allocation2] sm:$0xff] %v3342
      %3347 = vst [vmem:[#allocation2 + $0x8] sm:$0xff] %v3343
      %3348 = vst [vmem:[#allocation2 + $0x10] sm:$0xff] %v3344
      %3349 = vst [vmem:[#allocation2 + $0x18] sm:$0xff] %v3345
      %p3350 = scmp.eq.s32.totalorder %s31, 5
      // Predicated region
      $region105: #{transformer_generator_forward.1} parent=99 // pred_check
        %p3351 = pneg %p3350
      $region106: #{transformer_generator_forward.1} parent=99 // pred_check_branch
        %3353 = sbr.rel (%p3351) target = $region108
      $region107: #{transformer_generator_forward.1} parent=99 // pred_region
        %v3354 = vld [vmem:[%s16] sm:$0xf]
        %v3355 = vld [vmem:[%s16 + $0x4] sm:$0xf]
        %v3356 = vld [vmem:[%s16 + $0x8] sm:$0xf]
        %v3357 = vld [vmem:[%s16 + $0xc] sm:$0xf]
        %v3358 = vld [vmem:[%s16 + $0x10] sm:$0xf]
        %v3359 = vld [vmem:[%s16 + $0x14] sm:$0xf]
        %v3360 = vld [vmem:[%s16 + $0x18] sm:$0xf]
        %v3361 = vld [vmem:[%s16 + $0x1c] sm:$0xf]
        %v3362 = vld [vmem:[%s16 + $0x20] sm:$0xf]
        %v3363 = vld [vmem:[%s16 + $0x24] sm:$0xf]
        %v3364 = vld [vmem:[%s16 + $0x28] sm:$0xf]
        %v3365 = vld [vmem:[%s16 + $0x2c] sm:$0xf]
        %v3366 = vld [vmem:[%s16 + $0x30] sm:$0xf]
        %v3367 = vld [vmem:[%s16 + $0x34] sm:$0xf]
        %v3368 = vld [vmem:[%s16 + $0x38] sm:$0xf]
        %v3369 = vld [vmem:[%s16 + $0x3c] sm:$0xf]
        %v3370 = vpack.c.bf16 %v3343, %v3342
        %v3371 = vpack.c.bf16 %v3345, %v3344
        %v3372 = vld [vmem:[%s17] sm:$0x1]
        %v3374 = vlaneseq
        %v3375 = vshrl.u32 %v3374, 7
        %v3376 = vsub.s32 0, %v3375
        %v3377 = vrot.slane %v3372, %v3376
        %v3395 = vunpack.c.l.b16 %v3354
        %v3396 = vunpack.c.l.b16 %v3355
        %v3397 = vunpack.c.l.b16 %v3356
        %v3398 = vunpack.c.l.b16 %v3357
        %v3399 = vunpack.c.l.b16 %v3358
        %v3400 = vunpack.c.l.b16 %v3359
        %v3401 = vunpack.c.l.b16 %v3360
        %v3402 = vunpack.c.l.b16 %v3361
        %v3403 = vunpack.c.l.b16 %v3362
        %v3404 = vunpack.c.l.b16 %v3363
        %v3405 = vunpack.c.l.b16 %v3364
        %v3406 = vunpack.c.l.b16 %v3365
        %v3407 = vunpack.c.l.b16 %v3366
        %v3408 = vunpack.c.l.b16 %v3367
        %v3409 = vunpack.c.l.b16 %v3368
        %v3410 = vunpack.c.l.b16 %v3369
        %v3411 = vpack.c.b16 %v3396, %v3395
        %v3412 = vpack.c.b16 %v3398, %v3397
        %v3413 = vpack.c.b16 %v3400, %v3399
        %v3414 = vpack.c.b16 %v3402, %v3401
        %v3415 = vpack.c.b16 %v3404, %v3403
        %v3416 = vpack.c.b16 %v3406, %v3405
        %v3417 = vpack.c.b16 %v3408, %v3407
        %v3418 = vpack.c.b16 %v3410, %v3409
        %3427 = vmatprep.subr.bf16.mxu0 0
        %3428 = vmatpush1.bf16.msra.mxu0 %v3411
        %3429 = vmatprep.subr.bf16.mxu0 0
        %3430 = vmatpush1.bf16.msra.mxu0 %v3412
        %3431 = vmatprep.subr.bf16.mxu0 0
        %3432 = vmatpush1.bf16.msra.mxu0 %v3413
        %3433 = vmatprep.subr.bf16.mxu0 0
        %3434 = vmatpush1.bf16.msra.mxu0 %v3414
        %3435 = vmatprep.subr.bf16.mxu0 0
        %3436 = vmatpush1.bf16.msra.mxu0 %v3415
        %3437 = vmatprep.subr.bf16.mxu0 0
        %3438 = vmatpush1.bf16.msra.mxu0 %v3416
        %3439 = vmatprep.subr.bf16.mxu0 0
        %3440 = vmatpush1.bf16.msra.mxu0 %v3417
        %3441 = vmatprep.subr.bf16.mxu0 0
        %3442 = vmatpush1.bf16.msra.mxu0 %v3418
        %3443 = vmatprep.subr.bf16.mxu0 0
        %3444 = vmatpush1.bf16.msra.mxu0 0
        %3445 = vmatprep.subr.bf16.mxu0 0
        %3446 = vmatpush1.bf16.msra.mxu0 0
        %3447 = vmatprep.subr.bf16.mxu0 0
        %3448 = vmatpush1.bf16.msra.mxu0 0
        %3449 = vmatprep.subr.bf16.mxu0 0
        %3450 = vmatpush1.bf16.msra.mxu0 0
        %3451 = vmatprep.subr.bf16.mxu0 0
        %3452 = vmatpush1.bf16.msra.mxu0 0
        %3453 = vmatprep.subr.bf16.mxu0 0
        %3454 = vmatpush1.bf16.msra.mxu0 0
        %3455 = vmatprep.subr.bf16.mxu0 0
        %3456 = vmatpush1.bf16.msra.mxu0 0
        %3457 = vmatprep.subr.bf16.mxu0 0
        %3458 = vmatpush1.bf16.msra.mxu0 0
        %3459 = vmatprep.mubr.bf16.mxu0 0
        %3460 = vmatmul.mubr.bf16.gmra.mrb[0].mxu0 %v3370
        %v3461 = vpop.f32.mrb[0].mxu0
        %v3462 = vadd.f32 %v3377, %v3461
        %v3463 = vpop.f32.mrb[0].mxu0
        %v3464 = vpop.f32.mrb[0].mxu0
        %v3465 = vadd.f32 %v3377, %v3464
        %v3466 = vpop.f32.mrb[0].mxu0
        %3467 = vmatprep.mubr.bf16.mxu0 0
        %3468 = vmatmul.mubr.bf16.gmra.mrb[0].mxu0 %v3371
        %v3469 = vpop.f32.mrb[0].mxu0
        %v3470 = vadd.f32 %v3377, %v3469
        %v3471 = vpop.f32.mrb[0].mxu0
        %v3472 = vpop.f32.mrb[0].mxu0
        %v3473 = vadd.f32 %v3377, %v3472
        %v3474 = vpop.f32.mrb[0].mxu0
        %3475 = vdwg.mxu0
        %3476 = vst [vmem:[%s20] sm:$0xff] %v3462
        %3477 = vst [vmem:[%s20 + $0x8] sm:$0xff] %v3465
        %3478 = vst [vmem:[%s20 + $0x10] sm:$0xff] %v3470
        %3479 = vst [vmem:[%s20 + $0x18] sm:$0xff] %v3473
      $region108: #{transformer_generator_forward.1} parent=99 // pred_fallthru
        _
      // Predicated region
      $region109: #{transformer_generator_forward.1} parent=99 // pred_check
        %p3480 = pneg %p524
      $region110: #{transformer_generator_forward.1} parent=99 // pred_check_branch
        %3482 = sbr.rel (%p3480) target = $region112
      $region111: #{transformer_generator_forward.1} parent=99 // pred_region
        _
      $region112: #{transformer_generator_forward.1} parent=99 // pred_fallthru
        _
      // Predicated region
      $region113: #{transformer_generator_forward.1} parent=99 // pred_check
        %p3483 = pneg %p524
      $region114: #{transformer_generator_forward.1} parent=99 // pred_check_branch
        %3485 = sbr.rel (%p3483) target = $region116
      $region115: #{transformer_generator_forward.1} parent=99 // pred_region
        _
      $region116: #{transformer_generator_forward.1} parent=99 // pred_fallthru
        _
    $region100: #{transformer_generator_forward.1} parent=5 // pred_fallthru
      _
    %p3486 = scmp.le.s32.totalorder 2, %s26
    // Predicated region
    $region117: #{transformer_generator_forward.1} parent=5 // pred_check
      %p3487 = pneg %p3486
    $region118: #{transformer_generator_forward.1} parent=5 // pred_check_branch
      %3489 = sbr.rel (%p3487) target = $region120
    $region119: #{transformer_generator_forward.1} parent=5 // pred_region
      %s3490 = ssub.s32 %s26, 2
    $region120: #{transformer_generator_forward.1} parent=5 // pred_fallthru
      _
  $region6: #{transformer_generator_forward.1} parent=0 // loop_footer
    %s30 = sadd.s32 1, %s26
  $region7: #{transformer_generator_forward.1} parent=0 // loop_footer_branch
    %25 = sbr.rel target = $region3
  $region8: #{transformer_generator_forward.1} parent=0 // loop_exit
    _

</llo_original>
